<compile_context>
chip_gen: v5e
topology: v5e:2x2
jax: 0.10.0
libtpu: 0.0.40
codegen_flags: <defaults>
</compile_context>

<pallas_src>
import jax
import jax.numpy as jnp
from jax.experimental import pallas as pl
from jax.experimental.pallas import tpu as pltpu

C = 768        # channels (fixed by the module)
H = 14         # spatial height (from x229: (1, 768, 14, 14))
W = 14         # spatial width
KH = KW = 3    # depthwise kernel size
EPS = 1e-3     # BatchNorm eps
CB = 384       # channel block: 2 blocks of 3*128 lanes


def dwconv_bn_kernel(x_ref, w_ref, gamma_ref, beta_ref, o_ref, xp_scr):
    # x_ref:     (1, H, W, CB)      unpadded NHWC channel block
    # w_ref:     (KH*KW, CB)        depthwise taps, tap-index major, channels on lanes
    # gamma_ref: (1, CB)            BN scale
    # beta_ref:  (1, CB)            BN shift
    # o_ref:     (1, H, W, CB)      fused output block
    # xp_scr:    (1, H+2, W+2, CB)  VMEM scratch: zero halo + interior copy

    # In-kernel zero padding (replaces the wrapper's jnp.pad HBM round trip).
    xp_scr[...] = jnp.zeros_like(xp_scr)
    xp_scr[:, pl.ds(1, H), pl.ds(1, W), :] = x_ref[...]

    # Hoist the 9 per-tap rows once (no per-tap slice+reshape+broadcast chains).
    w_all = w_ref[...]                                    # (9, CB)
    taps = [w_all[i:i + 1, :] for i in range(KH * KW)]    # nine (1, CB) rows

    # Depthwise 3x3 conv: 9 shifted multiply-accumulates (pure VPU).
    # Only 3 sublane-shifted views are materialized (one per kw); the kh slice
    # is along a leading dim of the view and is free addressing.
    acc = None
    for kw in range(KW):
        xs = xp_scr[:, :, kw:kw + W, :]                   # (1, H+2, W, CB)
        for kh in range(KH):
            term = xs[:, kh:kh + H, :, :] * taps[kh * KW + kw]
            acc = term if acc is None else acc + term     # (1, H, W, CB) float32

    # BatchNorm (training-mode batch stats over N*H*W), folded into one affine pass.
    inv_n = 1.0 / float(1 * H * W)
    mean = jnp.sum(acc, axis=(0, 1, 2), keepdims=True) * inv_n           # (1,1,1,CB)
    mean_sq = jnp.sum(acc * acc, axis=(0, 1, 2), keepdims=True) * inv_n  # E[x^2]
    var = mean_sq - mean * mean
    inv_std = jax.lax.rsqrt(var + EPS)
    scale = gamma_ref[...] * inv_std                      # (1,1,1,CB) via broadcast
    shift = beta_ref[...] - mean * scale
    o_ref[...] = acc * scale + shift


def dwconv_bn(x_nchw, weight, gamma, beta):
    """x_nchw: (1, C, H, W) f32; weight: (C, 1, KH, KW); gamma/beta: (C,)."""
    # NCHW -> NHWC (module boundary is NCHW; this glue would vanish in an NHWC model).
    x = jnp.transpose(x_nchw, (0, 2, 3, 1)).astype(jnp.float32)          # (1, H, W, C)
    # PyTorch depthwise weight (C,1,KH,KW) -> (KH*KW, C), channels on lanes.
    w = jnp.transpose(weight[:, 0, :, :], (1, 2, 0)).reshape(KH * KW, C).astype(jnp.float32)
    g = gamma.reshape(1, C).astype(jnp.float32)
    b = beta.reshape(1, C).astype(jnp.float32)

    out_nhwc = pl.pallas_call(
        dwconv_bn_kernel,
        out_shape=jax.ShapeDtypeStruct((1, H, W, C), jnp.float32),
        grid=(C // CB,),
        in_specs=[
            pl.BlockSpec((1, H, W, CB), lambda c: (0, 0, 0, c)),
            pl.BlockSpec((KH * KW, CB), lambda c: (0, c)),
            pl.BlockSpec((1, CB), lambda c: (0, c)),
            pl.BlockSpec((1, CB), lambda c: (0, c)),
        ],
        out_specs=pl.BlockSpec((1, H, W, CB), lambda c: (0, 0, 0, c)),
        scratch_shapes=[pltpu.VMEM((1, H + 2, W + 2, CB), jnp.float32)],
        compiler_params=pltpu.CompilerParams(dimension_semantics=("parallel",)),
    )(x, w, g, b)

    # NHWC -> NCHW to match the PyTorch module output layout.
    return jnp.transpose(out_nhwc, (0, 3, 1, 2))


if __name__ == "__main__":
    key = jax.random.PRNGKey(0)
    k1, k2, k3, k4 = jax.random.split(key, 4)

    # Shapes implied by the module: x229 is (1, 768, 14, 14).
    x = jax.random.normal(k1, (1, C, H, W), jnp.float32)
    weight = jax.random.normal(k2, (C, 1, KH, KW), jnp.float32) * 0.1   # Conv2d weight
    gamma = 1.0 + 0.1 * jax.random.normal(k3, (C,), jnp.float32)        # BN weight
    beta = 0.1 * jax.random.normal(k4, (C,), jnp.float32)               # BN bias

    out = dwconv_bn(x, weight, gamma, beta)
    out = jax.block_until_ready(out)

    # Pure-JAX reference (depthwise conv + training-mode BatchNorm).
    conv_ref = jax.lax.conv_general_dilated(
        x, weight, window_strides=(1, 1), padding=((1, 1), (1, 1)),
        feature_group_count=C, dimension_numbers=("NCHW", "OIHW", "NCHW"))
    mean = jnp.mean(conv_ref, axis=(0, 2, 3), keepdims=True)
    var = jnp.mean((conv_ref - mean) ** 2, axis=(0, 2, 3), keepdims=True)
    ref = ((conv_ref - mean) * jax.lax.rsqrt(var + EPS)
           * gamma[None, :, None, None] + beta[None, :, None, None])

    err = float(jnp.max(jnp.abs(out - ref)))
    assert err < 2e-3, f"max abs error {err}"
    print("KERNEL_OK")
</pallas_src>

<mosaic_0001>
module attributes {stable_mosaic.version = 11 : i64} {
  func.func @dwconv_bn_kernel(%arg0: i32, %arg1: memref<1x14x14x384xf32, #tpu.memory_space<vmem>>, %arg2: memref<9x384xf32, #tpu.memory_space<vmem>>, %arg3: memref<1x384xf32, #tpu.memory_space<vmem>>, %arg4: memref<1x384xf32, #tpu.memory_space<vmem>>, %arg5: memref<1x14x14x384xf32, #tpu.memory_space<vmem>>, %arg6: memref<1x16x16x384xf32, #tpu.memory_space<vmem>>) attributes {dimension_semantics = [#tpu.dimension_semantics<parallel>], iteration_bounds = array<i64: 2>, scalar_prefetch = 0 : i64, scratch_operands = 1 : i64, tpu.core_type = #tpu.core_type<tc>, window_params = [{transform_indices = @transform_0, window_bounds = array<i64: 1, 14, 14, 384>}, {transform_indices = @transform_1, window_bounds = array<i64: 9, 384>}, {transform_indices = @transform_2, window_bounds = array<i64: 1, 384>}, {transform_indices = @transform_3, window_bounds = array<i64: 1, 384>}, {transform_indices = @transform_4, window_bounds = array<i64: 1, 14, 14, 384>}]} {
    %cst = arith.constant 0.000000e+00 : f32
    %0 = vector.broadcast %cst : f32 to vector<1x16x16x384xf32>
    %c0 = arith.constant 0 : index
    %c0_0 = arith.constant 0 : index
    %c0_1 = arith.constant 0 : index
    %c0_2 = arith.constant 0 : index
    %1 = vector.load %arg6[%c0, %c0_0, %c0_1, %c0_2] : memref<1x16x16x384xf32, #tpu.memory_space<vmem>>, vector<1x16x16x384xf32>
    tpu.vector_store %arg6[%c0, %c0_0, %c0_1, %c0_2], %0 {strides = array<i32>} : memref<1x16x16x384xf32, #tpu.memory_space<vmem>>, vector<1x16x16x384xf32>,
    %c0_3 = arith.constant 0 : index
    %c0_4 = arith.constant 0 : index
    %c0_5 = arith.constant 0 : index
    %c0_6 = arith.constant 0 : index
    %2 = vector.load %arg1[%c0_3, %c0_4, %c0_5, %c0_6] : memref<1x14x14x384xf32, #tpu.memory_space<vmem>>, vector<1x14x14x384xf32>
    %c0_7 = arith.constant 0 : index
    %c1 = arith.constant 1 : index
    %c1_8 = arith.constant 1 : index
    %c0_9 = arith.constant 0 : index
    %3 = vector.load %arg6[%c0_7, %c1, %c1_8, %c0_9] : memref<1x16x16x384xf32, #tpu.memory_space<vmem>>, vector<1x14x14x384xf32>
    tpu.vector_store %arg6[%c0_7, %c1, %c1_8, %c0_9], %2 {strides = array<i32>} : memref<1x16x16x384xf32, #tpu.memory_space<vmem>>, vector<1x14x14x384xf32>,
    %c0_10 = arith.constant 0 : index
    %c0_11 = arith.constant 0 : index
    %4 = vector.load %arg2[%c0_10, %c0_11] : memref<9x384xf32, #tpu.memory_space<vmem>>, vector<9x384xf32>
    %5 = vector.extract_strided_slice %4 {offsets = [0, 0], sizes = [1, 384], strides = [1, 1]} : vector<9x384xf32> to vector<1x384xf32>
    %6 = vector.extract_strided_slice %4 {offsets = [1, 0], sizes = [1, 384], strides = [1, 1]} : vector<9x384xf32> to vector<1x384xf32>
    %7 = vector.extract_strided_slice %4 {offsets = [2, 0], sizes = [1, 384], strides = [1, 1]} : vector<9x384xf32> to vector<1x384xf32>
    %8 = vector.extract_strided_slice %4 {offsets = [3, 0], sizes = [1, 384], strides = [1, 1]} : vector<9x384xf32> to vector<1x384xf32>
    %9 = vector.extract_strided_slice %4 {offsets = [4, 0], sizes = [1, 384], strides = [1, 1]} : vector<9x384xf32> to vector<1x384xf32>
    %10 = vector.extract_strided_slice %4 {offsets = [5, 0], sizes = [1, 384], strides = [1, 1]} : vector<9x384xf32> to vector<1x384xf32>
    %11 = vector.extract_strided_slice %4 {offsets = [6, 0], sizes = [1, 384], strides = [1, 1]} : vector<9x384xf32> to vector<1x384xf32>
    %12 = vector.extract_strided_slice %4 {offsets = [7, 0], sizes = [1, 384], strides = [1, 1]} : vector<9x384xf32> to vector<1x384xf32>
    %13 = vector.extract_strided_slice %4 {offsets = [8, 0], sizes = [1, 384], strides = [1, 1]} : vector<9x384xf32> to vector<1x384xf32>
    %c0_12 = arith.constant 0 : index
    %c0_13 = arith.constant 0 : index
    %c0_14 = arith.constant 0 : index
    %c0_15 = arith.constant 0 : index
    %14 = vector.load %arg6[%c0_12, %c0_13, %c0_14, %c0_15] : memref<1x16x16x384xf32, #tpu.memory_space<vmem>>, vector<1x16x14x384xf32>
    %15 = vector.extract_strided_slice %14 {offsets = [0, 0, 0, 0], sizes = [1, 14, 14, 384], strides = [1, 1, 1, 1]} : vector<1x16x14x384xf32> to vector<1x14x14x384xf32>
    %16 = vector.shape_cast %5 : vector<1x384xf32> to vector<1x1x1x384xf32>
    %17 = vector.broadcast %16 : vector<1x1x1x384xf32> to vector<1x14x14x384xf32>
    %18 = arith.mulf %15, %17 : vector<1x14x14x384xf32>
    %19 = vector.extract_strided_slice %14 {offsets = [0, 1, 0, 0], sizes = [1, 14, 14, 384], strides = [1, 1, 1, 1]} : vector<1x16x14x384xf32> to vector<1x14x14x384xf32>
    %20 = vector.shape_cast %8 : vector<1x384xf32> to vector<1x1x1x384xf32>
    %21 = vector.broadcast %20 : vector<1x1x1x384xf32> to vector<1x14x14x384xf32>
    %22 = arith.mulf %19, %21 : vector<1x14x14x384xf32>
    %23 = arith.addf %18, %22 : vector<1x14x14x384xf32>
    %24 = vector.extract_strided_slice %14 {offsets = [0, 2, 0, 0], sizes = [1, 14, 14, 384], strides = [1, 1, 1, 1]} : vector<1x16x14x384xf32> to vector<1x14x14x384xf32>
    %25 = vector.shape_cast %11 : vector<1x384xf32> to vector<1x1x1x384xf32>
    %26 = vector.broadcast %25 : vector<1x1x1x384xf32> to vector<1x14x14x384xf32>
    %27 = arith.mulf %24, %26 : vector<1x14x14x384xf32>
    %28 = arith.addf %23, %27 : vector<1x14x14x384xf32>
    %c0_16 = arith.constant 0 : index
    %c0_17 = arith.constant 0 : index
    %c1_18 = arith.constant 1 : index
    %c0_19 = arith.constant 0 : index
    %29 = vector.load %arg6[%c0_16, %c0_17, %c1_18, %c0_19] : memref<1x16x16x384xf32, #tpu.memory_space<vmem>>, vector<1x16x14x384xf32>
    %30 = vector.extract_strided_slice %29 {offsets = [0, 0, 0, 0], sizes = [1, 14, 14, 384], strides = [1, 1, 1, 1]} : vector<1x16x14x384xf32> to vector<1x14x14x384xf32>
    %31 = vector.shape_cast %6 : vector<1x384xf32> to vector<1x1x1x384xf32>
    %32 = vector.broadcast %31 : vector<1x1x1x384xf32> to vector<1x14x14x384xf32>
    %33 = arith.mulf %30, %32 : vector<1x14x14x384xf32>
    %34 = arith.addf %28, %33 : vector<1x14x14x384xf32>
    %35 = vector.extract_strided_slice %29 {offsets = [0, 1, 0, 0], sizes = [1, 14, 14, 384], strides = [1, 1, 1, 1]} : vector<1x16x14x384xf32> to vector<1x14x14x384xf32>
    %36 = vector.shape_cast %9 : vector<1x384xf32> to vector<1x1x1x384xf32>
    %37 = vector.broadcast %36 : vector<1x1x1x384xf32> to vector<1x14x14x384xf32>
    %38 = arith.mulf %35, %37 : vector<1x14x14x384xf32>
    %39 = arith.addf %34, %38 : vector<1x14x14x384xf32>
    %40 = vector.extract_strided_slice %29 {offsets = [0, 2, 0, 0], sizes = [1, 14, 14, 384], strides = [1, 1, 1, 1]} : vector<1x16x14x384xf32> to vector<1x14x14x384xf32>
    %41 = vector.shape_cast %12 : vector<1x384xf32> to vector<1x1x1x384xf32>
    %42 = vector.broadcast %41 : vector<1x1x1x384xf32> to vector<1x14x14x384xf32>
    %43 = arith.mulf %40, %42 : vector<1x14x14x384xf32>
    %44 = arith.addf %39, %43 : vector<1x14x14x384xf32>
    %c0_20 = arith.constant 0 : index
    %c0_21 = arith.constant 0 : index
    %c2 = arith.constant 2 : index
    %c0_22 = arith.constant 0 : index
    %45 = vector.load %arg6[%c0_20, %c0_21, %c2, %c0_22] : memref<1x16x16x384xf32, #tpu.memory_space<vmem>>, vector<1x16x14x384xf32>
    %46 = vector.extract_strided_slice %45 {offsets = [0, 0, 0, 0], sizes = [1, 14, 14, 384], strides = [1, 1, 1, 1]} : vector<1x16x14x384xf32> to vector<1x14x14x384xf32>
    %47 = vector.shape_cast %7 : vector<1x384xf32> to vector<1x1x1x384xf32>
    %48 = vector.broadcast %47 : vector<1x1x1x384xf32> to vector<1x14x14x384xf32>
    %49 = arith.mulf %46, %48 : vector<1x14x14x384xf32>
    %50 = arith.addf %44, %49 : vector<1x14x14x384xf32>
    %51 = vector.extract_strided_slice %45 {offsets = [0, 1, 0, 0], sizes = [1, 14, 14, 384], strides = [1, 1, 1, 1]} : vector<1x16x14x384xf32> to vector<1x14x14x384xf32>
    %52 = vector.shape_cast %10 : vector<1x384xf32> to vector<1x1x1x384xf32>
    %53 = vector.broadcast %52 : vector<1x1x1x384xf32> to vector<1x14x14x384xf32>
    %54 = arith.mulf %51, %53 : vector<1x14x14x384xf32>
    %55 = arith.addf %50, %54 : vector<1x14x14x384xf32>
    %56 = vector.extract_strided_slice %45 {offsets = [0, 2, 0, 0], sizes = [1, 14, 14, 384], strides = [1, 1, 1, 1]} : vector<1x16x14x384xf32> to vector<1x14x14x384xf32>
    %57 = vector.shape_cast %13 : vector<1x384xf32> to vector<1x1x1x384xf32>
    %58 = vector.broadcast %57 : vector<1x1x1x384xf32> to vector<1x14x14x384xf32>
    %59 = arith.mulf %56, %58 : vector<1x14x14x384xf32>
    %60 = arith.addf %55, %59 : vector<1x14x14x384xf32>
    %cst_23 = arith.constant dense<0.000000e+00> : vector<384xf32>
    %61 = vector.multi_reduction <add>, %60, %cst_23 [0, 1, 2] : vector<1x14x14x384xf32> to vector<384xf32>
    %62 = vector.shape_cast %61 : vector<384xf32> to vector<1x1x1x384xf32>
    %cst_24 = arith.constant 0.00510204071 : f32
    %63 = vector.broadcast %cst_24 : f32 to vector<1x1x1x384xf32>
    %64 = arith.mulf %62, %63 : vector<1x1x1x384xf32>
    %65 = arith.mulf %60, %60 : vector<1x14x14x384xf32>
    %cst_25 = arith.constant dense<0.000000e+00> : vector<384xf32>
    %66 = vector.multi_reduction <add>, %65, %cst_25 [0, 1, 2] : vector<1x14x14x384xf32> to vector<384xf32>
    %67 = vector.shape_cast %66 : vector<384xf32> to vector<1x1x1x384xf32>
    %cst_26 = arith.constant 0.00510204071 : f32
    %68 = vector.broadcast %cst_26 : f32 to vector<1x1x1x384xf32>
    %69 = arith.mulf %67, %68 : vector<1x1x1x384xf32>
    %70 = arith.mulf %64, %64 : vector<1x1x1x384xf32>
    %71 = arith.subf %69, %70 : vector<1x1x1x384xf32>
    %cst_27 = arith.constant 1.000000e-03 : f32
    %72 = vector.broadcast %cst_27 : f32 to vector<1x1x1x384xf32>
    %73 = arith.addf %71, %72 : vector<1x1x1x384xf32>
    %74 = math.rsqrt %73 : vector<1x1x1x384xf32>
    %c0_28 = arith.constant 0 : index
    %c0_29 = arith.constant 0 : index
    %75 = vector.load %arg3[%c0_28, %c0_29] : memref<1x384xf32, #tpu.memory_space<vmem>>, vector<1x384xf32>
    %76 = vector.shape_cast %75 : vector<1x384xf32> to vector<1x1x1x384xf32>
    %77 = arith.mulf %76, %74 : vector<1x1x1x384xf32>
    %c0_30 = arith.constant 0 : index
    %c0_31 = arith.constant 0 : index
    %78 = vector.load %arg4[%c0_30, %c0_31] : memref<1x384xf32, #tpu.memory_space<vmem>>, vector<1x384xf32>
    %79 = arith.mulf %64, %77 : vector<1x1x1x384xf32>
    %80 = vector.shape_cast %78 : vector<1x384xf32> to vector<1x1x1x384xf32>
    %81 = arith.subf %80, %79 : vector<1x1x1x384xf32>
    %82 = vector.broadcast %77 : vector<1x1x1x384xf32> to vector<1x14x14x384xf32>
    %83 = arith.mulf %60, %82 : vector<1x14x14x384xf32>
    %84 = vector.broadcast %81 : vector<1x1x1x384xf32> to vector<1x14x14x384xf32>
    %85 = arith.addf %83, %84 : vector<1x14x14x384xf32>
    %c0_32 = arith.constant 0 : index
    %c0_33 = arith.constant 0 : index
    %c0_34 = arith.constant 0 : index
    %c0_35 = arith.constant 0 : index
    %86 = vector.load %arg5[%c0_32, %c0_33, %c0_34, %c0_35] : memref<1x14x14x384xf32, #tpu.memory_space<vmem>>, vector<1x14x14x384xf32>
    tpu.vector_store %arg5[%c0_32, %c0_33, %c0_34, %c0_35], %85 {strides = array<i32>} : memref<1x14x14x384xf32, #tpu.memory_space<vmem>>, vector<1x14x14x384xf32>,
    return
  }
  func.func @transform_0(%arg0: i32) -> (i32, i32, i32, i32) {
    %c0_i32 = arith.constant 0 : i32
    %c0_i32_0 = arith.constant 0 : i32
    %c0_i32_1 = arith.constant 0 : i32
    %c0_i32_2 = arith.constant 0 : i32
    return %c0_i32, %c0_i32_0, %c0_i32_1, %arg0 : i32, i32, i32, i32
  }
  func.func @transform_1(%arg0: i32) -> (i32, i32) {
    %c0_i32 = arith.constant 0 : i32
    %c0_i32_0 = arith.constant 0 : i32
    return %c0_i32, %arg0 : i32, i32
  }
  func.func @transform_2(%arg0: i32) -> (i32, i32) {
    %c0_i32 = arith.constant 0 : i32
    %c0_i32_0 = arith.constant 0 : i32
    return %c0_i32, %arg0 : i32, i32
  }
  func.func @transform_3(%arg0: i32) -> (i32, i32) {
    %c0_i32 = arith.constant 0 : i32
    %c0_i32_0 = arith.constant 0 : i32
    return %c0_i32, %arg0 : i32, i32
  }
  func.func @transform_4(%arg0: i32) -> (i32, i32, i32, i32) {
    %c0_i32 = arith.constant 0 : i32
    %c0_i32_0 = arith.constant 0 : i32
    %c0_i32_1 = arith.constant 0 : i32
    %c0_i32_2 = arith.constant 0 : i32
    return %c0_i32, %c0_i32_0, %c0_i32_1, %arg0 : i32, i32, i32, i32
  }
}

</mosaic_0001>

<llo_original>
// kernel: tpu_custom_call.1
$region0: #{tpu_custom_call.1}
  #allocation0 [shape = 'u32[]', space=smem, size = 0x4, offset = 0x4, fixed_abs, tag = 'smem constant byte address 0x4 - core index']
  #allocation1 [shape = 'u32[72,128]{1,0:T(1,128)}', space=vmem, size = 0x9000, scoped, tag = 'internal scratch']
  #allocation2 [shape = 'f32[1,16,16,384]{3,2,1,0:T(8,128)}', space=vmem, size = 0x60000, scoped, tag = 'scratch operand']
  %s0 = inlined_call_operand.vmem [shape: f32[1,14,14,768], index: 0, kind: input, shape index: {}]
  %s1 = inlined_call_operand.vmem [shape: f32[9,768], index: 1, kind: input, shape index: {}]
  %s2 = inlined_call_operand.vmem [shape: f32[1,768], index: 2, kind: input, shape index: {}]
  %s3 = inlined_call_operand.vmem [shape: f32[1,768], index: 3, kind: input, shape index: {}]
  %s4 = inlined_call_operand.vmem [shape: f32[1,14,14,768], index: 4, kind: output, shape index: {}]
  %s5 = sld [smem:[#allocation0]]
  $region114: #{tpu_custom_call.1} parent=0
    _
  %s7 = ssub.s32 1, %s5
  %s8 = scalar_select 0, %s7, %s5
  $region1: #{tpu_custom_call.1} parent=0
    #allocation3 [shape = 'u8[688128]{0}', space=vmem, size = 0xa8000, scoped, tag = 'input window, operand 0']
    #allocation4 [shape = 'u8[49152]{0}', space=vmem, size = 0xc000, scoped, tag = 'input window, operand 1']
    #allocation5 [shape = 'u8[688128]{0}', space=vmem, size = 0xa8000, scoped, tag = 'output window, operand 0']
    loop: start=0, step=1, limit=4
    $region2: #{tpu_custom_call.1} parent=1 // loop_pre_header
      _
    $region3: #{tpu_custom_call.1} parent=1 // loop_header
      %s10 = sphi 0, %s14
      %p11 = scmp.ge.s32.totalorder %s10, 4
      %s20 = sphi 0, %s22
      %s23 = sphi 0, %s20
      %s24 = sphi 0, %s23
      %s40 = sphi 0, %s24
      %s46 = sphi 0, %s48
      %s49 = sphi 0, %s46
      %s50 = sphi 0, %s49
      %s66 = sphi 0, %s50
      %s72 = sphi 0, %s74
      %s75 = sphi 0, %s72
      %s76 = sphi 0, %s75
      %s92 = sphi 0, %s76
      %s98 = sphi 0, %s100
      %s101 = sphi 0, %s98
      %s102 = sphi 0, %s101
      %s118 = sphi 0, %s102
      %s124 = sphi 0, %s126
      %s127 = sphi 0, %s124
      %s128 = sphi 0, %s127
      %s144 = sphi 0, %s128
    $region4: #{tpu_custom_call.1} parent=1 // loop_header_branch
      %13 = sbr.rel (%p11) target = $region8
    $region5: #{tpu_custom_call.1} parent=1 // loop_body
      %s15 = ssub.s32 %s10, 1
      %s16 = ssub.s32 %s10, 2
      %s17 = sadd.s32 %s10, 1
      %s18 = ssub.s32 %s10, %s17
      %p19 = scmp.eq.s32.totalorder %s18, 0
      %s21 = sadd.s32 %s20, 1
      %s22 = scalar_select %p19, %s20, %s21
      %p25 = pneg %p19
      %p26 = scmp.eq.s32.totalorder %s10, 1
      %p27 = por %p25, %p26
      %p28 = scmp.ne.s32.totalorder %s20, %s23
      %p29 = scmp.eq.s32.totalorder %s10, 0
      %p30 = por %p28, %p29
      %p31 = scmp.ne.s32.totalorder %s20, %s23
      %p32 = scmp.eq.s32.totalorder %s15, 1
      %p33 = por %p31, %p32
      %p34 = scmp.ne.s32.totalorder %s23, %s24
      %p35 = scmp.eq.s32.totalorder %s15, 0
      %p36 = por %p34, %p35
      %p37 = scmp.ne.s32.totalorder %s23, %s24
      %p38 = scmp.eq.s32.totalorder %s16, 1
      %p39 = por %p37, %p38
      %p41 = scmp.ne.s32.totalorder %s24, %s40
      %p42 = scmp.eq.s32.totalorder %s16, 0
      %p43 = por %p41, %p42
      %s44 = ssub.s32 %s10, %s17
      %p45 = scmp.eq.s32.totalorder %s44, 0
      %s47 = sadd.s32 %s46, 1
      %s48 = scalar_select %p45, %s46, %s47
      %p51 = pneg %p45
      %p52 = scmp.eq.s32.totalorder %s10, 1
      %p53 = por %p51, %p52
      %p54 = scmp.ne.s32.totalorder %s46, %s49
      %p55 = scmp.eq.s32.totalorder %s10, 0
      %p56 = por %p54, %p55
      %p57 = scmp.ne.s32.totalorder %s46, %s49
      %p58 = scmp.eq.s32.totalorder %s15, 1
      %p59 = por %p57, %p58
      %p60 = scmp.ne.s32.totalorder %s49, %s50
      %p61 = scmp.eq.s32.totalorder %s15, 0
      %p62 = por %p60, %p61
      %p63 = scmp.ne.s32.totalorder %s49, %s50
      %p64 = scmp.eq.s32.totalorder %s16, 1
      %p65 = por %p63, %p64
      %p67 = scmp.ne.s32.totalorder %s50, %s66
      %p68 = scmp.eq.s32.totalorder %s16, 0
      %p69 = por %p67, %p68
      %s70 = ssub.s32 %s10, %s17
      %p71 = scmp.eq.s32.totalorder %s70, 0
      %s73 = sadd.s32 %s72, 1
      %s74 = scalar_select %p71, %s72, %s73
      %p77 = pneg %p71
      %p78 = scmp.eq.s32.totalorder %s10, 1
      %p79 = por %p77, %p78
      %p80 = scmp.ne.s32.totalorder %s72, %s75
      %p81 = scmp.eq.s32.totalorder %s10, 0
      %p82 = por %p80, %p81
      %p83 = scmp.ne.s32.totalorder %s72, %s75
      %p84 = scmp.eq.s32.totalorder %s15, 1
      %p85 = por %p83, %p84
      %p86 = scmp.ne.s32.totalorder %s75, %s76
      %p87 = scmp.eq.s32.totalorder %s15, 0
      %p88 = por %p86, %p87
      %p89 = scmp.ne.s32.totalorder %s75, %s76
      %p90 = scmp.eq.s32.totalorder %s16, 1
      %p91 = por %p89, %p90
      %p93 = scmp.ne.s32.totalorder %s76, %s92
      %p94 = scmp.eq.s32.totalorder %s16, 0
      %p95 = por %p93, %p94
      %s96 = ssub.s32 %s10, %s17
      %p97 = scmp.eq.s32.totalorder %s96, 0
      %s99 = sadd.s32 %s98, 1
      %s100 = scalar_select %p97, %s98, %s99
      %p103 = pneg %p97
      %p104 = scmp.eq.s32.totalorder %s10, 1
      %p105 = por %p103, %p104
      %p106 = scmp.ne.s32.totalorder %s98, %s101
      %p107 = scmp.eq.s32.totalorder %s10, 0
      %p108 = por %p106, %p107
      %p109 = scmp.ne.s32.totalorder %s98, %s101
      %p110 = scmp.eq.s32.totalorder %s15, 1
      %p111 = por %p109, %p110
      %p112 = scmp.ne.s32.totalorder %s101, %s102
      %p113 = scmp.eq.s32.totalorder %s15, 0
      %p114 = por %p112, %p113
      %p115 = scmp.ne.s32.totalorder %s101, %s102
      %p116 = scmp.eq.s32.totalorder %s16, 1
      %p117 = por %p115, %p116
      %p119 = scmp.ne.s32.totalorder %s102, %s118
      %p120 = scmp.eq.s32.totalorder %s16, 0
      %p121 = por %p119, %p120
      %s122 = ssub.s32 %s10, %s17
      %p123 = scmp.eq.s32.totalorder %s122, 0
      %s125 = sadd.s32 %s124, 1
      %s126 = scalar_select %p123, %s124, %s125
      %p129 = pneg %p123
      %p130 = scmp.eq.s32.totalorder %s10, 1
      %p131 = por %p129, %p130
      %p132 = scmp.ne.s32.totalorder %s124, %s127
      %p133 = scmp.eq.s32.totalorder %s10, 0
      %p134 = por %p132, %p133
      %p135 = scmp.ne.s32.totalorder %s124, %s127
      %p136 = scmp.eq.s32.totalorder %s15, 1
      %p137 = por %p135, %p136
      %p138 = scmp.ne.s32.totalorder %s127, %s128
      %p139 = scmp.eq.s32.totalorder %s15, 0
      %p140 = por %p138, %p139
      %p141 = scmp.ne.s32.totalorder %s127, %s128
      %p142 = scmp.eq.s32.totalorder %s16, 1
      %p143 = por %p141, %p142
      %p145 = scmp.ne.s32.totalorder %s128, %s144
      %p146 = scmp.eq.s32.totalorder %s16, 0
      %p147 = por %p145, %p146
      %p148 = scmp.le.s32.totalorder 1, %s10
      %p149 = scmp.lt.s32.totalorder %s10, 3
      %p150 = pnand %p148, %p149
      %p151 = pneg %p150
      // Predicated region
      $region9: #{tpu_custom_call.1} parent=5 // pred_check
        _
      $region10: #{tpu_custom_call.1} parent=5 // pred_check_branch
        %153 = sbr.rel (%p150) target = $region12
      $region11: #{tpu_custom_call.1} parent=5 // pred_region
        %s154 = ssub.s32 %s10, 1
      $region12: #{tpu_custom_call.1} parent=5 // pred_fallthru
        _
      %p155 = scmp.lt.s32.totalorder %s10, 2
      // Predicated region
      $region13: #{tpu_custom_call.1} parent=5 // pred_check
        %p156 = pneg %p155
      $region14: #{tpu_custom_call.1} parent=5 // pred_check_branch
        %158 = sbr.rel (%p156) target = $region16
      $region15: #{tpu_custom_call.1} parent=5 // pred_region
        // Predicated region
        $region17: #{tpu_custom_call.1} parent=15 // pred_check
          %p159 = pneg %p30
        $region18: #{tpu_custom_call.1} parent=15 // pred_check_branch
          %161 = sbr.rel (%p159) target = $region20
        $region19: #{tpu_custom_call.1} parent=15 // pred_region
          %s162 = sand.u32 %s20, 1
          %s163 = sand.u32 %s20, 1
          %s164 = smul.addr %s163, 672
          %s165 = scalar_lea.vmem [#allocation3], %s164
          %s166 = smul.u32 3, %s10
          %s167 = smul.addr %s166, 8
          %s168 = scalar_lea.vmem %s0, %s167
          // Predicated region
          $region21: #{tpu_custom_call.1} parent=19 // pred_check
            _
          $region22: #{tpu_custom_call.1} parent=19 // pred_check_branch
            %170 = sbr.rel (0) target = $region24
          $region23: #{tpu_custom_call.1} parent=19 // pred_region
            // Predicated region
            $region25: #{tpu_custom_call.1} parent=23 // pred_check
              _
            $region26: #{tpu_custom_call.1} parent=23 // pred_check_branch
              %172 = sbr.rel (0) target = $region28
            $region27: #{tpu_custom_call.1} parent=23 // pred_region
              loop: start=0, step=1, limit=1
              $region29: #{tpu_custom_call.1} parent=27 // loop_pre_header
                _
              $region30: #{tpu_custom_call.1} parent=27 // loop_header
                %s174 = sphi 0, %s178
                %p175 = scmp.ge.s32.totalorder %s174, 1
                %s179 = sphi %s168, %s168
                %s180 = sphi %s165, %s165
              $region31: #{tpu_custom_call.1} parent=27 // loop_header_branch
                %177 = sbr.rel (%p175) target = $region35
              $region32: #{tpu_custom_call.1} parent=27 // loop_body
                %v181 = vld [vmem:[%s179] sm:$0xff]
                %182 = vst [vmem:[%s180] sm:$0xff] %v181
                %v183 = vld [vmem:[%s179 + $0x8] sm:$0xff]
                %184 = vst [vmem:[%s180 + $0x8] sm:$0xff] %v183
                %v185 = vld [vmem:[%s179 + $0x10] sm:$0xff]
                %186 = vst [vmem:[%s180 + $0x10] sm:$0xff] %v185
                %v187 = vld [vmem:[%s179 + $0x30] sm:$0xff]
                %188 = vst [vmem:[%s180 + $0x18] sm:$0xff] %v187
                %v189 = vld [vmem:[%s179 + $0x38] sm:$0xff]
                %190 = vst [vmem:[%s180 + $0x20] sm:$0xff] %v189
                %v191 = vld [vmem:[%s179 + $0x40] sm:$0xff]
                %192 = vst [vmem:[%s180 + $0x28] sm:$0xff] %v191
                %v193 = vld [vmem:[%s179 + $0x60] sm:$0xff]
                %194 = vst [vmem:[%s180 + $0x30] sm:$0xff] %v193
                %v195 = vld [vmem:[%s179 + $0x68] sm:$0xff]
                %196 = vst [vmem:[%s180 + $0x38] sm:$0xff] %v195
                %v197 = vld [vmem:[%s179 + $0x70] sm:$0xff]
                %198 = vst [vmem:[%s180 + $0x40] sm:$0xff] %v197
                %v199 = vld [vmem:[%s179 + $0x90] sm:$0xff]
                %200 = vst [vmem:[%s180 + $0x48] sm:$0xff] %v199
                %v201 = vld [vmem:[%s179 + $0x98] sm:$0xff]
                %202 = vst [vmem:[%s180 + $0x50] sm:$0xff] %v201
                %v203 = vld [vmem:[%s179 + $0xa0] sm:$0xff]
                %204 = vst [vmem:[%s180 + $0x58] sm:$0xff] %v203
                %v205 = vld [vmem:[%s179 + $0xc0] sm:$0xff]
                %206 = vst [vmem:[%s180 + $0x60] sm:$0xff] %v205
                %v207 = vld [vmem:[%s179 + $0xc8] sm:$0xff]
                %208 = vst [vmem:[%s180 + $0x68] sm:$0xff] %v207
                %v209 = vld [vmem:[%s179 + $0xd0] sm:$0xff]
                %210 = vst [vmem:[%s180 + $0x70] sm:$0xff] %v209
                %v211 = vld [vmem:[%s179 + $0xf0] sm:$0xff]
                %212 = vst [vmem:[%s180 + $0x78] sm:$0xff] %v211
                %v213 = vld [vmem:[%s179 + $0xf8] sm:$0xff]
                %214 = vst [vmem:[%s180 + $0x80] sm:$0xff] %v213
                %v215 = vld [vmem:[%s179 + $0x100] sm:$0xff]
                %216 = vst [vmem:[%s180 + $0x88] sm:$0xff] %v215
                %v217 = vld [vmem:[%s179 + $0x120] sm:$0xff]
                %218 = vst [vmem:[%s180 + $0x90] sm:$0xff] %v217
                %v219 = vld [vmem:[%s179 + $0x128] sm:$0xff]
                %220 = vst [vmem:[%s180 + $0x98] sm:$0xff] %v219
                %v221 = vld [vmem:[%s179 + $0x130] sm:$0xff]
                %222 = vst [vmem:[%s180 + $0xa0] sm:$0xff] %v221
                %v223 = vld [vmem:[%s179 + $0x150] sm:$0xff]
                %224 = vst [vmem:[%s180 + $0xa8] sm:$0xff] %v223
                %v225 = vld [vmem:[%s179 + $0x158] sm:$0xff]
                %226 = vst [vmem:[%s180 + $0xb0] sm:$0xff] %v225
                %v227 = vld [vmem:[%s179 + $0x160] sm:$0xff]
                %228 = vst [vmem:[%s180 + $0xb8] sm:$0xff] %v227
                %v229 = vld [vmem:[%s179 + $0x180] sm:$0xff]
                %230 = vst [vmem:[%s180 + $0xc0] sm:$0xff] %v229
                %v231 = vld [vmem:[%s179 + $0x188] sm:$0xff]
                %232 = vst [vmem:[%s180 + $0xc8] sm:$0xff] %v231
                %v233 = vld [vmem:[%s179 + $0x190] sm:$0xff]
                %234 = vst [vmem:[%s180 + $0xd0] sm:$0xff] %v233
                %v235 = vld [vmem:[%s179 + $0x1b0] sm:$0xff]
                %236 = vst [vmem:[%s180 + $0xd8] sm:$0xff] %v235
                %v237 = vld [vmem:[%s179 + $0x1b8] sm:$0xff]
                %238 = vst [vmem:[%s180 + $0xe0] sm:$0xff] %v237
                %v239 = vld [vmem:[%s179 + $0x1c0] sm:$0xff]
                %240 = vst [vmem:[%s180 + $0xe8] sm:$0xff] %v239
                %v241 = vld [vmem:[%s179 + $0x1e0] sm:$0xff]
                %242 = vst [vmem:[%s180 + $0xf0] sm:$0xff] %v241
                %v243 = vld [vmem:[%s179 + $0x1e8] sm:$0xff]
                %244 = vst [vmem:[%s180 + $0xf8] sm:$0xff] %v243
                %v245 = vld [vmem:[%s179 + $0x1f0] sm:$0xff]
                %246 = vst [vmem:[%s180 + $0x100] sm:$0xff] %v245
                %v247 = vld [vmem:[%s179 + $0x210] sm:$0xff]
                %248 = vst [vmem:[%s180 + $0x108] sm:$0xff] %v247
                %v249 = vld [vmem:[%s179 + $0x218] sm:$0xff]
                %250 = vst [vmem:[%s180 + $0x110] sm:$0xff] %v249
                %v251 = vld [vmem:[%s179 + $0x220] sm:$0xff]
                %252 = vst [vmem:[%s180 + $0x118] sm:$0xff] %v251
                %v253 = vld [vmem:[%s179 + $0x240] sm:$0xff]
                %254 = vst [vmem:[%s180 + $0x120] sm:$0xff] %v253
                %v255 = vld [vmem:[%s179 + $0x248] sm:$0xff]
                %256 = vst [vmem:[%s180 + $0x128] sm:$0xff] %v255
                %v257 = vld [vmem:[%s179 + $0x250] sm:$0xff]
                %258 = vst [vmem:[%s180 + $0x130] sm:$0xff] %v257
                %v259 = vld [vmem:[%s179 + $0x270] sm:$0xff]
                %260 = vst [vmem:[%s180 + $0x138] sm:$0xff] %v259
                %v261 = vld [vmem:[%s179 + $0x278] sm:$0xff]
                %262 = vst [vmem:[%s180 + $0x140] sm:$0xff] %v261
                %v263 = vld [vmem:[%s179 + $0x280] sm:$0xff]
                %264 = vst [vmem:[%s180 + $0x148] sm:$0xff] %v263
                %v265 = vld [vmem:[%s179 + $0x2a0] sm:$0xff]
                %266 = vst [vmem:[%s180 + $0x150] sm:$0xff] %v265
                %v267 = vld [vmem:[%s179 + $0x2a8] sm:$0xff]
                %268 = vst [vmem:[%s180 + $0x158] sm:$0xff] %v267
                %v269 = vld [vmem:[%s179 + $0x2b0] sm:$0xff]
                %270 = vst [vmem:[%s180 + $0x160] sm:$0xff] %v269
                %v271 = vld [vmem:[%s179 + $0x2d0] sm:$0xff]
                %272 = vst [vmem:[%s180 + $0x168] sm:$0xff] %v271
                %v273 = vld [vmem:[%s179 + $0x2d8] sm:$0xff]
                %274 = vst [vmem:[%s180 + $0x170] sm:$0xff] %v273
                %v275 = vld [vmem:[%s179 + $0x2e0] sm:$0xff]
                %276 = vst [vmem:[%s180 + $0x178] sm:$0xff] %v275
                %v277 = vld [vmem:[%s179 + $0x300] sm:$0xff]
                %278 = vst [vmem:[%s180 + $0x180] sm:$0xff] %v277
                %v279 = vld [vmem:[%s179 + $0x308] sm:$0xff]
                %280 = vst [vmem:[%s180 + $0x188] sm:$0xff] %v279
                %v281 = vld [vmem:[%s179 + $0x310] sm:$0xff]
                %282 = vst [vmem:[%s180 + $0x190] sm:$0xff] %v281
                %v283 = vld [vmem:[%s179 + $0x330] sm:$0xff]
                %284 = vst [vmem:[%s180 + $0x198] sm:$0xff] %v283
                %v285 = vld [vmem:[%s179 + $0x338] sm:$0xff]
                %286 = vst [vmem:[%s180 + $0x1a0] sm:$0xff] %v285
                %v287 = vld [vmem:[%s179 + $0x340] sm:$0xff]
                %288 = vst [vmem:[%s180 + $0x1a8] sm:$0xff] %v287
                %v289 = vld [vmem:[%s179 + $0x360] sm:$0xff]
                %290 = vst [vmem:[%s180 + $0x1b0] sm:$0xff] %v289
                %v291 = vld [vmem:[%s179 + $0x368] sm:$0xff]
                %292 = vst [vmem:[%s180 + $0x1b8] sm:$0xff] %v291
                %v293 = vld [vmem:[%s179 + $0x370] sm:$0xff]
                %294 = vst [vmem:[%s180 + $0x1c0] sm:$0xff] %v293
                %v295 = vld [vmem:[%s179 + $0x390] sm:$0xff]
                %296 = vst [vmem:[%s180 + $0x1c8] sm:$0xff] %v295
                %v297 = vld [vmem:[%s179 + $0x398] sm:$0xff]
                %298 = vst [vmem:[%s180 + $0x1d0] sm:$0xff] %v297
                %v299 = vld [vmem:[%s179 + $0x3a0] sm:$0xff]
                %300 = vst [vmem:[%s180 + $0x1d8] sm:$0xff] %v299
                %v301 = vld [vmem:[%s179 + $0x3c0] sm:$0xff]
                %302 = vst [vmem:[%s180 + $0x1e0] sm:$0xff] %v301
                %v303 = vld [vmem:[%s179 + $0x3c8] sm:$0xff]
                %304 = vst [vmem:[%s180 + $0x1e8] sm:$0xff] %v303
                %v305 = vld [vmem:[%s179 + $0x3d0] sm:$0xff]
                %306 = vst [vmem:[%s180 + $0x1f0] sm:$0xff] %v305
                %v307 = vld [vmem:[%s179 + $0x3f0] sm:$0xff]
                %308 = vst [vmem:[%s180 + $0x1f8] sm:$0xff] %v307
                %v309 = vld [vmem:[%s179 + $0x3f8] sm:$0xff]
                %310 = vst [vmem:[%s180 + $0x200] sm:$0xff] %v309
                %v311 = vld [vmem:[%s179 + $0x400] sm:$0xff]
                %312 = vst [vmem:[%s180 + $0x208] sm:$0xff] %v311
                %v313 = vld [vmem:[%s179 + $0x420] sm:$0xff]
                %314 = vst [vmem:[%s180 + $0x210] sm:$0xff] %v313
                %v315 = vld [vmem:[%s179 + $0x428] sm:$0xff]
                %316 = vst [vmem:[%s180 + $0x218] sm:$0xff] %v315
                %v317 = vld [vmem:[%s179 + $0x430] sm:$0xff]
                %318 = vst [vmem:[%s180 + $0x220] sm:$0xff] %v317
                %v319 = vld [vmem:[%s179 + $0x450] sm:$0xff]
                %320 = vst [vmem:[%s180 + $0x228] sm:$0xff] %v319
                %v321 = vld [vmem:[%s179 + $0x458] sm:$0xff]
                %322 = vst [vmem:[%s180 + $0x230] sm:$0xff] %v321
                %v323 = vld [vmem:[%s179 + $0x460] sm:$0xff]
                %324 = vst [vmem:[%s180 + $0x238] sm:$0xff] %v323
                %v325 = vld [vmem:[%s179 + $0x480] sm:$0xff]
                %326 = vst [vmem:[%s180 + $0x240] sm:$0xff] %v325
                %v327 = vld [vmem:[%s179 + $0x488] sm:$0xff]
                %328 = vst [vmem:[%s180 + $0x248] sm:$0xff] %v327
                %v329 = vld [vmem:[%s179 + $0x490] sm:$0xff]
                %330 = vst [vmem:[%s180 + $0x250] sm:$0xff] %v329
                %v331 = vld [vmem:[%s179 + $0x4b0] sm:$0xff]
                %332 = vst [vmem:[%s180 + $0x258] sm:$0xff] %v331
                %v333 = vld [vmem:[%s179 + $0x4b8] sm:$0xff]
                %334 = vst [vmem:[%s180 + $0x260] sm:$0xff] %v333
                %v335 = vld [vmem:[%s179 + $0x4c0] sm:$0xff]
                %336 = vst [vmem:[%s180 + $0x268] sm:$0xff] %v335
                %v337 = vld [vmem:[%s179 + $0x4e0] sm:$0xff]
                %338 = vst [vmem:[%s180 + $0x270] sm:$0xff] %v337
                %v339 = vld [vmem:[%s179 + $0x4e8] sm:$0xff]
                %340 = vst [vmem:[%s180 + $0x278] sm:$0xff] %v339
                %v341 = vld [vmem:[%s179 + $0x4f0] sm:$0xff]
                %342 = vst [vmem:[%s180 + $0x280] sm:$0xff] %v341
                %v343 = vld [vmem:[%s179 + $0x510] sm:$0xff]
                %344 = vst [vmem:[%s180 + $0x288] sm:$0xff] %v343
                %v345 = vld [vmem:[%s179 + $0x518] sm:$0xff]
                %346 = vst [vmem:[%s180 + $0x290] sm:$0xff] %v345
                %v347 = vld [vmem:[%s179 + $0x520] sm:$0xff]
                %348 = vst [vmem:[%s180 + $0x298] sm:$0xff] %v347
              $region33: #{tpu_custom_call.1} parent=27 // loop_footer
                %s178 = sadd.s32 1, %s174
              $region34: #{tpu_custom_call.1} parent=27 // loop_footer_branch
                %173 = sbr.rel target = $region30
              $region35: #{tpu_custom_call.1} parent=27 // loop_exit
                _
            $region28: #{tpu_custom_call.1} parent=23 // pred_fallthru
              _
            // Predicated region
            $region36: #{tpu_custom_call.1} parent=23 // pred_check
              _
            $region37: #{tpu_custom_call.1} parent=23 // pred_check_branch
              %350 = sbr.rel target = $region39
            $region38: #{tpu_custom_call.1} parent=23 // pred_region
              _
            $region39: #{tpu_custom_call.1} parent=23 // pred_fallthru
              _
          $region24: #{tpu_custom_call.1} parent=19 // pred_fallthru
            _
          %351 = vnop
        $region20: #{tpu_custom_call.1} parent=15 // pred_fallthru
          _
        // Predicated region
        $region40: #{tpu_custom_call.1} parent=15 // pred_check
          %p352 = pneg %p56
        $region41: #{tpu_custom_call.1} parent=15 // pred_check_branch
          %354 = sbr.rel (%p352) target = $region43
        $region42: #{tpu_custom_call.1} parent=15 // pred_region
          %s355 = sand.u32 %s46, 1
          %s356 = sand.u32 %s46, 1
          %s357 = smul.addr %s356, 48
          %s358 = scalar_lea.vmem [#allocation4], %s357
          %s359 = smul.u32 3, %s10
          %s360 = smul.addr %s359, 8
          %s361 = scalar_lea.vmem %s1, %s360
          // Predicated region
          $region44: #{tpu_custom_call.1} parent=42 // pred_check
            _
          $region45: #{tpu_custom_call.1} parent=42 // pred_check_branch
            %363 = sbr.rel (0) target = $region47
          $region46: #{tpu_custom_call.1} parent=42 // pred_region
            // Predicated region
            $region48: #{tpu_custom_call.1} parent=46 // pred_check
              _
            $region49: #{tpu_custom_call.1} parent=46 // pred_check_branch
              %365 = sbr.rel (0) target = $region51
            $region50: #{tpu_custom_call.1} parent=46 // pred_region
              loop: start=0, step=1, limit=1
              $region52: #{tpu_custom_call.1} parent=50 // loop_pre_header
                _
              $region53: #{tpu_custom_call.1} parent=50 // loop_header
                %s367 = sphi 0, %s371
                %p368 = scmp.ge.s32.totalorder %s367, 1
                %s372 = sphi %s361, %s361
                %s373 = sphi %s358, %s358
              $region54: #{tpu_custom_call.1} parent=50 // loop_header_branch
                %370 = sbr.rel (%p368) target = $region58
              $region55: #{tpu_custom_call.1} parent=50 // loop_body
                %v374 = vld [vmem:[%s372] sm:$0xff]
                %375 = vst [vmem:[%s373] sm:$0xff] %v374
                %v376 = vld [vmem:[%s372 + $0x8] sm:$0xff]
                %377 = vst [vmem:[%s373 + $0x8] sm:$0xff] %v376
                %v378 = vld [vmem:[%s372 + $0x10] sm:$0xff]
                %379 = vst [vmem:[%s373 + $0x10] sm:$0xff] %v378
                %v380 = vld [vmem:[%s372 + $0x30] sm:$0xff]
                %381 = vst [vmem:[%s373 + $0x18] sm:$0xff] %v380
                %v382 = vld [vmem:[%s372 + $0x38] sm:$0xff]
                %383 = vst [vmem:[%s373 + $0x20] sm:$0xff] %v382
                %v384 = vld [vmem:[%s372 + $0x40] sm:$0xff]
                %385 = vst [vmem:[%s373 + $0x28] sm:$0xff] %v384
              $region56: #{tpu_custom_call.1} parent=50 // loop_footer
                %s371 = sadd.s32 1, %s367
              $region57: #{tpu_custom_call.1} parent=50 // loop_footer_branch
                %366 = sbr.rel target = $region53
              $region58: #{tpu_custom_call.1} parent=50 // loop_exit
                _
            $region51: #{tpu_custom_call.1} parent=46 // pred_fallthru
              _
            // Predicated region
            $region59: #{tpu_custom_call.1} parent=46 // pred_check
              _
            $region60: #{tpu_custom_call.1} parent=46 // pred_check_branch
              %387 = sbr.rel target = $region62
            $region61: #{tpu_custom_call.1} parent=46 // pred_region
              _
            $region62: #{tpu_custom_call.1} parent=46 // pred_fallthru
              _
          $region47: #{tpu_custom_call.1} parent=42 // pred_fallthru
            _
          %388 = vnop
        $region43: #{tpu_custom_call.1} parent=15 // pred_fallthru
          _
        // Predicated region
        $region63: #{tpu_custom_call.1} parent=15 // pred_check
          %p389 = pneg %p82
        $region64: #{tpu_custom_call.1} parent=15 // pred_check_branch
          %391 = sbr.rel (%p389) target = $region66
        $region65: #{tpu_custom_call.1} parent=15 // pred_region
          %s392 = smul.u32 3, %s10
          %p393 = scmp.lt.s32.totalorder %s392, 5
          %s394 = scalar_select %p393, %s392, 5
          %s395 = scalar_lea.vmem %s2, %s394
          %s396 = smul.u32 3, %s10
        $region66: #{tpu_custom_call.1} parent=15 // pred_fallthru
          _
        // Predicated region
        $region67: #{tpu_custom_call.1} parent=15 // pred_check
          %p397 = pneg %p108
        $region68: #{tpu_custom_call.1} parent=15 // pred_check_branch
          %399 = sbr.rel (%p397) target = $region70
        $region69: #{tpu_custom_call.1} parent=15 // pred_region
          %s400 = smul.u32 3, %s10
          %p401 = scmp.lt.s32.totalorder %s400, 5
          %s402 = scalar_select %p401, %s400, 5
          %s403 = scalar_lea.vmem %s3, %s402
          %s404 = smul.u32 3, %s10
        $region70: #{tpu_custom_call.1} parent=15 // pred_fallthru
          _
      $region16: #{tpu_custom_call.1} parent=5 // pred_fallthru
        _
      %p405 = scmp.le.s32.totalorder 1, %s10
      %p406 = scmp.lt.s32.totalorder %s10, 3
      %p407 = pnand %p405, %p406
      %p408 = pneg %p407
      // Predicated region
      $region71: #{tpu_custom_call.1} parent=5 // pred_check
        _
      $region72: #{tpu_custom_call.1} parent=5 // pred_check_branch
        %410 = sbr.rel (%p407) target = $region74
      $region73: #{tpu_custom_call.1} parent=5 // pred_region
        %s411 = ssub.s32 %s10, 1
        %s412 = sand.u32 %s23, 1
        %s413 = sand.u32 %s23, 1
        %s414 = smul.addr %s413, 672
        %s415 = scalar_lea.vmem [#allocation3], %s414
        // Predicated region
        $region75: #{tpu_custom_call.1} parent=73 // pred_check
          %p416 = pneg %p36
        $region76: #{tpu_custom_call.1} parent=73 // pred_check_branch
          %418 = sbr.rel (%p416) target = $region78
        $region77: #{tpu_custom_call.1} parent=73 // pred_region
          _
        $region78: #{tpu_custom_call.1} parent=73 // pred_fallthru
          _
        %s419 = sand.u32 %s49, 1
        %s420 = sand.u32 %s49, 1
        %s421 = smul.addr %s420, 48
        %s422 = scalar_lea.vmem [#allocation4], %s421
        // Predicated region
        $region79: #{tpu_custom_call.1} parent=73 // pred_check
          %p423 = pneg %p62
        $region80: #{tpu_custom_call.1} parent=73 // pred_check_branch
          %425 = sbr.rel (%p423) target = $region82
        $region81: #{tpu_custom_call.1} parent=73 // pred_region
          _
        $region82: #{tpu_custom_call.1} parent=73 // pred_fallthru
          _
        %s426 = sand.u32 %s23, 1
        %s427 = sand.u32 %s23, 1
        %s428 = smul.addr %s427, 672
        %s429 = scalar_lea.vmem [#allocation3], %s428
        %p430 = pneg %p36
        %p431 = pneg %p33
        %s432 = sand.u32 %s49, 1
        %s433 = sand.u32 %s49, 1
        %s434 = smul.addr %s433, 48
        %s435 = scalar_lea.vmem [#allocation4], %s434
        %p436 = pneg %p62
        %p437 = pneg %p59
        %s438 = smul.u32 3, %s15
        %p439 = scmp.lt.s32.totalorder %s438, 5
        %s440 = scalar_select %p439, %s438, 5
        %s441 = scalar_lea.vmem %s2, %s440
        %p442 = pneg %p88
        %p443 = pneg %p85
        %s444 = smul.u32 3, %s15
        %p445 = scmp.lt.s32.totalorder %s444, 5
        %s446 = scalar_select %p445, %s444, 5
        %s447 = scalar_lea.vmem %s3, %s446
        %p448 = pneg %p114
        %p449 = pneg %p111
        %p450 = pneg %p140
        %p451 = pneg %p137
        %s452 = sand.u32 %s127, 1
        %s453 = sand.u32 %s127, 1
        %s454 = smul.addr %s453, 672
        %s455 = scalar_lea.vmem [#allocation5], %s454
        %s456 = smul.u32 3, %s15
        %s457 = smul.u32 3, %s15
        %s458 = smul.u32 3, %s15
        %p459 = scmp.lt.s32.totalorder %s458, 5
        %s460 = scalar_select %p459, %s458, 5
        %s461 = scalar_lea.vmem %s2, %s460
        %s462 = smul.u32 3, %s15
        %s463 = smul.u32 3, %s15
        %p464 = scmp.lt.s32.totalorder %s463, 5
        %s465 = scalar_select %p464, %s463, 5
        %s466 = scalar_lea.vmem %s3, %s465
        %s467 = smul.u32 3, %s15
        %s468 = smul.u32 3, %s15
        %469 = vst [vmem:[#allocation2] sm:$0xff] 0.0
        %470 = vst [vmem:[#allocation2 + $0x8] sm:$0xff] 0.0
        %471 = vst [vmem:[#allocation2 + $0x10] sm:$0xff] 0.0
        %472 = vst [vmem:[#allocation2 + $0x18] sm:$0xff] 0.0
        %473 = vst [vmem:[#allocation2 + $0x20] sm:$0xff] 0.0
        %474 = vst [vmem:[#allocation2 + $0x28] sm:$0xff] 0.0
        %475 = vst [vmem:[#allocation2 + $0x30] sm:$0xff] 0.0
        %476 = vst [vmem:[#allocation2 + $0x38] sm:$0xff] 0.0
        %477 = vst [vmem:[#allocation2 + $0x40] sm:$0xff] 0.0
        %478 = vst [vmem:[#allocation2 + $0x48] sm:$0xff] 0.0
        %479 = vst [vmem:[#allocation2 + $0x50] sm:$0xff] 0.0
        %480 = vst [vmem:[#allocation2 + $0x58] sm:$0xff] 0.0
        %481 = vst [vmem:[#allocation2 + $0x60] sm:$0xff] 0.0
        %482 = vst [vmem:[#allocation2 + $0x68] sm:$0xff] 0.0
        %483 = vst [vmem:[#allocation2 + $0x70] sm:$0xff] 0.0
        %484 = vst [vmem:[#allocation2 + $0x78] sm:$0xff] 0.0
        %485 = vst [vmem:[#allocation2 + $0x80] sm:$0xff] 0.0
        %486 = vst [vmem:[#allocation2 + $0x88] sm:$0xff] 0.0
        %487 = vst [vmem:[#allocation2 + $0x90] sm:$0xff] 0.0
        %488 = vst [vmem:[#allocation2 + $0x98] sm:$0xff] 0.0
        %489 = vst [vmem:[#allocation2 + $0xa0] sm:$0xff] 0.0
        %490 = vst [vmem:[#allocation2 + $0xa8] sm:$0xff] 0.0
        %491 = vst [vmem:[#allocation2 + $0xb0] sm:$0xff] 0.0
        %492 = vst [vmem:[#allocation2 + $0xb8] sm:$0xff] 0.0
        %493 = vst [vmem:[#allocation2 + $0xc0] sm:$0xff] 0.0
        %494 = vst [vmem:[#allocation2 + $0xc8] sm:$0xff] 0.0
        %495 = vst [vmem:[#allocation2 + $0xd0] sm:$0xff] 0.0
        %496 = vst [vmem:[#allocation2 + $0xd8] sm:$0xff] 0.0
        %497 = vst [vmem:[#allocation2 + $0xe0] sm:$0xff] 0.0
        %498 = vst [vmem:[#allocation2 + $0xe8] sm:$0xff] 0.0
        %499 = vst [vmem:[#allocation2 + $0xf0] sm:$0xff] 0.0
        %500 = vst [vmem:[#allocation2 + $0xf8] sm:$0xff] 0.0
        %501 = vst [vmem:[#allocation2 + $0x100] sm:$0xff] 0.0
        %502 = vst [vmem:[#allocation2 + $0x108] sm:$0xff] 0.0
        %503 = vst [vmem:[#allocation2 + $0x110] sm:$0xff] 0.0
        %504 = vst [vmem:[#allocation2 + $0x118] sm:$0xff] 0.0
        %505 = vst [vmem:[#allocation2 + $0x120] sm:$0xff] 0.0
        %506 = vst [vmem:[#allocation2 + $0x128] sm:$0xff] 0.0
        %507 = vst [vmem:[#allocation2 + $0x130] sm:$0xff] 0.0
        %508 = vst [vmem:[#allocation2 + $0x138] sm:$0xff] 0.0
        %509 = vst [vmem:[#allocation2 + $0x140] sm:$0xff] 0.0
        %510 = vst [vmem:[#allocation2 + $0x148] sm:$0xff] 0.0
        %511 = vst [vmem:[#allocation2 + $0x150] sm:$0xff] 0.0
        %512 = vst [vmem:[#allocation2 + $0x158] sm:$0xff] 0.0
        %513 = vst [vmem:[#allocation2 + $0x160] sm:$0xff] 0.0
        %514 = vst [vmem:[#allocation2 + $0x168] sm:$0xff] 0.0
        %515 = vst [vmem:[#allocation2 + $0x170] sm:$0xff] 0.0
        %516 = vst [vmem:[#allocation2 + $0x178] sm:$0xff] 0.0
        %517 = vst [vmem:[#allocation2 + $0x180] sm:$0xff] 0.0
        %518 = vst [vmem:[#allocation2 + $0x188] sm:$0xff] 0.0
        %519 = vst [vmem:[#allocation2 + $0x190] sm:$0xff] 0.0
        %520 = vst [vmem:[#allocation2 + $0x198] sm:$0xff] 0.0
        %521 = vst [vmem:[#allocation2 + $0x1a0] sm:$0xff] 0.0
        %522 = vst [vmem:[#allocation2 + $0x1a8] sm:$0xff] 0.0
        %523 = vst [vmem:[#allocation2 + $0x1b0] sm:$0xff] 0.0
        %524 = vst [vmem:[#allocation2 + $0x1b8] sm:$0xff] 0.0
        %525 = vst [vmem:[#allocation2 + $0x1c0] sm:$0xff] 0.0
        %526 = vst [vmem:[#allocation2 + $0x1c8] sm:$0xff] 0.0
        %527 = vst [vmem:[#allocation2 + $0x1d0] sm:$0xff] 0.0
        %528 = vst [vmem:[#allocation2 + $0x1d8] sm:$0xff] 0.0
        %529 = vst [vmem:[#allocation2 + $0x1e0] sm:$0xff] 0.0
        %530 = vst [vmem:[#allocation2 + $0x1e8] sm:$0xff] 0.0
        %531 = vst [vmem:[#allocation2 + $0x1f0] sm:$0xff] 0.0
        %532 = vst [vmem:[#allocation2 + $0x1f8] sm:$0xff] 0.0
        %533 = vst [vmem:[#allocation2 + $0x200] sm:$0xff] 0.0
        %534 = vst [vmem:[#allocation2 + $0x208] sm:$0xff] 0.0
        %535 = vst [vmem:[#allocation2 + $0x210] sm:$0xff] 0.0
        %536 = vst [vmem:[#allocation2 + $0x218] sm:$0xff] 0.0
        %537 = vst [vmem:[#allocation2 + $0x220] sm:$0xff] 0.0
        %538 = vst [vmem:[#allocation2 + $0x228] sm:$0xff] 0.0
        %539 = vst [vmem:[#allocation2 + $0x230] sm:$0xff] 0.0
        %540 = vst [vmem:[#allocation2 + $0x238] sm:$0xff] 0.0
        %541 = vst [vmem:[#allocation2 + $0x240] sm:$0xff] 0.0
        %542 = vst [vmem:[#allocation2 + $0x248] sm:$0xff] 0.0
        %543 = vst [vmem:[#allocation2 + $0x250] sm:$0xff] 0.0
        %544 = vst [vmem:[#allocation2 + $0x258] sm:$0xff] 0.0
        %545 = vst [vmem:[#allocation2 + $0x260] sm:$0xff] 0.0
        %546 = vst [vmem:[#allocation2 + $0x268] sm:$0xff] 0.0
        %547 = vst [vmem:[#allocation2 + $0x270] sm:$0xff] 0.0
        %548 = vst [vmem:[#allocation2 + $0x278] sm:$0xff] 0.0
        %549 = vst [vmem:[#allocation2 + $0x280] sm:$0xff] 0.0
        %550 = vst [vmem:[#allocation2 + $0x288] sm:$0xff] 0.0
        %551 = vst [vmem:[#allocation2 + $0x290] sm:$0xff] 0.0
        %552 = vst [vmem:[#allocation2 + $0x298] sm:$0xff] 0.0
        %553 = vst [vmem:[#allocation2 + $0x2a0] sm:$0xff] 0.0
        %554 = vst [vmem:[#allocation2 + $0x2a8] sm:$0xff] 0.0
        %555 = vst [vmem:[#allocation2 + $0x2b0] sm:$0xff] 0.0
        %556 = vst [vmem:[#allocation2 + $0x2b8] sm:$0xff] 0.0
        %557 = vst [vmem:[#allocation2 + $0x2c0] sm:$0xff] 0.0
        %558 = vst [vmem:[#allocation2 + $0x2c8] sm:$0xff] 0.0
        %559 = vst [vmem:[#allocation2 + $0x2d0] sm:$0xff] 0.0
        %560 = vst [vmem:[#allocation2 + $0x2d8] sm:$0xff] 0.0
        %561 = vst [vmem:[#allocation2 + $0x2e0] sm:$0xff] 0.0
        %562 = vst [vmem:[#allocation2 + $0x2e8] sm:$0xff] 0.0
        %563 = vst [vmem:[#allocation2 + $0x2f0] sm:$0xff] 0.0
        %564 = vst [vmem:[#allocation2 + $0x2f8] sm:$0xff] 0.0
        %v565 = vld [vmem:[%s415] sm:$0xff]
        %v566 = vld [vmem:[%s415 + $0x8] sm:$0xff]
        %v567 = vld [vmem:[%s415 + $0x10] sm:$0xff]
        %v568 = vld [vmem:[%s415 + $0x18] sm:$0x3f]
        %v569 = vld [vmem:[%s415 + $0x20] sm:$0x3f]
        %v570 = vld [vmem:[%s415 + $0x28] sm:$0x3f]
        %v571 = vld [vmem:[%s415 + $0x30] sm:$0xff]
        %v572 = vld [vmem:[%s415 + $0x38] sm:$0xff]
        %v573 = vld [vmem:[%s415 + $0x40] sm:$0xff]
        %v574 = vld [vmem:[%s415 + $0x48] sm:$0x3f]
        %v575 = vld [vmem:[%s415 + $0x50] sm:$0x3f]
        %v576 = vld [vmem:[%s415 + $0x58] sm:$0x3f]
        %v577 = vld [vmem:[%s415 + $0x60] sm:$0xff]
        %v578 = vld [vmem:[%s415 + $0x68] sm:$0xff]
        %v579 = vld [vmem:[%s415 + $0x70] sm:$0xff]
        %v580 = vld [vmem:[%s415 + $0x78] sm:$0x3f]
        %v581 = vld [vmem:[%s415 + $0x80] sm:$0x3f]
        %v582 = vld [vmem:[%s415 + $0x88] sm:$0x3f]
        %v583 = vld [vmem:[%s415 + $0x90] sm:$0xff]
        %v584 = vld [vmem:[%s415 + $0x98] sm:$0xff]
        %v585 = vld [vmem:[%s415 + $0xa0] sm:$0xff]
        %v586 = vld [vmem:[%s415 + $0xa8] sm:$0x3f]
        %v587 = vld [vmem:[%s415 + $0xb0] sm:$0x3f]
        %v588 = vld [vmem:[%s415 + $0xb8] sm:$0x3f]
        %v589 = vld [vmem:[%s415 + $0xc0] sm:$0xff]
        %v590 = vld [vmem:[%s415 + $0xc8] sm:$0xff]
        %v591 = vld [vmem:[%s415 + $0xd0] sm:$0xff]
        %v592 = vld [vmem:[%s415 + $0xd8] sm:$0x3f]
        %v593 = vld [vmem:[%s415 + $0xe0] sm:$0x3f]
        %v594 = vld [vmem:[%s415 + $0xe8] sm:$0x3f]
        %v595 = vld [vmem:[%s415 + $0xf0] sm:$0xff]
        %v596 = vld [vmem:[%s415 + $0xf8] sm:$0xff]
        %v597 = vld [vmem:[%s415 + $0x100] sm:$0xff]
        %v598 = vld [vmem:[%s415 + $0x108] sm:$0x3f]
        %v599 = vld [vmem:[%s415 + $0x110] sm:$0x3f]
        %v600 = vld [vmem:[%s415 + $0x118] sm:$0x3f]
        %v601 = vld [vmem:[%s415 + $0x120] sm:$0xff]
        %v602 = vld [vmem:[%s415 + $0x128] sm:$0xff]
        %v603 = vld [vmem:[%s415 + $0x130] sm:$0xff]
        %v604 = vld [vmem:[%s415 + $0x138] sm:$0x3f]
        %v605 = vld [vmem:[%s415 + $0x140] sm:$0x3f]
        %v606 = vld [vmem:[%s415 + $0x148] sm:$0x3f]
        %v607 = vld [vmem:[%s415 + $0x150] sm:$0xff]
        %v608 = vld [vmem:[%s415 + $0x158] sm:$0xff]
        %v609 = vld [vmem:[%s415 + $0x160] sm:$0xff]
        %v610 = vld [vmem:[%s415 + $0x168] sm:$0x3f]
        %v611 = vld [vmem:[%s415 + $0x170] sm:$0x3f]
        %v612 = vld [vmem:[%s415 + $0x178] sm:$0x3f]
        %v613 = vld [vmem:[%s415 + $0x180] sm:$0xff]
        %v614 = vld [vmem:[%s415 + $0x188] sm:$0xff]
        %v615 = vld [vmem:[%s415 + $0x190] sm:$0xff]
        %v616 = vld [vmem:[%s415 + $0x198] sm:$0x3f]
        %v617 = vld [vmem:[%s415 + $0x1a0] sm:$0x3f]
        %v618 = vld [vmem:[%s415 + $0x1a8] sm:$0x3f]
        %v619 = vld [vmem:[%s415 + $0x1b0] sm:$0xff]
        %v620 = vld [vmem:[%s415 + $0x1b8] sm:$0xff]
        %v621 = vld [vmem:[%s415 + $0x1c0] sm:$0xff]
        %v622 = vld [vmem:[%s415 + $0x1c8] sm:$0x3f]
        %v623 = vld [vmem:[%s415 + $0x1d0] sm:$0x3f]
        %v624 = vld [vmem:[%s415 + $0x1d8] sm:$0x3f]
        %v625 = vld [vmem:[%s415 + $0x1e0] sm:$0xff]
        %v626 = vld [vmem:[%s415 + $0x1e8] sm:$0xff]
        %v627 = vld [vmem:[%s415 + $0x1f0] sm:$0xff]
        %v628 = vld [vmem:[%s415 + $0x1f8] sm:$0x3f]
        %v629 = vld [vmem:[%s415 + $0x200] sm:$0x3f]
        %v630 = vld [vmem:[%s415 + $0x208] sm:$0x3f]
        %v631 = vld [vmem:[%s415 + $0x210] sm:$0xff]
        %v632 = vld [vmem:[%s415 + $0x218] sm:$0xff]
        %v633 = vld [vmem:[%s415 + $0x220] sm:$0xff]
        %v634 = vld [vmem:[%s415 + $0x228] sm:$0x3f]
        %v635 = vld [vmem:[%s415 + $0x230] sm:$0x3f]
        %v636 = vld [vmem:[%s415 + $0x238] sm:$0x3f]
        %v637 = vld [vmem:[%s415 + $0x240] sm:$0xff]
        %v638 = vld [vmem:[%s415 + $0x248] sm:$0xff]
        %v639 = vld [vmem:[%s415 + $0x250] sm:$0xff]
        %v640 = vld [vmem:[%s415 + $0x258] sm:$0x3f]
        %v641 = vld [vmem:[%s415 + $0x260] sm:$0x3f]
        %v642 = vld [vmem:[%s415 + $0x268] sm:$0x3f]
        %v643 = vld [vmem:[%s415 + $0x270] sm:$0xff]
        %v644 = vld [vmem:[%s415 + $0x278] sm:$0xff]
        %v645 = vld [vmem:[%s415 + $0x280] sm:$0xff]
        %v646 = vld [vmem:[%s415 + $0x288] sm:$0x3f]
        %v647 = vld [vmem:[%s415 + $0x290] sm:$0x3f]
        %v648 = vld [vmem:[%s415 + $0x298] sm:$0x3f]
        %vm733 = vcmask 1040384
        %v734 = vrot.slane %v565, 7
        %v735 = vrot.slane %v566, 7
        %v736 = vrot.slane %v567, 7
        %v737 = vrot.slane %v568, 7
        %v738 = vsel %vm733, %v734, %v737
        %v739 = vrot.slane %v569, 7
        %v740 = vsel %vm733, %v735, %v739
        %v741 = vrot.slane %v570, 7
        %v742 = vsel %vm733, %v736, %v741
        %v743 = vrot.slane %v571, 7
        %v744 = vrot.slane %v572, 7
        %v745 = vrot.slane %v573, 7
        %v746 = vrot.slane %v574, 7
        %v747 = vsel %vm733, %v743, %v746
        %v748 = vrot.slane %v575, 7
        %v749 = vsel %vm733, %v744, %v748
        %v750 = vrot.slane %v576, 7
        %v751 = vsel %vm733, %v745, %v750
        %v752 = vrot.slane %v577, 7
        %v753 = vrot.slane %v578, 7
        %v754 = vrot.slane %v579, 7
        %v755 = vrot.slane %v580, 7
        %v756 = vsel %vm733, %v752, %v755
        %v757 = vrot.slane %v581, 7
        %v758 = vsel %vm733, %v753, %v757
        %v759 = vrot.slane %v582, 7
        %v760 = vsel %vm733, %v754, %v759
        %v761 = vrot.slane %v583, 7
        %v762 = vrot.slane %v584, 7
        %v763 = vrot.slane %v585, 7
        %v764 = vrot.slane %v586, 7
        %v765 = vsel %vm733, %v761, %v764
        %v766 = vrot.slane %v587, 7
        %v767 = vsel %vm733, %v762, %v766
        %v768 = vrot.slane %v588, 7
        %v769 = vsel %vm733, %v763, %v768
        %v770 = vrot.slane %v589, 7
        %v771 = vrot.slane %v590, 7
        %v772 = vrot.slane %v591, 7
        %v773 = vrot.slane %v592, 7
        %v774 = vsel %vm733, %v770, %v773
        %v775 = vrot.slane %v593, 7
        %v776 = vsel %vm733, %v771, %v775
        %v777 = vrot.slane %v594, 7
        %v778 = vsel %vm733, %v772, %v777
        %v779 = vrot.slane %v595, 7
        %v780 = vrot.slane %v596, 7
        %v781 = vrot.slane %v597, 7
        %v782 = vrot.slane %v598, 7
        %v783 = vsel %vm733, %v779, %v782
        %v784 = vrot.slane %v599, 7
        %v785 = vsel %vm733, %v780, %v784
        %v786 = vrot.slane %v600, 7
        %v787 = vsel %vm733, %v781, %v786
        %v788 = vrot.slane %v601, 7
        %v789 = vrot.slane %v602, 7
        %v790 = vrot.slane %v603, 7
        %v791 = vrot.slane %v604, 7
        %v792 = vsel %vm733, %v788, %v791
        %v793 = vrot.slane %v605, 7
        %v794 = vsel %vm733, %v789, %v793
        %v795 = vrot.slane %v606, 7
        %v796 = vsel %vm733, %v790, %v795
        %v797 = vrot.slane %v607, 7
        %v798 = vrot.slane %v608, 7
        %v799 = vrot.slane %v609, 7
        %v800 = vrot.slane %v610, 7
        %v801 = vsel %vm733, %v797, %v800
        %v802 = vrot.slane %v611, 7
        %v803 = vsel %vm733, %v798, %v802
        %v804 = vrot.slane %v612, 7
        %v805 = vsel %vm733, %v799, %v804
        %v806 = vrot.slane %v613, 7
        %v807 = vrot.slane %v614, 7
        %v808 = vrot.slane %v615, 7
        %v809 = vrot.slane %v616, 7
        %v810 = vsel %vm733, %v806, %v809
        %v811 = vrot.slane %v617, 7
        %v812 = vsel %vm733, %v807, %v811
        %v813 = vrot.slane %v618, 7
        %v814 = vsel %vm733, %v808, %v813
        %v815 = vrot.slane %v619, 7
        %v816 = vrot.slane %v620, 7
        %v817 = vrot.slane %v621, 7
        %v818 = vrot.slane %v622, 7
        %v819 = vsel %vm733, %v815, %v818
        %v820 = vrot.slane %v623, 7
        %v821 = vsel %vm733, %v816, %v820
        %v822 = vrot.slane %v624, 7
        %v823 = vsel %vm733, %v817, %v822
        %v824 = vrot.slane %v625, 7
        %v825 = vrot.slane %v626, 7
        %v826 = vrot.slane %v627, 7
        %v827 = vrot.slane %v628, 7
        %v828 = vsel %vm733, %v824, %v827
        %v829 = vrot.slane %v629, 7
        %v830 = vsel %vm733, %v825, %v829
        %v831 = vrot.slane %v630, 7
        %v832 = vsel %vm733, %v826, %v831
        %v833 = vrot.slane %v631, 7
        %v834 = vrot.slane %v632, 7
        %v835 = vrot.slane %v633, 7
        %v836 = vrot.slane %v634, 7
        %v837 = vsel %vm733, %v833, %v836
        %v838 = vrot.slane %v635, 7
        %v839 = vsel %vm733, %v834, %v838
        %v840 = vrot.slane %v636, 7
        %v841 = vsel %vm733, %v835, %v840
        %v842 = vrot.slane %v637, 7
        %v843 = vrot.slane %v638, 7
        %v844 = vrot.slane %v639, 7
        %v845 = vrot.slane %v640, 7
        %v846 = vsel %vm733, %v842, %v845
        %v847 = vrot.slane %v641, 7
        %v848 = vsel %vm733, %v843, %v847
        %v849 = vrot.slane %v642, 7
        %v850 = vsel %vm733, %v844, %v849
        %v851 = vrot.slane %v643, 7
        %v852 = vrot.slane %v644, 7
        %v853 = vrot.slane %v645, 7
        %v854 = vrot.slane %v646, 7
        %v855 = vsel %vm733, %v851, %v854
        %v856 = vrot.slane %v647, 7
        %v857 = vsel %vm733, %v852, %v856
        %v858 = vrot.slane %v648, 7
        %v859 = vsel %vm733, %v853, %v858
        %s944 = scalar_lea.vmem [#allocation2], 48
        %945 = vst [vmem:[%s944] sm:$0xfe] %v734
        %946 = vst [vmem:[%s944 + $0x8] sm:$0xfe] %v735
        %947 = vst [vmem:[%s944 + $0x10] sm:$0xfe] %v736
        %948 = vst [vmem:[%s944 + $0x18] sm:$0x7f] %v738
        %949 = vst [vmem:[%s944 + $0x20] sm:$0x7f] %v740
        %950 = vst [vmem:[%s944 + $0x28] sm:$0x7f] %v742
        %951 = vst [vmem:[%s944 + $0x30] sm:$0xfe] %v743
        %952 = vst [vmem:[%s944 + $0x38] sm:$0xfe] %v744
        %953 = vst [vmem:[%s944 + $0x40] sm:$0xfe] %v745
        %954 = vst [vmem:[%s944 + $0x48] sm:$0x7f] %v747
        %955 = vst [vmem:[%s944 + $0x50] sm:$0x7f] %v749
        %956 = vst [vmem:[%s944 + $0x58] sm:$0x7f] %v751
        %957 = vst [vmem:[%s944 + $0x60] sm:$0xfe] %v752
        %958 = vst [vmem:[%s944 + $0x68] sm:$0xfe] %v753
        %959 = vst [vmem:[%s944 + $0x70] sm:$0xfe] %v754
        %960 = vst [vmem:[%s944 + $0x78] sm:$0x7f] %v756
        %961 = vst [vmem:[%s944 + $0x80] sm:$0x7f] %v758
        %962 = vst [vmem:[%s944 + $0x88] sm:$0x7f] %v760
        %963 = vst [vmem:[%s944 + $0x90] sm:$0xfe] %v761
        %964 = vst [vmem:[%s944 + $0x98] sm:$0xfe] %v762
        %965 = vst [vmem:[%s944 + $0xa0] sm:$0xfe] %v763
        %966 = vst [vmem:[%s944 + $0xa8] sm:$0x7f] %v765
        %967 = vst [vmem:[%s944 + $0xb0] sm:$0x7f] %v767
        %968 = vst [vmem:[%s944 + $0xb8] sm:$0x7f] %v769
        %969 = vst [vmem:[%s944 + $0xc0] sm:$0xfe] %v770
        %970 = vst [vmem:[%s944 + $0xc8] sm:$0xfe] %v771
        %971 = vst [vmem:[%s944 + $0xd0] sm:$0xfe] %v772
        %972 = vst [vmem:[%s944 + $0xd8] sm:$0x7f] %v774
        %973 = vst [vmem:[%s944 + $0xe0] sm:$0x7f] %v776
        %974 = vst [vmem:[%s944 + $0xe8] sm:$0x7f] %v778
        %975 = vst [vmem:[%s944 + $0xf0] sm:$0xfe] %v779
        %976 = vst [vmem:[%s944 + $0xf8] sm:$0xfe] %v780
        %977 = vst [vmem:[%s944 + $0x100] sm:$0xfe] %v781
        %978 = vst [vmem:[%s944 + $0x108] sm:$0x7f] %v783
        %979 = vst [vmem:[%s944 + $0x110] sm:$0x7f] %v785
        %980 = vst [vmem:[%s944 + $0x118] sm:$0x7f] %v787
        %981 = vst [vmem:[%s944 + $0x120] sm:$0xfe] %v788
        %982 = vst [vmem:[%s944 + $0x128] sm:$0xfe] %v789
        %983 = vst [vmem:[%s944 + $0x130] sm:$0xfe] %v790
        %984 = vst [vmem:[%s944 + $0x138] sm:$0x7f] %v792
        %985 = vst [vmem:[%s944 + $0x140] sm:$0x7f] %v794
        %986 = vst [vmem:[%s944 + $0x148] sm:$0x7f] %v796
        %987 = vst [vmem:[%s944 + $0x150] sm:$0xfe] %v797
        %988 = vst [vmem:[%s944 + $0x158] sm:$0xfe] %v798
        %989 = vst [vmem:[%s944 + $0x160] sm:$0xfe] %v799
        %990 = vst [vmem:[%s944 + $0x168] sm:$0x7f] %v801
        %991 = vst [vmem:[%s944 + $0x170] sm:$0x7f] %v803
        %992 = vst [vmem:[%s944 + $0x178] sm:$0x7f] %v805
        %993 = vst [vmem:[%s944 + $0x180] sm:$0xfe] %v806
        %994 = vst [vmem:[%s944 + $0x188] sm:$0xfe] %v807
        %995 = vst [vmem:[%s944 + $0x190] sm:$0xfe] %v808
        %996 = vst [vmem:[%s944 + $0x198] sm:$0x7f] %v810
        %997 = vst [vmem:[%s944 + $0x1a0] sm:$0x7f] %v812
        %998 = vst [vmem:[%s944 + $0x1a8] sm:$0x7f] %v814
        %999 = vst [vmem:[%s944 + $0x1b0] sm:$0xfe] %v815
        %1000 = vst [vmem:[%s944 + $0x1b8] sm:$0xfe] %v816
        %1001 = vst [vmem:[%s944 + $0x1c0] sm:$0xfe] %v817
        %1002 = vst [vmem:[%s944 + $0x1c8] sm:$0x7f] %v819
        %1003 = vst [vmem:[%s944 + $0x1d0] sm:$0x7f] %v821
        %1004 = vst [vmem:[%s944 + $0x1d8] sm:$0x7f] %v823
        %1005 = vst [vmem:[%s944 + $0x1e0] sm:$0xfe] %v824
        %1006 = vst [vmem:[%s944 + $0x1e8] sm:$0xfe] %v825
        %1007 = vst [vmem:[%s944 + $0x1f0] sm:$0xfe] %v826
        %1008 = vst [vmem:[%s944 + $0x1f8] sm:$0x7f] %v828
        %1009 = vst [vmem:[%s944 + $0x200] sm:$0x7f] %v830
        %1010 = vst [vmem:[%s944 + $0x208] sm:$0x7f] %v832
        %1011 = vst [vmem:[%s944 + $0x210] sm:$0xfe] %v833
        %1012 = vst [vmem:[%s944 + $0x218] sm:$0xfe] %v834
        %1013 = vst [vmem:[%s944 + $0x220] sm:$0xfe] %v835
        %1014 = vst [vmem:[%s944 + $0x228] sm:$0x7f] %v837
        %1015 = vst [vmem:[%s944 + $0x230] sm:$0x7f] %v839
        %1016 = vst [vmem:[%s944 + $0x238] sm:$0x7f] %v841
        %1017 = vst [vmem:[%s944 + $0x240] sm:$0xfe] %v842
        %1018 = vst [vmem:[%s944 + $0x248] sm:$0xfe] %v843
        %1019 = vst [vmem:[%s944 + $0x250] sm:$0xfe] %v844
        %1020 = vst [vmem:[%s944 + $0x258] sm:$0x7f] %v846
        %1021 = vst [vmem:[%s944 + $0x260] sm:$0x7f] %v848
        %1022 = vst [vmem:[%s944 + $0x268] sm:$0x7f] %v850
        %1023 = vst [vmem:[%s944 + $0x270] sm:$0xfe] %v851
        %1024 = vst [vmem:[%s944 + $0x278] sm:$0xfe] %v852
        %1025 = vst [vmem:[%s944 + $0x280] sm:$0xfe] %v853
        %1026 = vst [vmem:[%s944 + $0x288] sm:$0x7f] %v855
        %1027 = vst [vmem:[%s944 + $0x290] sm:$0x7f] %v857
        %1028 = vst [vmem:[%s944 + $0x298] sm:$0x7f] %v859
        %v1029 = vld [vmem:[%s422] sm:$0xff]
        %v1030 = vld [vmem:[%s422 + $0x8] sm:$0xff]
        %v1031 = vld [vmem:[%s422 + $0x10] sm:$0xff]
        %v1032 = vld [vmem:[%s422 + $0x18] sm:$0x1]
        %v1033 = vld [vmem:[%s422 + $0x20] sm:$0x1]
        %v1034 = vld [vmem:[%s422 + $0x28] sm:$0x1]
        %v1035 = vld [vmem:[#allocation2] sm:$0xff]
        %v1036 = vld [vmem:[#allocation2 + $0x8] sm:$0xff]
        %v1037 = vld [vmem:[#allocation2 + $0x10] sm:$0xff]
        %v1038 = vld [vmem:[#allocation2 + $0x18] sm:$0x3f]
        %v1039 = vld [vmem:[#allocation2 + $0x20] sm:$0x3f]
        %v1040 = vld [vmem:[#allocation2 + $0x28] sm:$0x3f]
        %v1041 = vld [vmem:[#allocation2 + $0x30] sm:$0xff]
        %v1042 = vld [vmem:[#allocation2 + $0x38] sm:$0xff]
        %v1043 = vld [vmem:[#allocation2 + $0x40] sm:$0xff]
        %v1044 = vld [vmem:[#allocation2 + $0x48] sm:$0x3f]
        %v1045 = vld [vmem:[#allocation2 + $0x50] sm:$0x3f]
        %v1046 = vld [vmem:[#allocation2 + $0x58] sm:$0x3f]
        %v1047 = vld [vmem:[#allocation2 + $0x60] sm:$0xff]
        %v1048 = vld [vmem:[#allocation2 + $0x68] sm:$0xff]
        %v1049 = vld [vmem:[#allocation2 + $0x70] sm:$0xff]
        %v1050 = vld [vmem:[#allocation2 + $0x78] sm:$0x3f]
        %v1051 = vld [vmem:[#allocation2 + $0x80] sm:$0x3f]
        %v1052 = vld [vmem:[#allocation2 + $0x88] sm:$0x3f]
        %v1053 = vld [vmem:[#allocation2 + $0x90] sm:$0xff]
        %v1054 = vld [vmem:[#allocation2 + $0x98] sm:$0xff]
        %v1055 = vld [vmem:[#allocation2 + $0xa0] sm:$0xff]
        %v1056 = vld [vmem:[#allocation2 + $0xa8] sm:$0x3f]
        %v1057 = vld [vmem:[#allocation2 + $0xb0] sm:$0x3f]
        %v1058 = vld [vmem:[#allocation2 + $0xb8] sm:$0x3f]
        %v1059 = vld [vmem:[#allocation2 + $0xc0] sm:$0xff]
        %v1060 = vld [vmem:[#allocation2 + $0xc8] sm:$0xff]
        %v1061 = vld [vmem:[#allocation2 + $0xd0] sm:$0xff]
        %v1062 = vld [vmem:[#allocation2 + $0xd8] sm:$0x3f]
        %v1063 = vld [vmem:[#allocation2 + $0xe0] sm:$0x3f]
        %v1064 = vld [vmem:[#allocation2 + $0xe8] sm:$0x3f]
        %v1065 = vld [vmem:[#allocation2 + $0xf0] sm:$0xff]
        %v1066 = vld [vmem:[#allocation2 + $0xf8] sm:$0xff]
        %v1067 = vld [vmem:[#allocation2 + $0x100] sm:$0xff]
        %v1068 = vld [vmem:[#allocation2 + $0x108] sm:$0x3f]
        %v1069 = vld [vmem:[#allocation2 + $0x110] sm:$0x3f]
        %v1070 = vld [vmem:[#allocation2 + $0x118] sm:$0x3f]
        %v1071 = vld [vmem:[#allocation2 + $0x120] sm:$0xff]
        %v1072 = vld [vmem:[#allocation2 + $0x128] sm:$0xff]
        %v1073 = vld [vmem:[#allocation2 + $0x130] sm:$0xff]
        %v1074 = vld [vmem:[#allocation2 + $0x138] sm:$0x3f]
        %v1075 = vld [vmem:[#allocation2 + $0x140] sm:$0x3f]
        %v1076 = vld [vmem:[#allocation2 + $0x148] sm:$0x3f]
        %v1077 = vld [vmem:[#allocation2 + $0x150] sm:$0xff]
        %v1078 = vld [vmem:[#allocation2 + $0x158] sm:$0xff]
        %v1079 = vld [vmem:[#allocation2 + $0x160] sm:$0xff]
        %v1080 = vld [vmem:[#allocation2 + $0x168] sm:$0x3f]
        %v1081 = vld [vmem:[#allocation2 + $0x170] sm:$0x3f]
        %v1082 = vld [vmem:[#allocation2 + $0x178] sm:$0x3f]
        %v1083 = vld [vmem:[#allocation2 + $0x180] sm:$0xff]
        %v1084 = vld [vmem:[#allocation2 + $0x188] sm:$0xff]
        %v1085 = vld [vmem:[#allocation2 + $0x190] sm:$0xff]
        %v1086 = vld [vmem:[#allocation2 + $0x198] sm:$0x3f]
        %v1087 = vld [vmem:[#allocation2 + $0x1a0] sm:$0x3f]
        %v1088 = vld [vmem:[#allocation2 + $0x1a8] sm:$0x3f]
        %v1089 = vld [vmem:[#allocation2 + $0x1b0] sm:$0xff]
        %v1090 = vld [vmem:[#allocation2 + $0x1b8] sm:$0xff]
        %v1091 = vld [vmem:[#allocation2 + $0x1c0] sm:$0xff]
        %v1092 = vld [vmem:[#allocation2 + $0x1c8] sm:$0x3f]
        %v1093 = vld [vmem:[#allocation2 + $0x1d0] sm:$0x3f]
        %v1094 = vld [vmem:[#allocation2 + $0x1d8] sm:$0x3f]
        %v1095 = vld [vmem:[#allocation2 + $0x1e0] sm:$0xff]
        %v1096 = vld [vmem:[#allocation2 + $0x1e8] sm:$0xff]
        %v1097 = vld [vmem:[#allocation2 + $0x1f0] sm:$0xff]
        %v1098 = vld [vmem:[#allocation2 + $0x1f8] sm:$0x3f]
        %v1099 = vld [vmem:[#allocation2 + $0x200] sm:$0x3f]
        %v1100 = vld [vmem:[#allocation2 + $0x208] sm:$0x3f]
        %v1101 = vld [vmem:[#allocation2 + $0x210] sm:$0xff]
        %v1102 = vld [vmem:[#allocation2 + $0x218] sm:$0xff]
        %v1103 = vld [vmem:[#allocation2 + $0x220] sm:$0xff]
        %v1104 = vld [vmem:[#allocation2 + $0x228] sm:$0x3f]
        %v1105 = vld [vmem:[#allocation2 + $0x230] sm:$0x3f]
        %v1106 = vld [vmem:[#allocation2 + $0x238] sm:$0x3f]
        %v1107 = vld [vmem:[#allocation2 + $0x240] sm:$0xff]
        %v1108 = vld [vmem:[#allocation2 + $0x248] sm:$0xff]
        %v1109 = vld [vmem:[#allocation2 + $0x250] sm:$0xff]
        %v1110 = vld [vmem:[#allocation2 + $0x258] sm:$0x3f]
        %v1111 = vld [vmem:[#allocation2 + $0x260] sm:$0x3f]
        %v1112 = vld [vmem:[#allocation2 + $0x268] sm:$0x3f]
        %v1113 = vld [vmem:[#allocation2 + $0x270] sm:$0xff]
        %v1114 = vld [vmem:[#allocation2 + $0x278] sm:$0xff]
        %v1115 = vld [vmem:[#allocation2 + $0x280] sm:$0xff]
        %v1116 = vld [vmem:[#allocation2 + $0x288] sm:$0x3f]
        %v1117 = vld [vmem:[#allocation2 + $0x290] sm:$0x3f]
        %v1118 = vld [vmem:[#allocation2 + $0x298] sm:$0x3f]
        %v1119 = vld [vmem:[#allocation2 + $0x2a0] sm:$0xff]
        %v1120 = vld [vmem:[#allocation2 + $0x2a8] sm:$0xff]
        %v1121 = vld [vmem:[#allocation2 + $0x2b0] sm:$0xff]
        %v1122 = vld [vmem:[#allocation2 + $0x2b8] sm:$0x3f]
        %v1123 = vld [vmem:[#allocation2 + $0x2c0] sm:$0x3f]
        %v1124 = vld [vmem:[#allocation2 + $0x2c8] sm:$0x3f]
        %v1125 = vld [vmem:[#allocation2 + $0x2d0] sm:$0xff]
        %v1126 = vld [vmem:[#allocation2 + $0x2d8] sm:$0xff]
        %v1127 = vld [vmem:[#allocation2 + $0x2e0] sm:$0xff]
        %v1128 = vld [vmem:[#allocation2 + $0x2e8] sm:$0x3f]
        %v1129 = vld [vmem:[#allocation2 + $0x2f0] sm:$0x3f]
        %v1130 = vld [vmem:[#allocation2 + $0x2f8] sm:$0x3f]
        %v1131 = vperm.slane %v1029, 0
        %v1132 = vperm.slane %v1030, 0
        %v1133 = vperm.slane %v1031, 0
        %v1134 = vmul.f32 %v1035, %v1131
        %v1135 = vmul.f32 %v1036, %v1132
        %v1136 = vmul.f32 %v1037, %v1133
        %v1137 = vmul.f32 %v1038, %v1131
        %v1138 = vmul.f32 %v1039, %v1132
        %v1139 = vmul.f32 %v1040, %v1133
        %v1140 = vmul.f32 %v1041, %v1131
        %v1141 = vmul.f32 %v1042, %v1132
        %v1142 = vmul.f32 %v1043, %v1133
        %v1143 = vmul.f32 %v1044, %v1131
        %v1144 = vmul.f32 %v1045, %v1132
        %v1145 = vmul.f32 %v1046, %v1133
        %v1146 = vmul.f32 %v1047, %v1131
        %v1147 = vmul.f32 %v1048, %v1132
        %v1148 = vmul.f32 %v1049, %v1133
        %v1149 = vmul.f32 %v1050, %v1131
        %v1150 = vmul.f32 %v1051, %v1132
        %v1151 = vmul.f32 %v1052, %v1133
        %v1152 = vmul.f32 %v1053, %v1131
        %v1153 = vmul.f32 %v1054, %v1132
        %v1154 = vmul.f32 %v1055, %v1133
        %v1155 = vmul.f32 %v1056, %v1131
        %v1156 = vmul.f32 %v1057, %v1132
        %v1157 = vmul.f32 %v1058, %v1133
        %v1158 = vmul.f32 %v1059, %v1131
        %v1159 = vmul.f32 %v1060, %v1132
        %v1160 = vmul.f32 %v1061, %v1133
        %v1161 = vmul.f32 %v1062, %v1131
        %v1162 = vmul.f32 %v1063, %v1132
        %v1163 = vmul.f32 %v1064, %v1133
        %v1164 = vmul.f32 %v1065, %v1131
        %v1165 = vmul.f32 %v1066, %v1132
        %v1166 = vmul.f32 %v1067, %v1133
        %v1167 = vmul.f32 %v1068, %v1131
        %v1168 = vmul.f32 %v1069, %v1132
        %v1169 = vmul.f32 %v1070, %v1133
        %v1170 = vmul.f32 %v1071, %v1131
        %v1171 = vmul.f32 %v1072, %v1132
        %v1172 = vmul.f32 %v1073, %v1133
        %v1173 = vmul.f32 %v1074, %v1131
        %v1174 = vmul.f32 %v1075, %v1132
        %v1175 = vmul.f32 %v1076, %v1133
        %v1176 = vmul.f32 %v1077, %v1131
        %v1177 = vmul.f32 %v1078, %v1132
        %v1178 = vmul.f32 %v1079, %v1133
        %v1179 = vmul.f32 %v1080, %v1131
        %v1180 = vmul.f32 %v1081, %v1132
        %v1181 = vmul.f32 %v1082, %v1133
        %v1182 = vmul.f32 %v1083, %v1131
        %v1183 = vmul.f32 %v1084, %v1132
        %v1184 = vmul.f32 %v1085, %v1133
        %v1185 = vmul.f32 %v1086, %v1131
        %v1186 = vmul.f32 %v1087, %v1132
        %v1187 = vmul.f32 %v1088, %v1133
        %v1188 = vmul.f32 %v1089, %v1131
        %v1189 = vmul.f32 %v1090, %v1132
        %v1190 = vmul.f32 %v1091, %v1133
        %v1191 = vmul.f32 %v1092, %v1131
        %v1192 = vmul.f32 %v1093, %v1132
        %v1193 = vmul.f32 %v1094, %v1133
        %v1194 = vmul.f32 %v1095, %v1131
        %v1195 = vmul.f32 %v1096, %v1132
        %v1196 = vmul.f32 %v1097, %v1133
        %v1197 = vmul.f32 %v1098, %v1131
        %v1198 = vmul.f32 %v1099, %v1132
        %v1199 = vmul.f32 %v1100, %v1133
        %v1200 = vmul.f32 %v1101, %v1131
        %v1201 = vmul.f32 %v1102, %v1132
        %v1202 = vmul.f32 %v1103, %v1133
        %v1203 = vmul.f32 %v1104, %v1131
        %v1204 = vmul.f32 %v1105, %v1132
        %v1205 = vmul.f32 %v1106, %v1133
        %v1206 = vmul.f32 %v1107, %v1131
        %v1207 = vmul.f32 %v1108, %v1132
        %v1208 = vmul.f32 %v1109, %v1133
        %v1209 = vmul.f32 %v1110, %v1131
        %v1210 = vmul.f32 %v1111, %v1132
        %v1211 = vmul.f32 %v1112, %v1133
        %v1212 = vmul.f32 %v1113, %v1131
        %v1213 = vmul.f32 %v1114, %v1132
        %v1214 = vmul.f32 %v1115, %v1133
        %v1215 = vmul.f32 %v1116, %v1131
        %v1216 = vmul.f32 %v1117, %v1132
        %v1217 = vmul.f32 %v1118, %v1133
        %v1218 = vperm.slane %v1029, 3
        %v1219 = vperm.slane %v1030, 3
        %v1220 = vperm.slane %v1031, 3
        %v1221 = vmul.f32 %v1041, %v1218
        %v1222 = vmul.f32 %v1042, %v1219
        %v1223 = vmul.f32 %v1043, %v1220
        %v1224 = vmul.f32 %v1044, %v1218
        %v1225 = vmul.f32 %v1045, %v1219
        %v1226 = vmul.f32 %v1046, %v1220
        %v1227 = vmul.f32 %v1047, %v1218
        %v1228 = vmul.f32 %v1048, %v1219
        %v1229 = vmul.f32 %v1049, %v1220
        %v1230 = vmul.f32 %v1050, %v1218
        %v1231 = vmul.f32 %v1051, %v1219
        %v1232 = vmul.f32 %v1052, %v1220
        %v1233 = vmul.f32 %v1053, %v1218
        %v1234 = vmul.f32 %v1054, %v1219
        %v1235 = vmul.f32 %v1055, %v1220
        %v1236 = vmul.f32 %v1056, %v1218
        %v1237 = vmul.f32 %v1057, %v1219
        %v1238 = vmul.f32 %v1058, %v1220
        %v1239 = vmul.f32 %v1059, %v1218
        %v1240 = vmul.f32 %v1060, %v1219
        %v1241 = vmul.f32 %v1061, %v1220
        %v1242 = vmul.f32 %v1062, %v1218
        %v1243 = vmul.f32 %v1063, %v1219
        %v1244 = vmul.f32 %v1064, %v1220
        %v1245 = vmul.f32 %v1065, %v1218
        %v1246 = vmul.f32 %v1066, %v1219
        %v1247 = vmul.f32 %v1067, %v1220
        %v1248 = vmul.f32 %v1068, %v1218
        %v1249 = vmul.f32 %v1069, %v1219
        %v1250 = vmul.f32 %v1070, %v1220
        %v1251 = vmul.f32 %v1071, %v1218
        %v1252 = vmul.f32 %v1072, %v1219
        %v1253 = vmul.f32 %v1073, %v1220
        %v1254 = vmul.f32 %v1074, %v1218
        %v1255 = vmul.f32 %v1075, %v1219
        %v1256 = vmul.f32 %v1076, %v1220
        %v1257 = vmul.f32 %v1077, %v1218
        %v1258 = vmul.f32 %v1078, %v1219
        %v1259 = vmul.f32 %v1079, %v1220
        %v1260 = vmul.f32 %v1080, %v1218
        %v1261 = vmul.f32 %v1081, %v1219
        %v1262 = vmul.f32 %v1082, %v1220
        %v1263 = vmul.f32 %v1083, %v1218
        %v1264 = vmul.f32 %v1084, %v1219
        %v1265 = vmul.f32 %v1085, %v1220
        %v1266 = vmul.f32 %v1086, %v1218
        %v1267 = vmul.f32 %v1087, %v1219
        %v1268 = vmul.f32 %v1088, %v1220
        %v1269 = vmul.f32 %v1089, %v1218
        %v1270 = vmul.f32 %v1090, %v1219
        %v1271 = vmul.f32 %v1091, %v1220
        %v1272 = vmul.f32 %v1092, %v1218
        %v1273 = vmul.f32 %v1093, %v1219
        %v1274 = vmul.f32 %v1094, %v1220
        %v1275 = vmul.f32 %v1095, %v1218
        %v1276 = vmul.f32 %v1096, %v1219
        %v1277 = vmul.f32 %v1097, %v1220
        %v1278 = vmul.f32 %v1098, %v1218
        %v1279 = vmul.f32 %v1099, %v1219
        %v1280 = vmul.f32 %v1100, %v1220
        %v1281 = vmul.f32 %v1101, %v1218
        %v1282 = vmul.f32 %v1102, %v1219
        %v1283 = vmul.f32 %v1103, %v1220
        %v1284 = vmul.f32 %v1104, %v1218
        %v1285 = vmul.f32 %v1105, %v1219
        %v1286 = vmul.f32 %v1106, %v1220
        %v1287 = vmul.f32 %v1107, %v1218
        %v1288 = vmul.f32 %v1108, %v1219
        %v1289 = vmul.f32 %v1109, %v1220
        %v1290 = vmul.f32 %v1110, %v1218
        %v1291 = vmul.f32 %v1111, %v1219
        %v1292 = vmul.f32 %v1112, %v1220
        %v1293 = vmul.f32 %v1113, %v1218
        %v1294 = vmul.f32 %v1114, %v1219
        %v1295 = vmul.f32 %v1115, %v1220
        %v1296 = vmul.f32 %v1116, %v1218
        %v1297 = vmul.f32 %v1117, %v1219
        %v1298 = vmul.f32 %v1118, %v1220
        %v1299 = vmul.f32 %v1119, %v1218
        %v1300 = vmul.f32 %v1120, %v1219
        %v1301 = vmul.f32 %v1121, %v1220
        %v1302 = vmul.f32 %v1122, %v1218
        %v1303 = vmul.f32 %v1123, %v1219
        %v1304 = vmul.f32 %v1124, %v1220
        %v1305 = vadd.f32 %v1134, %v1221
        %v1306 = vadd.f32 %v1135, %v1222
        %v1307 = vadd.f32 %v1136, %v1223
        %v1308 = vadd.f32 %v1137, %v1224
        %v1309 = vadd.f32 %v1138, %v1225
        %v1310 = vadd.f32 %v1139, %v1226
        %v1311 = vadd.f32 %v1140, %v1227
        %v1312 = vadd.f32 %v1141, %v1228
        %v1313 = vadd.f32 %v1142, %v1229
        %v1314 = vadd.f32 %v1143, %v1230
        %v1315 = vadd.f32 %v1144, %v1231
        %v1316 = vadd.f32 %v1145, %v1232
        %v1317 = vadd.f32 %v1146, %v1233
        %v1318 = vadd.f32 %v1147, %v1234
        %v1319 = vadd.f32 %v1148, %v1235
        %v1320 = vadd.f32 %v1149, %v1236
        %v1321 = vadd.f32 %v1150, %v1237
        %v1322 = vadd.f32 %v1151, %v1238
        %v1323 = vadd.f32 %v1152, %v1239
        %v1324 = vadd.f32 %v1153, %v1240
        %v1325 = vadd.f32 %v1154, %v1241
        %v1326 = vadd.f32 %v1155, %v1242
        %v1327 = vadd.f32 %v1156, %v1243
        %v1328 = vadd.f32 %v1157, %v1244
        %v1329 = vadd.f32 %v1158, %v1245
        %v1330 = vadd.f32 %v1159, %v1246
        %v1331 = vadd.f32 %v1160, %v1247
        %v1332 = vadd.f32 %v1161, %v1248
        %v1333 = vadd.f32 %v1162, %v1249
        %v1334 = vadd.f32 %v1163, %v1250
        %v1335 = vadd.f32 %v1164, %v1251
        %v1336 = vadd.f32 %v1165, %v1252
        %v1337 = vadd.f32 %v1166, %v1253
        %v1338 = vadd.f32 %v1167, %v1254
        %v1339 = vadd.f32 %v1168, %v1255
        %v1340 = vadd.f32 %v1169, %v1256
        %v1341 = vadd.f32 %v1170, %v1257
        %v1342 = vadd.f32 %v1171, %v1258
        %v1343 = vadd.f32 %v1172, %v1259
        %v1344 = vadd.f32 %v1173, %v1260
        %v1345 = vadd.f32 %v1174, %v1261
        %v1346 = vadd.f32 %v1175, %v1262
        %v1347 = vadd.f32 %v1176, %v1263
        %v1348 = vadd.f32 %v1177, %v1264
        %v1349 = vadd.f32 %v1178, %v1265
        %v1350 = vadd.f32 %v1179, %v1266
        %v1351 = vadd.f32 %v1180, %v1267
        %v1352 = vadd.f32 %v1181, %v1268
        %v1353 = vadd.f32 %v1182, %v1269
        %v1354 = vadd.f32 %v1183, %v1270
        %v1355 = vadd.f32 %v1184, %v1271
        %v1356 = vadd.f32 %v1185, %v1272
        %v1357 = vadd.f32 %v1186, %v1273
        %v1358 = vadd.f32 %v1187, %v1274
        %v1359 = vadd.f32 %v1188, %v1275
        %v1360 = vadd.f32 %v1189, %v1276
        %v1361 = vadd.f32 %v1190, %v1277
        %v1362 = vadd.f32 %v1191, %v1278
        %v1363 = vadd.f32 %v1192, %v1279
        %v1364 = vadd.f32 %v1193, %v1280
        %v1365 = vadd.f32 %v1194, %v1281
        %v1366 = vadd.f32 %v1195, %v1282
        %v1367 = vadd.f32 %v1196, %v1283
        %v1368 = vadd.f32 %v1197, %v1284
        %v1369 = vadd.f32 %v1198, %v1285
        %v1370 = vadd.f32 %v1199, %v1286
        %v1371 = vadd.f32 %v1200, %v1287
        %v1372 = vadd.f32 %v1201, %v1288
        %v1373 = vadd.f32 %v1202, %v1289
        %v1374 = vadd.f32 %v1203, %v1290
        %v1375 = vadd.f32 %v1204, %v1291
        %v1376 = vadd.f32 %v1205, %v1292
        %v1377 = vadd.f32 %v1206, %v1293
        %v1378 = vadd.f32 %v1207, %v1294
        %v1379 = vadd.f32 %v1208, %v1295
        %v1380 = vadd.f32 %v1209, %v1296
        %v1381 = vadd.f32 %v1210, %v1297
        %v1382 = vadd.f32 %v1211, %v1298
        %v1383 = vadd.f32 %v1212, %v1299
        %v1384 = vadd.f32 %v1213, %v1300
        %v1385 = vadd.f32 %v1214, %v1301
        %v1386 = vadd.f32 %v1215, %v1302
        %v1387 = vadd.f32 %v1216, %v1303
        %v1388 = vadd.f32 %v1217, %v1304
        %v1389 = vperm.slane %v1029, 6
        %v1390 = vperm.slane %v1030, 6
        %v1391 = vperm.slane %v1031, 6
        %v1392 = vmul.f32 %v1047, %v1389
        %v1393 = vmul.f32 %v1048, %v1390
        %v1394 = vmul.f32 %v1049, %v1391
        %v1395 = vmul.f32 %v1050, %v1389
        %v1396 = vmul.f32 %v1051, %v1390
        %v1397 = vmul.f32 %v1052, %v1391
        %v1398 = vmul.f32 %v1053, %v1389
        %v1399 = vmul.f32 %v1054, %v1390
        %v1400 = vmul.f32 %v1055, %v1391
        %v1401 = vmul.f32 %v1056, %v1389
        %v1402 = vmul.f32 %v1057, %v1390
        %v1403 = vmul.f32 %v1058, %v1391
        %v1404 = vmul.f32 %v1059, %v1389
        %v1405 = vmul.f32 %v1060, %v1390
        %v1406 = vmul.f32 %v1061, %v1391
        %v1407 = vmul.f32 %v1062, %v1389
        %v1408 = vmul.f32 %v1063, %v1390
        %v1409 = vmul.f32 %v1064, %v1391
        %v1410 = vmul.f32 %v1065, %v1389
        %v1411 = vmul.f32 %v1066, %v1390
        %v1412 = vmul.f32 %v1067, %v1391
        %v1413 = vmul.f32 %v1068, %v1389
        %v1414 = vmul.f32 %v1069, %v1390
        %v1415 = vmul.f32 %v1070, %v1391
        %v1416 = vmul.f32 %v1071, %v1389
        %v1417 = vmul.f32 %v1072, %v1390
        %v1418 = vmul.f32 %v1073, %v1391
        %v1419 = vmul.f32 %v1074, %v1389
        %v1420 = vmul.f32 %v1075, %v1390
        %v1421 = vmul.f32 %v1076, %v1391
        %v1422 = vmul.f32 %v1077, %v1389
        %v1423 = vmul.f32 %v1078, %v1390
        %v1424 = vmul.f32 %v1079, %v1391
        %v1425 = vmul.f32 %v1080, %v1389
        %v1426 = vmul.f32 %v1081, %v1390
        %v1427 = vmul.f32 %v1082, %v1391
        %v1428 = vmul.f32 %v1083, %v1389
        %v1429 = vmul.f32 %v1084, %v1390
        %v1430 = vmul.f32 %v1085, %v1391
        %v1431 = vmul.f32 %v1086, %v1389
        %v1432 = vmul.f32 %v1087, %v1390
        %v1433 = vmul.f32 %v1088, %v1391
        %v1434 = vmul.f32 %v1089, %v1389
        %v1435 = vmul.f32 %v1090, %v1390
        %v1436 = vmul.f32 %v1091, %v1391
        %v1437 = vmul.f32 %v1092, %v1389
        %v1438 = vmul.f32 %v1093, %v1390
        %v1439 = vmul.f32 %v1094, %v1391
        %v1440 = vmul.f32 %v1095, %v1389
        %v1441 = vmul.f32 %v1096, %v1390
        %v1442 = vmul.f32 %v1097, %v1391
        %v1443 = vmul.f32 %v1098, %v1389
        %v1444 = vmul.f32 %v1099, %v1390
        %v1445 = vmul.f32 %v1100, %v1391
        %v1446 = vmul.f32 %v1101, %v1389
        %v1447 = vmul.f32 %v1102, %v1390
        %v1448 = vmul.f32 %v1103, %v1391
        %v1449 = vmul.f32 %v1104, %v1389
        %v1450 = vmul.f32 %v1105, %v1390
        %v1451 = vmul.f32 %v1106, %v1391
        %v1452 = vmul.f32 %v1107, %v1389
        %v1453 = vmul.f32 %v1108, %v1390
        %v1454 = vmul.f32 %v1109, %v1391
        %v1455 = vmul.f32 %v1110, %v1389
        %v1456 = vmul.f32 %v1111, %v1390
        %v1457 = vmul.f32 %v1112, %v1391
        %v1458 = vmul.f32 %v1113, %v1389
        %v1459 = vmul.f32 %v1114, %v1390
        %v1460 = vmul.f32 %v1115, %v1391
        %v1461 = vmul.f32 %v1116, %v1389
        %v1462 = vmul.f32 %v1117, %v1390
        %v1463 = vmul.f32 %v1118, %v1391
        %v1464 = vmul.f32 %v1119, %v1389
        %v1465 = vmul.f32 %v1120, %v1390
        %v1466 = vmul.f32 %v1121, %v1391
        %v1467 = vmul.f32 %v1122, %v1389
        %v1468 = vmul.f32 %v1123, %v1390
        %v1469 = vmul.f32 %v1124, %v1391
        %v1470 = vmul.f32 %v1125, %v1389
        %v1471 = vmul.f32 %v1126, %v1390
        %v1472 = vmul.f32 %v1127, %v1391
        %v1473 = vmul.f32 %v1128, %v1389
        %v1474 = vmul.f32 %v1129, %v1390
        %v1475 = vmul.f32 %v1130, %v1391
        %v1476 = vadd.f32 %v1305, %v1392
        %v1477 = vadd.f32 %v1306, %v1393
        %v1478 = vadd.f32 %v1307, %v1394
        %v1479 = vadd.f32 %v1308, %v1395
        %v1480 = vadd.f32 %v1309, %v1396
        %v1481 = vadd.f32 %v1310, %v1397
        %v1482 = vadd.f32 %v1311, %v1398
        %v1483 = vadd.f32 %v1312, %v1399
        %v1484 = vadd.f32 %v1313, %v1400
        %v1485 = vadd.f32 %v1314, %v1401
        %v1486 = vadd.f32 %v1315, %v1402
        %v1487 = vadd.f32 %v1316, %v1403
        %v1488 = vadd.f32 %v1317, %v1404
        %v1489 = vadd.f32 %v1318, %v1405
        %v1490 = vadd.f32 %v1319, %v1406
        %v1491 = vadd.f32 %v1320, %v1407
        %v1492 = vadd.f32 %v1321, %v1408
        %v1493 = vadd.f32 %v1322, %v1409
        %v1494 = vadd.f32 %v1323, %v1410
        %v1495 = vadd.f32 %v1324, %v1411
        %v1496 = vadd.f32 %v1325, %v1412
        %v1497 = vadd.f32 %v1326, %v1413
        %v1498 = vadd.f32 %v1327, %v1414
        %v1499 = vadd.f32 %v1328, %v1415
        %v1500 = vadd.f32 %v1329, %v1416
        %v1501 = vadd.f32 %v1330, %v1417
        %v1502 = vadd.f32 %v1331, %v1418
        %v1503 = vadd.f32 %v1332, %v1419
        %v1504 = vadd.f32 %v1333, %v1420
        %v1505 = vadd.f32 %v1334, %v1421
        %v1506 = vadd.f32 %v1335, %v1422
        %v1507 = vadd.f32 %v1336, %v1423
        %v1508 = vadd.f32 %v1337, %v1424
        %v1509 = vadd.f32 %v1338, %v1425
        %v1510 = vadd.f32 %v1339, %v1426
        %v1511 = vadd.f32 %v1340, %v1427
        %v1512 = vadd.f32 %v1341, %v1428
        %v1513 = vadd.f32 %v1342, %v1429
        %v1514 = vadd.f32 %v1343, %v1430
        %v1515 = vadd.f32 %v1344, %v1431
        %v1516 = vadd.f32 %v1345, %v1432
        %v1517 = vadd.f32 %v1346, %v1433
        %v1518 = vadd.f32 %v1347, %v1434
        %v1519 = vadd.f32 %v1348, %v1435
        %v1520 = vadd.f32 %v1349, %v1436
        %v1521 = vadd.f32 %v1350, %v1437
        %v1522 = vadd.f32 %v1351, %v1438
        %v1523 = vadd.f32 %v1352, %v1439
        %v1524 = vadd.f32 %v1353, %v1440
        %v1525 = vadd.f32 %v1354, %v1441
        %v1526 = vadd.f32 %v1355, %v1442
        %v1527 = vadd.f32 %v1356, %v1443
        %v1528 = vadd.f32 %v1357, %v1444
        %v1529 = vadd.f32 %v1358, %v1445
        %v1530 = vadd.f32 %v1359, %v1446
        %v1531 = vadd.f32 %v1360, %v1447
        %v1532 = vadd.f32 %v1361, %v1448
        %v1533 = vadd.f32 %v1362, %v1449
        %v1534 = vadd.f32 %v1363, %v1450
        %v1535 = vadd.f32 %v1364, %v1451
        %v1536 = vadd.f32 %v1365, %v1452
        %v1537 = vadd.f32 %v1366, %v1453
        %v1538 = vadd.f32 %v1367, %v1454
        %v1539 = vadd.f32 %v1368, %v1455
        %v1540 = vadd.f32 %v1369, %v1456
        %v1541 = vadd.f32 %v1370, %v1457
        %v1542 = vadd.f32 %v1371, %v1458
        %v1543 = vadd.f32 %v1372, %v1459
        %v1544 = vadd.f32 %v1373, %v1460
        %v1545 = vadd.f32 %v1374, %v1461
        %v1546 = vadd.f32 %v1375, %v1462
        %v1547 = vadd.f32 %v1376, %v1463
        %v1548 = vadd.f32 %v1377, %v1464
        %v1549 = vadd.f32 %v1378, %v1465
        %v1550 = vadd.f32 %v1379, %v1466
        %v1551 = vadd.f32 %v1380, %v1467
        %v1552 = vadd.f32 %v1381, %v1468
        %v1553 = vadd.f32 %v1382, %v1469
        %v1554 = vadd.f32 %v1383, %v1470
        %v1555 = vadd.f32 %v1384, %v1471
        %v1556 = vadd.f32 %v1385, %v1472
        %v1557 = vadd.f32 %v1386, %v1473
        %v1558 = vadd.f32 %v1387, %v1474
        %v1559 = vadd.f32 %v1388, %v1475
        %v1560 = vld [vmem:[#allocation2] sm:$0xfe]
        %v1561 = vld [vmem:[#allocation2 + $0x8] sm:$0xfe]
        %v1562 = vld [vmem:[#allocation2 + $0x10] sm:$0xfe]
        %v1563 = vld [vmem:[#allocation2 + $0x18] sm:$0x7f]
        %v1564 = vld [vmem:[#allocation2 + $0x20] sm:$0x7f]
        %v1565 = vld [vmem:[#allocation2 + $0x28] sm:$0x7f]
        %v1566 = vld [vmem:[#allocation2 + $0x30] sm:$0xfe]
        %v1567 = vld [vmem:[#allocation2 + $0x38] sm:$0xfe]
        %v1568 = vld [vmem:[#allocation2 + $0x40] sm:$0xfe]
        %v1569 = vld [vmem:[#allocation2 + $0x48] sm:$0x7f]
        %v1570 = vld [vmem:[#allocation2 + $0x50] sm:$0x7f]
        %v1571 = vld [vmem:[#allocation2 + $0x58] sm:$0x7f]
        %v1572 = vld [vmem:[#allocation2 + $0x60] sm:$0xfe]
        %v1573 = vld [vmem:[#allocation2 + $0x68] sm:$0xfe]
        %v1574 = vld [vmem:[#allocation2 + $0x70] sm:$0xfe]
        %v1575 = vld [vmem:[#allocation2 + $0x78] sm:$0x7f]
        %v1576 = vld [vmem:[#allocation2 + $0x80] sm:$0x7f]
        %v1577 = vld [vmem:[#allocation2 + $0x88] sm:$0x7f]
        %v1578 = vld [vmem:[#allocation2 + $0x90] sm:$0xfe]
        %v1579 = vld [vmem:[#allocation2 + $0x98] sm:$0xfe]
        %v1580 = vld [vmem:[#allocation2 + $0xa0] sm:$0xfe]
        %v1581 = vld [vmem:[#allocation2 + $0xa8] sm:$0x7f]
        %v1582 = vld [vmem:[#allocation2 + $0xb0] sm:$0x7f]
        %v1583 = vld [vmem:[#allocation2 + $0xb8] sm:$0x7f]
        %v1584 = vld [vmem:[#allocation2 + $0xc0] sm:$0xfe]
        %v1585 = vld [vmem:[#allocation2 + $0xc8] sm:$0xfe]
        %v1586 = vld [vmem:[#allocation2 + $0xd0] sm:$0xfe]
        %v1587 = vld [vmem:[#allocation2 + $0xd8] sm:$0x7f]
        %v1588 = vld [vmem:[#allocation2 + $0xe0] sm:$0x7f]
        %v1589 = vld [vmem:[#allocation2 + $0xe8] sm:$0x7f]
        %v1590 = vld [vmem:[#allocation2 + $0xf0] sm:$0xfe]
        %v1591 = vld [vmem:[#allocation2 + $0xf8] sm:$0xfe]
        %v1592 = vld [vmem:[#allocation2 + $0x100] sm:$0xfe]
        %v1593 = vld [vmem:[#allocation2 + $0x108] sm:$0x7f]
        %v1594 = vld [vmem:[#allocation2 + $0x110] sm:$0x7f]
        %v1595 = vld [vmem:[#allocation2 + $0x118] sm:$0x7f]
        %v1596 = vld [vmem:[#allocation2 + $0x120] sm:$0xfe]
        %v1597 = vld [vmem:[#allocation2 + $0x128] sm:$0xfe]
        %v1598 = vld [vmem:[#allocation2 + $0x130] sm:$0xfe]
        %v1599 = vld [vmem:[#allocation2 + $0x138] sm:$0x7f]
        %v1600 = vld [vmem:[#allocation2 + $0x140] sm:$0x7f]
        %v1601 = vld [vmem:[#allocation2 + $0x148] sm:$0x7f]
        %v1602 = vld [vmem:[#allocation2 + $0x150] sm:$0xfe]
        %v1603 = vld [vmem:[#allocation2 + $0x158] sm:$0xfe]
        %v1604 = vld [vmem:[#allocation2 + $0x160] sm:$0xfe]
        %v1605 = vld [vmem:[#allocation2 + $0x168] sm:$0x7f]
        %v1606 = vld [vmem:[#allocation2 + $0x170] sm:$0x7f]
        %v1607 = vld [vmem:[#allocation2 + $0x178] sm:$0x7f]
        %v1608 = vld [vmem:[#allocation2 + $0x180] sm:$0xfe]
        %v1609 = vld [vmem:[#allocation2 + $0x188] sm:$0xfe]
        %v1610 = vld [vmem:[#allocation2 + $0x190] sm:$0xfe]
        %v1611 = vld [vmem:[#allocation2 + $0x198] sm:$0x7f]
        %v1612 = vld [vmem:[#allocation2 + $0x1a0] sm:$0x7f]
        %v1613 = vld [vmem:[#allocation2 + $0x1a8] sm:$0x7f]
        %v1614 = vld [vmem:[#allocation2 + $0x1b0] sm:$0xfe]
        %v1615 = vld [vmem:[#allocation2 + $0x1b8] sm:$0xfe]
        %v1616 = vld [vmem:[#allocation2 + $0x1c0] sm:$0xfe]
        %v1617 = vld [vmem:[#allocation2 + $0x1c8] sm:$0x7f]
        %v1618 = vld [vmem:[#allocation2 + $0x1d0] sm:$0x7f]
        %v1619 = vld [vmem:[#allocation2 + $0x1d8] sm:$0x7f]
        %v1620 = vld [vmem:[#allocation2 + $0x1e0] sm:$0xfe]
        %v1621 = vld [vmem:[#allocation2 + $0x1e8] sm:$0xfe]
        %v1622 = vld [vmem:[#allocation2 + $0x1f0] sm:$0xfe]
        %v1623 = vld [vmem:[#allocation2 + $0x1f8] sm:$0x7f]
        %v1624 = vld [vmem:[#allocation2 + $0x200] sm:$0x7f]
        %v1625 = vld [vmem:[#allocation2 + $0x208] sm:$0x7f]
        %v1626 = vld [vmem:[#allocation2 + $0x210] sm:$0xfe]
        %v1627 = vld [vmem:[#allocation2 + $0x218] sm:$0xfe]
        %v1628 = vld [vmem:[#allocation2 + $0x220] sm:$0xfe]
        %v1629 = vld [vmem:[#allocation2 + $0x228] sm:$0x7f]
        %v1630 = vld [vmem:[#allocation2 + $0x230] sm:$0x7f]
        %v1631 = vld [vmem:[#allocation2 + $0x238] sm:$0x7f]
        %v1632 = vld [vmem:[#allocation2 + $0x240] sm:$0xfe]
        %v1633 = vld [vmem:[#allocation2 + $0x248] sm:$0xfe]
        %v1634 = vld [vmem:[#allocation2 + $0x250] sm:$0xfe]
        %v1635 = vld [vmem:[#allocation2 + $0x258] sm:$0x7f]
        %v1636 = vld [vmem:[#allocation2 + $0x260] sm:$0x7f]
        %v1637 = vld [vmem:[#allocation2 + $0x268] sm:$0x7f]
        %v1638 = vld [vmem:[#allocation2 + $0x270] sm:$0xfe]
        %v1639 = vld [vmem:[#allocation2 + $0x278] sm:$0xfe]
        %v1640 = vld [vmem:[#allocation2 + $0x280] sm:$0xfe]
        %v1641 = vld [vmem:[#allocation2 + $0x288] sm:$0x7f]
        %v1642 = vld [vmem:[#allocation2 + $0x290] sm:$0x7f]
        %v1643 = vld [vmem:[#allocation2 + $0x298] sm:$0x7f]
        %v1644 = vld [vmem:[#allocation2 + $0x2a0] sm:$0xfe]
        %v1645 = vld [vmem:[#allocation2 + $0x2a8] sm:$0xfe]
        %v1646 = vld [vmem:[#allocation2 + $0x2b0] sm:$0xfe]
        %v1647 = vld [vmem:[#allocation2 + $0x2b8] sm:$0x7f]
        %v1648 = vld [vmem:[#allocation2 + $0x2c0] sm:$0x7f]
        %v1649 = vld [vmem:[#allocation2 + $0x2c8] sm:$0x7f]
        %v1650 = vld [vmem:[#allocation2 + $0x2d0] sm:$0xfe]
        %v1651 = vld [vmem:[#allocation2 + $0x2d8] sm:$0xfe]
        %v1652 = vld [vmem:[#allocation2 + $0x2e0] sm:$0xfe]
        %v1653 = vld [vmem:[#allocation2 + $0x2e8] sm:$0x7f]
        %v1654 = vld [vmem:[#allocation2 + $0x2f0] sm:$0x7f]
        %v1655 = vld [vmem:[#allocation2 + $0x2f8] sm:$0x7f]
        %v1656 = vperm.slane %v1029, 1
        %v1657 = vperm.slane %v1030, 1
        %v1658 = vperm.slane %v1031, 1
        %v1659 = vmul.f32 %v1560, %v1656
        %v1660 = vmul.f32 %v1561, %v1657
        %v1661 = vmul.f32 %v1562, %v1658
        %v1662 = vmul.f32 %v1563, %v1656
        %v1663 = vmul.f32 %v1564, %v1657
        %v1664 = vmul.f32 %v1565, %v1658
        %v1665 = vmul.f32 %v1566, %v1656
        %v1666 = vmul.f32 %v1567, %v1657
        %v1667 = vmul.f32 %v1568, %v1658
        %v1668 = vmul.f32 %v1569, %v1656
        %v1669 = vmul.f32 %v1570, %v1657
        %v1670 = vmul.f32 %v1571, %v1658
        %v1671 = vmul.f32 %v1572, %v1656
        %v1672 = vmul.f32 %v1573, %v1657
        %v1673 = vmul.f32 %v1574, %v1658
        %v1674 = vmul.f32 %v1575, %v1656
        %v1675 = vmul.f32 %v1576, %v1657
        %v1676 = vmul.f32 %v1577, %v1658
        %v1677 = vmul.f32 %v1578, %v1656
        %v1678 = vmul.f32 %v1579, %v1657
        %v1679 = vmul.f32 %v1580, %v1658
        %v1680 = vmul.f32 %v1581, %v1656
        %v1681 = vmul.f32 %v1582, %v1657
        %v1682 = vmul.f32 %v1583, %v1658
        %v1683 = vmul.f32 %v1584, %v1656
        %v1684 = vmul.f32 %v1585, %v1657
        %v1685 = vmul.f32 %v1586, %v1658
        %v1686 = vmul.f32 %v1587, %v1656
        %v1687 = vmul.f32 %v1588, %v1657
        %v1688 = vmul.f32 %v1589, %v1658
        %v1689 = vmul.f32 %v1590, %v1656
        %v1690 = vmul.f32 %v1591, %v1657
        %v1691 = vmul.f32 %v1592, %v1658
        %v1692 = vmul.f32 %v1593, %v1656
        %v1693 = vmul.f32 %v1594, %v1657
        %v1694 = vmul.f32 %v1595, %v1658
        %v1695 = vmul.f32 %v1596, %v1656
        %v1696 = vmul.f32 %v1597, %v1657
        %v1697 = vmul.f32 %v1598, %v1658
        %v1698 = vmul.f32 %v1599, %v1656
        %v1699 = vmul.f32 %v1600, %v1657
        %v1700 = vmul.f32 %v1601, %v1658
        %v1701 = vmul.f32 %v1602, %v1656
        %v1702 = vmul.f32 %v1603, %v1657
        %v1703 = vmul.f32 %v1604, %v1658
        %v1704 = vmul.f32 %v1605, %v1656
        %v1705 = vmul.f32 %v1606, %v1657
        %v1706 = vmul.f32 %v1607, %v1658
        %v1707 = vmul.f32 %v1608, %v1656
        %v1708 = vmul.f32 %v1609, %v1657
        %v1709 = vmul.f32 %v1610, %v1658
        %v1710 = vmul.f32 %v1611, %v1656
        %v1711 = vmul.f32 %v1612, %v1657
        %v1712 = vmul.f32 %v1613, %v1658
        %v1713 = vmul.f32 %v1614, %v1656
        %v1714 = vmul.f32 %v1615, %v1657
        %v1715 = vmul.f32 %v1616, %v1658
        %v1716 = vmul.f32 %v1617, %v1656
        %v1717 = vmul.f32 %v1618, %v1657
        %v1718 = vmul.f32 %v1619, %v1658
        %v1719 = vmul.f32 %v1620, %v1656
        %v1720 = vmul.f32 %v1621, %v1657
        %v1721 = vmul.f32 %v1622, %v1658
        %v1722 = vmul.f32 %v1623, %v1656
        %v1723 = vmul.f32 %v1624, %v1657
        %v1724 = vmul.f32 %v1625, %v1658
        %v1725 = vmul.f32 %v1626, %v1656
        %v1726 = vmul.f32 %v1627, %v1657
        %v1727 = vmul.f32 %v1628, %v1658
        %v1728 = vmul.f32 %v1629, %v1656
        %v1729 = vmul.f32 %v1630, %v1657
        %v1730 = vmul.f32 %v1631, %v1658
        %v1731 = vmul.f32 %v1632, %v1656
        %v1732 = vmul.f32 %v1633, %v1657
        %v1733 = vmul.f32 %v1634, %v1658
        %v1734 = vmul.f32 %v1635, %v1656
        %v1735 = vmul.f32 %v1636, %v1657
        %v1736 = vmul.f32 %v1637, %v1658
        %v1737 = vmul.f32 %v1638, %v1656
        %v1738 = vmul.f32 %v1639, %v1657
        %v1739 = vmul.f32 %v1640, %v1658
        %v1740 = vmul.f32 %v1641, %v1656
        %v1741 = vmul.f32 %v1642, %v1657
        %v1742 = vmul.f32 %v1643, %v1658
        %vm1827 = vcmask 1046528
        %v1828 = vrot.slane %v1659, 1
        %v1829 = vrot.slane %v1662, 1
        %v1830 = vsel %vm1827, %v1828, %v1829
        %v1831 = vrot.slane %v1660, 1
        %v1832 = vrot.slane %v1663, 1
        %v1833 = vsel %vm1827, %v1831, %v1832
        %v1834 = vrot.slane %v1661, 1
        %v1835 = vrot.slane %v1664, 1
        %v1836 = vsel %vm1827, %v1834, %v1835
        %v1837 = vrot.slane %v1665, 1
        %v1838 = vrot.slane %v1668, 1
        %v1839 = vsel %vm1827, %v1837, %v1838
        %v1840 = vrot.slane %v1666, 1
        %v1841 = vrot.slane %v1669, 1
        %v1842 = vsel %vm1827, %v1840, %v1841
        %v1843 = vrot.slane %v1667, 1
        %v1844 = vrot.slane %v1670, 1
        %v1845 = vsel %vm1827, %v1843, %v1844
        %v1846 = vrot.slane %v1671, 1
        %v1847 = vrot.slane %v1674, 1
        %v1848 = vsel %vm1827, %v1846, %v1847
        %v1849 = vrot.slane %v1672, 1
        %v1850 = vrot.slane %v1675, 1
        %v1851 = vsel %vm1827, %v1849, %v1850
        %v1852 = vrot.slane %v1673, 1
        %v1853 = vrot.slane %v1676, 1
        %v1854 = vsel %vm1827, %v1852, %v1853
        %v1855 = vrot.slane %v1677, 1
        %v1856 = vrot.slane %v1680, 1
        %v1857 = vsel %vm1827, %v1855, %v1856
        %v1858 = vrot.slane %v1678, 1
        %v1859 = vrot.slane %v1681, 1
        %v1860 = vsel %vm1827, %v1858, %v1859
        %v1861 = vrot.slane %v1679, 1
        %v1862 = vrot.slane %v1682, 1
        %v1863 = vsel %vm1827, %v1861, %v1862
        %v1864 = vrot.slane %v1683, 1
        %v1865 = vrot.slane %v1686, 1
        %v1866 = vsel %vm1827, %v1864, %v1865
        %v1867 = vrot.slane %v1684, 1
        %v1868 = vrot.slane %v1687, 1
        %v1869 = vsel %vm1827, %v1867, %v1868
        %v1870 = vrot.slane %v1685, 1
        %v1871 = vrot.slane %v1688, 1
        %v1872 = vsel %vm1827, %v1870, %v1871
        %v1873 = vrot.slane %v1689, 1
        %v1874 = vrot.slane %v1692, 1
        %v1875 = vsel %vm1827, %v1873, %v1874
        %v1876 = vrot.slane %v1690, 1
        %v1877 = vrot.slane %v1693, 1
        %v1878 = vsel %vm1827, %v1876, %v1877
        %v1879 = vrot.slane %v1691, 1
        %v1880 = vrot.slane %v1694, 1
        %v1881 = vsel %vm1827, %v1879, %v1880
        %v1882 = vrot.slane %v1695, 1
        %v1883 = vrot.slane %v1698, 1
        %v1884 = vsel %vm1827, %v1882, %v1883
        %v1885 = vrot.slane %v1696, 1
        %v1886 = vrot.slane %v1699, 1
        %v1887 = vsel %vm1827, %v1885, %v1886
        %v1888 = vrot.slane %v1697, 1
        %v1889 = vrot.slane %v1700, 1
        %v1890 = vsel %vm1827, %v1888, %v1889
        %v1891 = vrot.slane %v1701, 1
        %v1892 = vrot.slane %v1704, 1
        %v1893 = vsel %vm1827, %v1891, %v1892
        %v1894 = vrot.slane %v1702, 1
        %v1895 = vrot.slane %v1705, 1
        %v1896 = vsel %vm1827, %v1894, %v1895
        %v1897 = vrot.slane %v1703, 1
        %v1898 = vrot.slane %v1706, 1
        %v1899 = vsel %vm1827, %v1897, %v1898
        %v1900 = vrot.slane %v1707, 1
        %v1901 = vrot.slane %v1710, 1
        %v1902 = vsel %vm1827, %v1900, %v1901
        %v1903 = vrot.slane %v1708, 1
        %v1904 = vrot.slane %v1711, 1
        %v1905 = vsel %vm1827, %v1903, %v1904
        %v1906 = vrot.slane %v1709, 1
        %v1907 = vrot.slane %v1712, 1
        %v1908 = vsel %vm1827, %v1906, %v1907
        %v1909 = vrot.slane %v1713, 1
        %v1910 = vrot.slane %v1716, 1
        %v1911 = vsel %vm1827, %v1909, %v1910
        %v1912 = vrot.slane %v1714, 1
        %v1913 = vrot.slane %v1717, 1
        %v1914 = vsel %vm1827, %v1912, %v1913
        %v1915 = vrot.slane %v1715, 1
        %v1916 = vrot.slane %v1718, 1
        %v1917 = vsel %vm1827, %v1915, %v1916
        %v1918 = vrot.slane %v1719, 1
        %v1919 = vrot.slane %v1722, 1
        %v1920 = vsel %vm1827, %v1918, %v1919
        %v1921 = vrot.slane %v1720, 1
        %v1922 = vrot.slane %v1723, 1
        %v1923 = vsel %vm1827, %v1921, %v1922
        %v1924 = vrot.slane %v1721, 1
        %v1925 = vrot.slane %v1724, 1
        %v1926 = vsel %vm1827, %v1924, %v1925
        %v1927 = vrot.slane %v1725, 1
        %v1928 = vrot.slane %v1728, 1
        %v1929 = vsel %vm1827, %v1927, %v1928
        %v1930 = vrot.slane %v1726, 1
        %v1931 = vrot.slane %v1729, 1
        %v1932 = vsel %vm1827, %v1930, %v1931
        %v1933 = vrot.slane %v1727, 1
        %v1934 = vrot.slane %v1730, 1
        %v1935 = vsel %vm1827, %v1933, %v1934
        %v1936 = vrot.slane %v1731, 1
        %v1937 = vrot.slane %v1734, 1
        %v1938 = vsel %vm1827, %v1936, %v1937
        %v1939 = vrot.slane %v1732, 1
        %v1940 = vrot.slane %v1735, 1
        %v1941 = vsel %vm1827, %v1939, %v1940
        %v1942 = vrot.slane %v1733, 1
        %v1943 = vrot.slane %v1736, 1
        %v1944 = vsel %vm1827, %v1942, %v1943
        %v1945 = vrot.slane %v1737, 1
        %v1946 = vrot.slane %v1740, 1
        %v1947 = vsel %vm1827, %v1945, %v1946
        %v1948 = vrot.slane %v1738, 1
        %v1949 = vrot.slane %v1741, 1
        %v1950 = vsel %vm1827, %v1948, %v1949
        %v1951 = vrot.slane %v1739, 1
        %v1952 = vrot.slane %v1742, 1
        %v1953 = vsel %vm1827, %v1951, %v1952
        %v2038 = vadd.f32 %v1476, %v1830
        %v2039 = vadd.f32 %v1477, %v1833
        %v2040 = vadd.f32 %v1478, %v1836
        %v2041 = vadd.f32 %v1479, %v1829
        %v2042 = vadd.f32 %v1480, %v1832
        %v2043 = vadd.f32 %v1481, %v1835
        %v2044 = vadd.f32 %v1482, %v1839
        %v2045 = vadd.f32 %v1483, %v1842
        %v2046 = vadd.f32 %v1484, %v1845
        %v2047 = vadd.f32 %v1485, %v1838
        %v2048 = vadd.f32 %v1486, %v1841
        %v2049 = vadd.f32 %v1487, %v1844
        %v2050 = vadd.f32 %v1488, %v1848
        %v2051 = vadd.f32 %v1489, %v1851
        %v2052 = vadd.f32 %v1490, %v1854
        %v2053 = vadd.f32 %v1491, %v1847
        %v2054 = vadd.f32 %v1492, %v1850
        %v2055 = vadd.f32 %v1493, %v1853
        %v2056 = vadd.f32 %v1494, %v1857
        %v2057 = vadd.f32 %v1495, %v1860
        %v2058 = vadd.f32 %v1496, %v1863
        %v2059 = vadd.f32 %v1497, %v1856
        %v2060 = vadd.f32 %v1498, %v1859
        %v2061 = vadd.f32 %v1499, %v1862
        %v2062 = vadd.f32 %v1500, %v1866
        %v2063 = vadd.f32 %v1501, %v1869
        %v2064 = vadd.f32 %v1502, %v1872
        %v2065 = vadd.f32 %v1503, %v1865
        %v2066 = vadd.f32 %v1504, %v1868
        %v2067 = vadd.f32 %v1505, %v1871
        %v2068 = vadd.f32 %v1506, %v1875
        %v2069 = vadd.f32 %v1507, %v1878
        %v2070 = vadd.f32 %v1508, %v1881
        %v2071 = vadd.f32 %v1509, %v1874
        %v2072 = vadd.f32 %v1510, %v1877
        %v2073 = vadd.f32 %v1511, %v1880
        %v2074 = vadd.f32 %v1512, %v1884
        %v2075 = vadd.f32 %v1513, %v1887
        %v2076 = vadd.f32 %v1514, %v1890
        %v2077 = vadd.f32 %v1515, %v1883
        %v2078 = vadd.f32 %v1516, %v1886
        %v2079 = vadd.f32 %v1517, %v1889
        %v2080 = vadd.f32 %v1518, %v1893
        %v2081 = vadd.f32 %v1519, %v1896
        %v2082 = vadd.f32 %v1520, %v1899
        %v2083 = vadd.f32 %v1521, %v1892
        %v2084 = vadd.f32 %v1522, %v1895
        %v2085 = vadd.f32 %v1523, %v1898
        %v2086 = vadd.f32 %v1524, %v1902
        %v2087 = vadd.f32 %v1525, %v1905
        %v2088 = vadd.f32 %v1526, %v1908
        %v2089 = vadd.f32 %v1527, %v1901
        %v2090 = vadd.f32 %v1528, %v1904
        %v2091 = vadd.f32 %v1529, %v1907
        %v2092 = vadd.f32 %v1530, %v1911
        %v2093 = vadd.f32 %v1531, %v1914
        %v2094 = vadd.f32 %v1532, %v1917
        %v2095 = vadd.f32 %v1533, %v1910
        %v2096 = vadd.f32 %v1534, %v1913
        %v2097 = vadd.f32 %v1535, %v1916
        %v2098 = vadd.f32 %v1536, %v1920
        %v2099 = vadd.f32 %v1537, %v1923
        %v2100 = vadd.f32 %v1538, %v1926
        %v2101 = vadd.f32 %v1539, %v1919
        %v2102 = vadd.f32 %v1540, %v1922
        %v2103 = vadd.f32 %v1541, %v1925
        %v2104 = vadd.f32 %v1542, %v1929
        %v2105 = vadd.f32 %v1543, %v1932
        %v2106 = vadd.f32 %v1544, %v1935
        %v2107 = vadd.f32 %v1545, %v1928
        %v2108 = vadd.f32 %v1546, %v1931
        %v2109 = vadd.f32 %v1547, %v1934
        %v2110 = vadd.f32 %v1548, %v1938
        %v2111 = vadd.f32 %v1549, %v1941
        %v2112 = vadd.f32 %v1550, %v1944
        %v2113 = vadd.f32 %v1551, %v1937
        %v2114 = vadd.f32 %v1552, %v1940
        %v2115 = vadd.f32 %v1553, %v1943
        %v2116 = vadd.f32 %v1554, %v1947
        %v2117 = vadd.f32 %v1555, %v1950
        %v2118 = vadd.f32 %v1556, %v1953
        %v2119 = vadd.f32 %v1557, %v1946
        %v2120 = vadd.f32 %v1558, %v1949
        %v2121 = vadd.f32 %v1559, %v1952
        %v2122 = vperm.slane %v1029, 4
        %v2123 = vperm.slane %v1030, 4
        %v2124 = vperm.slane %v1031, 4
        %v2125 = vmul.f32 %v1566, %v2122
        %v2126 = vmul.f32 %v1567, %v2123
        %v2127 = vmul.f32 %v1568, %v2124
        %v2128 = vmul.f32 %v1569, %v2122
        %v2129 = vmul.f32 %v1570, %v2123
        %v2130 = vmul.f32 %v1571, %v2124
        %v2131 = vmul.f32 %v1572, %v2122
        %v2132 = vmul.f32 %v1573, %v2123
        %v2133 = vmul.f32 %v1574, %v2124
        %v2134 = vmul.f32 %v1575, %v2122
        %v2135 = vmul.f32 %v1576, %v2123
        %v2136 = vmul.f32 %v1577, %v2124
        %v2137 = vmul.f32 %v1578, %v2122
        %v2138 = vmul.f32 %v1579, %v2123
        %v2139 = vmul.f32 %v1580, %v2124
        %v2140 = vmul.f32 %v1581, %v2122
        %v2141 = vmul.f32 %v1582, %v2123
        %v2142 = vmul.f32 %v1583, %v2124
        %v2143 = vmul.f32 %v1584, %v2122
        %v2144 = vmul.f32 %v1585, %v2123
        %v2145 = vmul.f32 %v1586, %v2124
        %v2146 = vmul.f32 %v1587, %v2122
        %v2147 = vmul.f32 %v1588, %v2123
        %v2148 = vmul.f32 %v1589, %v2124
        %v2149 = vmul.f32 %v1590, %v2122
        %v2150 = vmul.f32 %v1591, %v2123
        %v2151 = vmul.f32 %v1592, %v2124
        %v2152 = vmul.f32 %v1593, %v2122
        %v2153 = vmul.f32 %v1594, %v2123
        %v2154 = vmul.f32 %v1595, %v2124
        %v2155 = vmul.f32 %v1596, %v2122
        %v2156 = vmul.f32 %v1597, %v2123
        %v2157 = vmul.f32 %v1598, %v2124
        %v2158 = vmul.f32 %v1599, %v2122
        %v2159 = vmul.f32 %v1600, %v2123
        %v2160 = vmul.f32 %v1601, %v2124
        %v2161 = vmul.f32 %v1602, %v2122
        %v2162 = vmul.f32 %v1603, %v2123
        %v2163 = vmul.f32 %v1604, %v2124
        %v2164 = vmul.f32 %v1605, %v2122
        %v2165 = vmul.f32 %v1606, %v2123
        %v2166 = vmul.f32 %v1607, %v2124
        %v2167 = vmul.f32 %v1608, %v2122
        %v2168 = vmul.f32 %v1609, %v2123
        %v2169 = vmul.f32 %v1610, %v2124
        %v2170 = vmul.f32 %v1611, %v2122
        %v2171 = vmul.f32 %v1612, %v2123
        %v2172 = vmul.f32 %v1613, %v2124
        %v2173 = vmul.f32 %v1614, %v2122
        %v2174 = vmul.f32 %v1615, %v2123
        %v2175 = vmul.f32 %v1616, %v2124
        %v2176 = vmul.f32 %v1617, %v2122
        %v2177 = vmul.f32 %v1618, %v2123
        %v2178 = vmul.f32 %v1619, %v2124
        %v2179 = vmul.f32 %v1620, %v2122
        %v2180 = vmul.f32 %v1621, %v2123
        %v2181 = vmul.f32 %v1622, %v2124
        %v2182 = vmul.f32 %v1623, %v2122
        %v2183 = vmul.f32 %v1624, %v2123
        %v2184 = vmul.f32 %v1625, %v2124
        %v2185 = vmul.f32 %v1626, %v2122
        %v2186 = vmul.f32 %v1627, %v2123
        %v2187 = vmul.f32 %v1628, %v2124
        %v2188 = vmul.f32 %v1629, %v2122
        %v2189 = vmul.f32 %v1630, %v2123
        %v2190 = vmul.f32 %v1631, %v2124
        %v2191 = vmul.f32 %v1632, %v2122
        %v2192 = vmul.f32 %v1633, %v2123
        %v2193 = vmul.f32 %v1634, %v2124
        %v2194 = vmul.f32 %v1635, %v2122
        %v2195 = vmul.f32 %v1636, %v2123
        %v2196 = vmul.f32 %v1637, %v2124
        %v2197 = vmul.f32 %v1638, %v2122
        %v2198 = vmul.f32 %v1639, %v2123
        %v2199 = vmul.f32 %v1640, %v2124
        %v2200 = vmul.f32 %v1641, %v2122
        %v2201 = vmul.f32 %v1642, %v2123
        %v2202 = vmul.f32 %v1643, %v2124
        %v2203 = vmul.f32 %v1644, %v2122
        %v2204 = vmul.f32 %v1645, %v2123
        %v2205 = vmul.f32 %v1646, %v2124
        %v2206 = vmul.f32 %v1647, %v2122
        %v2207 = vmul.f32 %v1648, %v2123
        %v2208 = vmul.f32 %v1649, %v2124
        %v2293 = vrot.slane %v2125, 1
        %v2294 = vrot.slane %v2128, 1
        %v2295 = vsel %vm1827, %v2293, %v2294
        %v2296 = vrot.slane %v2126, 1
        %v2297 = vrot.slane %v2129, 1
        %v2298 = vsel %vm1827, %v2296, %v2297
        %v2299 = vrot.slane %v2127, 1
        %v2300 = vrot.slane %v2130, 1
        %v2301 = vsel %vm1827, %v2299, %v2300
        %v2302 = vrot.slane %v2131, 1
        %v2303 = vrot.slane %v2134, 1
        %v2304 = vsel %vm1827, %v2302, %v2303
        %v2305 = vrot.slane %v2132, 1
        %v2306 = vrot.slane %v2135, 1
        %v2307 = vsel %vm1827, %v2305, %v2306
        %v2308 = vrot.slane %v2133, 1
        %v2309 = vrot.slane %v2136, 1
        %v2310 = vsel %vm1827, %v2308, %v2309
        %v2311 = vrot.slane %v2137, 1
        %v2312 = vrot.slane %v2140, 1
        %v2313 = vsel %vm1827, %v2311, %v2312
        %v2314 = vrot.slane %v2138, 1
        %v2315 = vrot.slane %v2141, 1
        %v2316 = vsel %vm1827, %v2314, %v2315
        %v2317 = vrot.slane %v2139, 1
        %v2318 = vrot.slane %v2142, 1
        %v2319 = vsel %vm1827, %v2317, %v2318
        %v2320 = vrot.slane %v2143, 1
        %v2321 = vrot.slane %v2146, 1
        %v2322 = vsel %vm1827, %v2320, %v2321
        %v2323 = vrot.slane %v2144, 1
        %v2324 = vrot.slane %v2147, 1
        %v2325 = vsel %vm1827, %v2323, %v2324
        %v2326 = vrot.slane %v2145, 1
        %v2327 = vrot.slane %v2148, 1
        %v2328 = vsel %vm1827, %v2326, %v2327
        %v2329 = vrot.slane %v2149, 1
        %v2330 = vrot.slane %v2152, 1
        %v2331 = vsel %vm1827, %v2329, %v2330
        %v2332 = vrot.slane %v2150, 1
        %v2333 = vrot.slane %v2153, 1
        %v2334 = vsel %vm1827, %v2332, %v2333
        %v2335 = vrot.slane %v2151, 1
        %v2336 = vrot.slane %v2154, 1
        %v2337 = vsel %vm1827, %v2335, %v2336
        %v2338 = vrot.slane %v2155, 1
        %v2339 = vrot.slane %v2158, 1
        %v2340 = vsel %vm1827, %v2338, %v2339
        %v2341 = vrot.slane %v2156, 1
        %v2342 = vrot.slane %v2159, 1
        %v2343 = vsel %vm1827, %v2341, %v2342
        %v2344 = vrot.slane %v2157, 1
        %v2345 = vrot.slane %v2160, 1
        %v2346 = vsel %vm1827, %v2344, %v2345
        %v2347 = vrot.slane %v2161, 1
        %v2348 = vrot.slane %v2164, 1
        %v2349 = vsel %vm1827, %v2347, %v2348
        %v2350 = vrot.slane %v2162, 1
        %v2351 = vrot.slane %v2165, 1
        %v2352 = vsel %vm1827, %v2350, %v2351
        %v2353 = vrot.slane %v2163, 1
        %v2354 = vrot.slane %v2166, 1
        %v2355 = vsel %vm1827, %v2353, %v2354
        %v2356 = vrot.slane %v2167, 1
        %v2357 = vrot.slane %v2170, 1
        %v2358 = vsel %vm1827, %v2356, %v2357
        %v2359 = vrot.slane %v2168, 1
        %v2360 = vrot.slane %v2171, 1
        %v2361 = vsel %vm1827, %v2359, %v2360
        %v2362 = vrot.slane %v2169, 1
        %v2363 = vrot.slane %v2172, 1
        %v2364 = vsel %vm1827, %v2362, %v2363
        %v2365 = vrot.slane %v2173, 1
        %v2366 = vrot.slane %v2176, 1
        %v2367 = vsel %vm1827, %v2365, %v2366
        %v2368 = vrot.slane %v2174, 1
        %v2369 = vrot.slane %v2177, 1
        %v2370 = vsel %vm1827, %v2368, %v2369
        %v2371 = vrot.slane %v2175, 1
        %v2372 = vrot.slane %v2178, 1
        %v2373 = vsel %vm1827, %v2371, %v2372
        %v2374 = vrot.slane %v2179, 1
        %v2375 = vrot.slane %v2182, 1
        %v2376 = vsel %vm1827, %v2374, %v2375
        %v2377 = vrot.slane %v2180, 1
        %v2378 = vrot.slane %v2183, 1
        %v2379 = vsel %vm1827, %v2377, %v2378
        %v2380 = vrot.slane %v2181, 1
        %v2381 = vrot.slane %v2184, 1
        %v2382 = vsel %vm1827, %v2380, %v2381
        %v2383 = vrot.slane %v2185, 1
        %v2384 = vrot.slane %v2188, 1
        %v2385 = vsel %vm1827, %v2383, %v2384
        %v2386 = vrot.slane %v2186, 1
        %v2387 = vrot.slane %v2189, 1
        %v2388 = vsel %vm1827, %v2386, %v2387
        %v2389 = vrot.slane %v2187, 1
        %v2390 = vrot.slane %v2190, 1
        %v2391 = vsel %vm1827, %v2389, %v2390
        %v2392 = vrot.slane %v2191, 1
        %v2393 = vrot.slane %v2194, 1
        %v2394 = vsel %vm1827, %v2392, %v2393
        %v2395 = vrot.slane %v2192, 1
        %v2396 = vrot.slane %v2195, 1
        %v2397 = vsel %vm1827, %v2395, %v2396
        %v2398 = vrot.slane %v2193, 1
        %v2399 = vrot.slane %v2196, 1
        %v2400 = vsel %vm1827, %v2398, %v2399
        %v2401 = vrot.slane %v2197, 1
        %v2402 = vrot.slane %v2200, 1
        %v2403 = vsel %vm1827, %v2401, %v2402
        %v2404 = vrot.slane %v2198, 1
        %v2405 = vrot.slane %v2201, 1
        %v2406 = vsel %vm1827, %v2404, %v2405
        %v2407 = vrot.slane %v2199, 1
        %v2408 = vrot.slane %v2202, 1
        %v2409 = vsel %vm1827, %v2407, %v2408
        %v2410 = vrot.slane %v2203, 1
        %v2411 = vrot.slane %v2206, 1
        %v2412 = vsel %vm1827, %v2410, %v2411
        %v2413 = vrot.slane %v2204, 1
        %v2414 = vrot.slane %v2207, 1
        %v2415 = vsel %vm1827, %v2413, %v2414
        %v2416 = vrot.slane %v2205, 1
        %v2417 = vrot.slane %v2208, 1
        %v2418 = vsel %vm1827, %v2416, %v2417
        %v2503 = vadd.f32 %v2038, %v2295
        %v2504 = vadd.f32 %v2039, %v2298
        %v2505 = vadd.f32 %v2040, %v2301
        %v2506 = vadd.f32 %v2041, %v2294
        %v2507 = vadd.f32 %v2042, %v2297
        %v2508 = vadd.f32 %v2043, %v2300
        %v2509 = vadd.f32 %v2044, %v2304
        %v2510 = vadd.f32 %v2045, %v2307
        %v2511 = vadd.f32 %v2046, %v2310
        %v2512 = vadd.f32 %v2047, %v2303
        %v2513 = vadd.f32 %v2048, %v2306
        %v2514 = vadd.f32 %v2049, %v2309
        %v2515 = vadd.f32 %v2050, %v2313
        %v2516 = vadd.f32 %v2051, %v2316
        %v2517 = vadd.f32 %v2052, %v2319
        %v2518 = vadd.f32 %v2053, %v2312
        %v2519 = vadd.f32 %v2054, %v2315
        %v2520 = vadd.f32 %v2055, %v2318
        %v2521 = vadd.f32 %v2056, %v2322
        %v2522 = vadd.f32 %v2057, %v2325
        %v2523 = vadd.f32 %v2058, %v2328
        %v2524 = vadd.f32 %v2059, %v2321
        %v2525 = vadd.f32 %v2060, %v2324
        %v2526 = vadd.f32 %v2061, %v2327
        %v2527 = vadd.f32 %v2062, %v2331
        %v2528 = vadd.f32 %v2063, %v2334
        %v2529 = vadd.f32 %v2064, %v2337
        %v2530 = vadd.f32 %v2065, %v2330
        %v2531 = vadd.f32 %v2066, %v2333
        %v2532 = vadd.f32 %v2067, %v2336
        %v2533 = vadd.f32 %v2068, %v2340
        %v2534 = vadd.f32 %v2069, %v2343
        %v2535 = vadd.f32 %v2070, %v2346
        %v2536 = vadd.f32 %v2071, %v2339
        %v2537 = vadd.f32 %v2072, %v2342
        %v2538 = vadd.f32 %v2073, %v2345
        %v2539 = vadd.f32 %v2074, %v2349
        %v2540 = vadd.f32 %v2075, %v2352
        %v2541 = vadd.f32 %v2076, %v2355
        %v2542 = vadd.f32 %v2077, %v2348
        %v2543 = vadd.f32 %v2078, %v2351
        %v2544 = vadd.f32 %v2079, %v2354
        %v2545 = vadd.f32 %v2080, %v2358
        %v2546 = vadd.f32 %v2081, %v2361
        %v2547 = vadd.f32 %v2082, %v2364
        %v2548 = vadd.f32 %v2083, %v2357
        %v2549 = vadd.f32 %v2084, %v2360
        %v2550 = vadd.f32 %v2085, %v2363
        %v2551 = vadd.f32 %v2086, %v2367
        %v2552 = vadd.f32 %v2087, %v2370
        %v2553 = vadd.f32 %v2088, %v2373
        %v2554 = vadd.f32 %v2089, %v2366
        %v2555 = vadd.f32 %v2090, %v2369
        %v2556 = vadd.f32 %v2091, %v2372
        %v2557 = vadd.f32 %v2092, %v2376
        %v2558 = vadd.f32 %v2093, %v2379
        %v2559 = vadd.f32 %v2094, %v2382
        %v2560 = vadd.f32 %v2095, %v2375
        %v2561 = vadd.f32 %v2096, %v2378
        %v2562 = vadd.f32 %v2097, %v2381
        %v2563 = vadd.f32 %v2098, %v2385
        %v2564 = vadd.f32 %v2099, %v2388
        %v2565 = vadd.f32 %v2100, %v2391
        %v2566 = vadd.f32 %v2101, %v2384
        %v2567 = vadd.f32 %v2102, %v2387
        %v2568 = vadd.f32 %v2103, %v2390
        %v2569 = vadd.f32 %v2104, %v2394
        %v2570 = vadd.f32 %v2105, %v2397
        %v2571 = vadd.f32 %v2106, %v2400
        %v2572 = vadd.f32 %v2107, %v2393
        %v2573 = vadd.f32 %v2108, %v2396
        %v2574 = vadd.f32 %v2109, %v2399
        %v2575 = vadd.f32 %v2110, %v2403
        %v2576 = vadd.f32 %v2111, %v2406
        %v2577 = vadd.f32 %v2112, %v2409
        %v2578 = vadd.f32 %v2113, %v2402
        %v2579 = vadd.f32 %v2114, %v2405
        %v2580 = vadd.f32 %v2115, %v2408
        %v2581 = vadd.f32 %v2116, %v2412
        %v2582 = vadd.f32 %v2117, %v2415
        %v2583 = vadd.f32 %v2118, %v2418
        %v2584 = vadd.f32 %v2119, %v2411
        %v2585 = vadd.f32 %v2120, %v2414
        %v2586 = vadd.f32 %v2121, %v2417
        %v2587 = vperm.slane %v1029, 7
        %v2588 = vperm.slane %v1030, 7
        %v2589 = vperm.slane %v1031, 7
        %v2590 = vmul.f32 %v1572, %v2587
        %v2591 = vmul.f32 %v1573, %v2588
        %v2592 = vmul.f32 %v1574, %v2589
        %v2593 = vmul.f32 %v1575, %v2587
        %v2594 = vmul.f32 %v1576, %v2588
        %v2595 = vmul.f32 %v1577, %v2589
        %v2596 = vmul.f32 %v1578, %v2587
        %v2597 = vmul.f32 %v1579, %v2588
        %v2598 = vmul.f32 %v1580, %v2589
        %v2599 = vmul.f32 %v1581, %v2587
        %v2600 = vmul.f32 %v1582, %v2588
        %v2601 = vmul.f32 %v1583, %v2589
        %v2602 = vmul.f32 %v1584, %v2587
        %v2603 = vmul.f32 %v1585, %v2588
        %v2604 = vmul.f32 %v1586, %v2589
        %v2605 = vmul.f32 %v1587, %v2587
        %v2606 = vmul.f32 %v1588, %v2588
        %v2607 = vmul.f32 %v1589, %v2589
        %v2608 = vmul.f32 %v1590, %v2587
        %v2609 = vmul.f32 %v1591, %v2588
        %v2610 = vmul.f32 %v1592, %v2589
        %v2611 = vmul.f32 %v1593, %v2587
        %v2612 = vmul.f32 %v1594, %v2588
        %v2613 = vmul.f32 %v1595, %v2589
        %v2614 = vmul.f32 %v1596, %v2587
        %v2615 = vmul.f32 %v1597, %v2588
        %v2616 = vmul.f32 %v1598, %v2589
        %v2617 = vmul.f32 %v1599, %v2587
        %v2618 = vmul.f32 %v1600, %v2588
        %v2619 = vmul.f32 %v1601, %v2589
        %v2620 = vmul.f32 %v1602, %v2587
        %v2621 = vmul.f32 %v1603, %v2588
        %v2622 = vmul.f32 %v1604, %v2589
        %v2623 = vmul.f32 %v1605, %v2587
        %v2624 = vmul.f32 %v1606, %v2588
        %v2625 = vmul.f32 %v1607, %v2589
        %v2626 = vmul.f32 %v1608, %v2587
        %v2627 = vmul.f32 %v1609, %v2588
        %v2628 = vmul.f32 %v1610, %v2589
        %v2629 = vmul.f32 %v1611, %v2587
        %v2630 = vmul.f32 %v1612, %v2588
        %v2631 = vmul.f32 %v1613, %v2589
        %v2632 = vmul.f32 %v1614, %v2587
        %v2633 = vmul.f32 %v1615, %v2588
        %v2634 = vmul.f32 %v1616, %v2589
        %v2635 = vmul.f32 %v1617, %v2587
        %v2636 = vmul.f32 %v1618, %v2588
        %v2637 = vmul.f32 %v1619, %v2589
        %v2638 = vmul.f32 %v1620, %v2587
        %v2639 = vmul.f32 %v1621, %v2588
        %v2640 = vmul.f32 %v1622, %v2589
        %v2641 = vmul.f32 %v1623, %v2587
        %v2642 = vmul.f32 %v1624, %v2588
        %v2643 = vmul.f32 %v1625, %v2589
        %v2644 = vmul.f32 %v1626, %v2587
        %v2645 = vmul.f32 %v1627, %v2588
        %v2646 = vmul.f32 %v1628, %v2589
        %v2647 = vmul.f32 %v1629, %v2587
        %v2648 = vmul.f32 %v1630, %v2588
        %v2649 = vmul.f32 %v1631, %v2589
        %v2650 = vmul.f32 %v1632, %v2587
        %v2651 = vmul.f32 %v1633, %v2588
        %v2652 = vmul.f32 %v1634, %v2589
        %v2653 = vmul.f32 %v1635, %v2587
        %v2654 = vmul.f32 %v1636, %v2588
        %v2655 = vmul.f32 %v1637, %v2589
        %v2656 = vmul.f32 %v1638, %v2587
        %v2657 = vmul.f32 %v1639, %v2588
        %v2658 = vmul.f32 %v1640, %v2589
        %v2659 = vmul.f32 %v1641, %v2587
        %v2660 = vmul.f32 %v1642, %v2588
        %v2661 = vmul.f32 %v1643, %v2589
        %v2662 = vmul.f32 %v1644, %v2587
        %v2663 = vmul.f32 %v1645, %v2588
        %v2664 = vmul.f32 %v1646, %v2589
        %v2665 = vmul.f32 %v1647, %v2587
        %v2666 = vmul.f32 %v1648, %v2588
        %v2667 = vmul.f32 %v1649, %v2589
        %v2668 = vmul.f32 %v1650, %v2587
        %v2669 = vmul.f32 %v1651, %v2588
        %v2670 = vmul.f32 %v1652, %v2589
        %v2671 = vmul.f32 %v1653, %v2587
        %v2672 = vmul.f32 %v1654, %v2588
        %v2673 = vmul.f32 %v1655, %v2589
        %v2758 = vrot.slane %v2590, 1
        %v2759 = vrot.slane %v2593, 1
        %v2760 = vsel %vm1827, %v2758, %v2759
        %v2761 = vrot.slane %v2591, 1
        %v2762 = vrot.slane %v2594, 1
        %v2763 = vsel %vm1827, %v2761, %v2762
        %v2764 = vrot.slane %v2592, 1
        %v2765 = vrot.slane %v2595, 1
        %v2766 = vsel %vm1827, %v2764, %v2765
        %v2767 = vrot.slane %v2596, 1
        %v2768 = vrot.slane %v2599, 1
        %v2769 = vsel %vm1827, %v2767, %v2768
        %v2770 = vrot.slane %v2597, 1
        %v2771 = vrot.slane %v2600, 1
        %v2772 = vsel %vm1827, %v2770, %v2771
        %v2773 = vrot.slane %v2598, 1
        %v2774 = vrot.slane %v2601, 1
        %v2775 = vsel %vm1827, %v2773, %v2774
        %v2776 = vrot.slane %v2602, 1
        %v2777 = vrot.slane %v2605, 1
        %v2778 = vsel %vm1827, %v2776, %v2777
        %v2779 = vrot.slane %v2603, 1
        %v2780 = vrot.slane %v2606, 1
        %v2781 = vsel %vm1827, %v2779, %v2780
        %v2782 = vrot.slane %v2604, 1
        %v2783 = vrot.slane %v2607, 1
        %v2784 = vsel %vm1827, %v2782, %v2783
        %v2785 = vrot.slane %v2608, 1
        %v2786 = vrot.slane %v2611, 1
        %v2787 = vsel %vm1827, %v2785, %v2786
        %v2788 = vrot.slane %v2609, 1
        %v2789 = vrot.slane %v2612, 1
        %v2790 = vsel %vm1827, %v2788, %v2789
        %v2791 = vrot.slane %v2610, 1
        %v2792 = vrot.slane %v2613, 1
        %v2793 = vsel %vm1827, %v2791, %v2792
        %v2794 = vrot.slane %v2614, 1
        %v2795 = vrot.slane %v2617, 1
        %v2796 = vsel %vm1827, %v2794, %v2795
        %v2797 = vrot.slane %v2615, 1
        %v2798 = vrot.slane %v2618, 1
        %v2799 = vsel %vm1827, %v2797, %v2798
        %v2800 = vrot.slane %v2616, 1
        %v2801 = vrot.slane %v2619, 1
        %v2802 = vsel %vm1827, %v2800, %v2801
        %v2803 = vrot.slane %v2620, 1
        %v2804 = vrot.slane %v2623, 1
        %v2805 = vsel %vm1827, %v2803, %v2804
        %v2806 = vrot.slane %v2621, 1
        %v2807 = vrot.slane %v2624, 1
        %v2808 = vsel %vm1827, %v2806, %v2807
        %v2809 = vrot.slane %v2622, 1
        %v2810 = vrot.slane %v2625, 1
        %v2811 = vsel %vm1827, %v2809, %v2810
        %v2812 = vrot.slane %v2626, 1
        %v2813 = vrot.slane %v2629, 1
        %v2814 = vsel %vm1827, %v2812, %v2813
        %v2815 = vrot.slane %v2627, 1
        %v2816 = vrot.slane %v2630, 1
        %v2817 = vsel %vm1827, %v2815, %v2816
        %v2818 = vrot.slane %v2628, 1
        %v2819 = vrot.slane %v2631, 1
        %v2820 = vsel %vm1827, %v2818, %v2819
        %v2821 = vrot.slane %v2632, 1
        %v2822 = vrot.slane %v2635, 1
        %v2823 = vsel %vm1827, %v2821, %v2822
        %v2824 = vrot.slane %v2633, 1
        %v2825 = vrot.slane %v2636, 1
        %v2826 = vsel %vm1827, %v2824, %v2825
        %v2827 = vrot.slane %v2634, 1
        %v2828 = vrot.slane %v2637, 1
        %v2829 = vsel %vm1827, %v2827, %v2828
        %v2830 = vrot.slane %v2638, 1
        %v2831 = vrot.slane %v2641, 1
        %v2832 = vsel %vm1827, %v2830, %v2831
        %v2833 = vrot.slane %v2639, 1
        %v2834 = vrot.slane %v2642, 1
        %v2835 = vsel %vm1827, %v2833, %v2834
        %v2836 = vrot.slane %v2640, 1
        %v2837 = vrot.slane %v2643, 1
        %v2838 = vsel %vm1827, %v2836, %v2837
        %v2839 = vrot.slane %v2644, 1
        %v2840 = vrot.slane %v2647, 1
        %v2841 = vsel %vm1827, %v2839, %v2840
        %v2842 = vrot.slane %v2645, 1
        %v2843 = vrot.slane %v2648, 1
        %v2844 = vsel %vm1827, %v2842, %v2843
        %v2845 = vrot.slane %v2646, 1
        %v2846 = vrot.slane %v2649, 1
        %v2847 = vsel %vm1827, %v2845, %v2846
        %v2848 = vrot.slane %v2650, 1
        %v2849 = vrot.slane %v2653, 1
        %v2850 = vsel %vm1827, %v2848, %v2849
        %v2851 = vrot.slane %v2651, 1
        %v2852 = vrot.slane %v2654, 1
        %v2853 = vsel %vm1827, %v2851, %v2852
        %v2854 = vrot.slane %v2652, 1
        %v2855 = vrot.slane %v2655, 1
        %v2856 = vsel %vm1827, %v2854, %v2855
        %v2857 = vrot.slane %v2656, 1
        %v2858 = vrot.slane %v2659, 1
        %v2859 = vsel %vm1827, %v2857, %v2858
        %v2860 = vrot.slane %v2657, 1
        %v2861 = vrot.slane %v2660, 1
        %v2862 = vsel %vm1827, %v2860, %v2861
        %v2863 = vrot.slane %v2658, 1
        %v2864 = vrot.slane %v2661, 1
        %v2865 = vsel %vm1827, %v2863, %v2864
        %v2866 = vrot.slane %v2662, 1
        %v2867 = vrot.slane %v2665, 1
        %v2868 = vsel %vm1827, %v2866, %v2867
        %v2869 = vrot.slane %v2663, 1
        %v2870 = vrot.slane %v2666, 1
        %v2871 = vsel %vm1827, %v2869, %v2870
        %v2872 = vrot.slane %v2664, 1
        %v2873 = vrot.slane %v2667, 1
        %v2874 = vsel %vm1827, %v2872, %v2873
        %v2875 = vrot.slane %v2668, 1
        %v2876 = vrot.slane %v2671, 1
        %v2877 = vsel %vm1827, %v2875, %v2876
        %v2878 = vrot.slane %v2669, 1
        %v2879 = vrot.slane %v2672, 1
        %v2880 = vsel %vm1827, %v2878, %v2879
        %v2881 = vrot.slane %v2670, 1
        %v2882 = vrot.slane %v2673, 1
        %v2883 = vsel %vm1827, %v2881, %v2882
        %v2968 = vadd.f32 %v2503, %v2760
        %v2969 = vadd.f32 %v2504, %v2763
        %v2970 = vadd.f32 %v2505, %v2766
        %v2971 = vadd.f32 %v2506, %v2759
        %v2972 = vadd.f32 %v2507, %v2762
        %v2973 = vadd.f32 %v2508, %v2765
        %v2974 = vadd.f32 %v2509, %v2769
        %v2975 = vadd.f32 %v2510, %v2772
        %v2976 = vadd.f32 %v2511, %v2775
        %v2977 = vadd.f32 %v2512, %v2768
        %v2978 = vadd.f32 %v2513, %v2771
        %v2979 = vadd.f32 %v2514, %v2774
        %v2980 = vadd.f32 %v2515, %v2778
        %v2981 = vadd.f32 %v2516, %v2781
        %v2982 = vadd.f32 %v2517, %v2784
        %v2983 = vadd.f32 %v2518, %v2777
        %v2984 = vadd.f32 %v2519, %v2780
        %v2985 = vadd.f32 %v2520, %v2783
        %v2986 = vadd.f32 %v2521, %v2787
        %v2987 = vadd.f32 %v2522, %v2790
        %v2988 = vadd.f32 %v2523, %v2793
        %v2989 = vadd.f32 %v2524, %v2786
        %v2990 = vadd.f32 %v2525, %v2789
        %v2991 = vadd.f32 %v2526, %v2792
        %v2992 = vadd.f32 %v2527, %v2796
        %v2993 = vadd.f32 %v2528, %v2799
        %v2994 = vadd.f32 %v2529, %v2802
        %v2995 = vadd.f32 %v2530, %v2795
        %v2996 = vadd.f32 %v2531, %v2798
        %v2997 = vadd.f32 %v2532, %v2801
        %v2998 = vadd.f32 %v2533, %v2805
        %v2999 = vadd.f32 %v2534, %v2808
        %v3000 = vadd.f32 %v2535, %v2811
        %v3001 = vadd.f32 %v2536, %v2804
        %v3002 = vadd.f32 %v2537, %v2807
        %v3003 = vadd.f32 %v2538, %v2810
        %v3004 = vadd.f32 %v2539, %v2814
        %v3005 = vadd.f32 %v2540, %v2817
        %v3006 = vadd.f32 %v2541, %v2820
        %v3007 = vadd.f32 %v2542, %v2813
        %v3008 = vadd.f32 %v2543, %v2816
        %v3009 = vadd.f32 %v2544, %v2819
        %v3010 = vadd.f32 %v2545, %v2823
        %v3011 = vadd.f32 %v2546, %v2826
        %v3012 = vadd.f32 %v2547, %v2829
        %v3013 = vadd.f32 %v2548, %v2822
        %v3014 = vadd.f32 %v2549, %v2825
        %v3015 = vadd.f32 %v2550, %v2828
        %v3016 = vadd.f32 %v2551, %v2832
        %v3017 = vadd.f32 %v2552, %v2835
        %v3018 = vadd.f32 %v2553, %v2838
        %v3019 = vadd.f32 %v2554, %v2831
        %v3020 = vadd.f32 %v2555, %v2834
        %v3021 = vadd.f32 %v2556, %v2837
        %v3022 = vadd.f32 %v2557, %v2841
        %v3023 = vadd.f32 %v2558, %v2844
        %v3024 = vadd.f32 %v2559, %v2847
        %v3025 = vadd.f32 %v2560, %v2840
        %v3026 = vadd.f32 %v2561, %v2843
        %v3027 = vadd.f32 %v2562, %v2846
        %v3028 = vadd.f32 %v2563, %v2850
        %v3029 = vadd.f32 %v2564, %v2853
        %v3030 = vadd.f32 %v2565, %v2856
        %v3031 = vadd.f32 %v2566, %v2849
        %v3032 = vadd.f32 %v2567, %v2852
        %v3033 = vadd.f32 %v2568, %v2855
        %v3034 = vadd.f32 %v2569, %v2859
        %v3035 = vadd.f32 %v2570, %v2862
        %v3036 = vadd.f32 %v2571, %v2865
        %v3037 = vadd.f32 %v2572, %v2858
        %v3038 = vadd.f32 %v2573, %v2861
        %v3039 = vadd.f32 %v2574, %v2864
        %v3040 = vadd.f32 %v2575, %v2868
        %v3041 = vadd.f32 %v2576, %v2871
        %v3042 = vadd.f32 %v2577, %v2874
        %v3043 = vadd.f32 %v2578, %v2867
        %v3044 = vadd.f32 %v2579, %v2870
        %v3045 = vadd.f32 %v2580, %v2873
        %v3046 = vadd.f32 %v2581, %v2877
        %v3047 = vadd.f32 %v2582, %v2880
        %v3048 = vadd.f32 %v2583, %v2883
        %v3049 = vadd.f32 %v2584, %v2876
        %v3050 = vadd.f32 %v2585, %v2879
        %v3051 = vadd.f32 %v2586, %v2882
        %v3052 = vld [vmem:[#allocation2] sm:$0xfc]
        %v3053 = vld [vmem:[#allocation2 + $0x8] sm:$0xfc]
        %v3054 = vld [vmem:[#allocation2 + $0x10] sm:$0xfc]
        %v3055 = vld [vmem:[#allocation2 + $0x18] sm:$0xff]
        %v3056 = vld [vmem:[#allocation2 + $0x20] sm:$0xff]
        %v3057 = vld [vmem:[#allocation2 + $0x28] sm:$0xff]
        %v3058 = vld [vmem:[#allocation2 + $0x30] sm:$0xfc]
        %v3059 = vld [vmem:[#allocation2 + $0x38] sm:$0xfc]
        %v3060 = vld [vmem:[#allocation2 + $0x40] sm:$0xfc]
        %v3061 = vld [vmem:[#allocation2 + $0x48] sm:$0xff]
        %v3062 = vld [vmem:[#allocation2 + $0x50] sm:$0xff]
        %v3063 = vld [vmem:[#allocation2 + $0x58] sm:$0xff]
        %v3064 = vld [vmem:[#allocation2 + $0x60] sm:$0xfc]
        %v3065 = vld [vmem:[#allocation2 + $0x68] sm:$0xfc]
        %v3066 = vld [vmem:[#allocation2 + $0x70] sm:$0xfc]
        %v3067 = vld [vmem:[#allocation2 + $0x78] sm:$0xff]
        %v3068 = vld [vmem:[#allocation2 + $0x80] sm:$0xff]
        %v3069 = vld [vmem:[#allocation2 + $0x88] sm:$0xff]
        %v3070 = vld [vmem:[#allocation2 + $0x90] sm:$0xfc]
        %v3071 = vld [vmem:[#allocation2 + $0x98] sm:$0xfc]
        %v3072 = vld [vmem:[#allocation2 + $0xa0] sm:$0xfc]
        %v3073 = vld [vmem:[#allocation2 + $0xa8] sm:$0xff]
        %v3074 = vld [vmem:[#allocation2 + $0xb0] sm:$0xff]
        %v3075 = vld [vmem:[#allocation2 + $0xb8] sm:$0xff]
        %v3076 = vld [vmem:[#allocation2 + $0xc0] sm:$0xfc]
        %v3077 = vld [vmem:[#allocation2 + $0xc8] sm:$0xfc]
        %v3078 = vld [vmem:[#allocation2 + $0xd0] sm:$0xfc]
        %v3079 = vld [vmem:[#allocation2 + $0xd8] sm:$0xff]
        %v3080 = vld [vmem:[#allocation2 + $0xe0] sm:$0xff]
        %v3081 = vld [vmem:[#allocation2 + $0xe8] sm:$0xff]
        %v3082 = vld [vmem:[#allocation2 + $0xf0] sm:$0xfc]
        %v3083 = vld [vmem:[#allocation2 + $0xf8] sm:$0xfc]
        %v3084 = vld [vmem:[#allocation2 + $0x100] sm:$0xfc]
        %v3085 = vld [vmem:[#allocation2 + $0x108] sm:$0xff]
        %v3086 = vld [vmem:[#allocation2 + $0x110] sm:$0xff]
        %v3087 = vld [vmem:[#allocation2 + $0x118] sm:$0xff]
        %v3088 = vld [vmem:[#allocation2 + $0x120] sm:$0xfc]
        %v3089 = vld [vmem:[#allocation2 + $0x128] sm:$0xfc]
        %v3090 = vld [vmem:[#allocation2 + $0x130] sm:$0xfc]
        %v3091 = vld [vmem:[#allocation2 + $0x138] sm:$0xff]
        %v3092 = vld [vmem:[#allocation2 + $0x140] sm:$0xff]
        %v3093 = vld [vmem:[#allocation2 + $0x148] sm:$0xff]
        %v3094 = vld [vmem:[#allocation2 + $0x150] sm:$0xfc]
        %v3095 = vld [vmem:[#allocation2 + $0x158] sm:$0xfc]
        %v3096 = vld [vmem:[#allocation2 + $0x160] sm:$0xfc]
        %v3097 = vld [vmem:[#allocation2 + $0x168] sm:$0xff]
        %v3098 = vld [vmem:[#allocation2 + $0x170] sm:$0xff]
        %v3099 = vld [vmem:[#allocation2 + $0x178] sm:$0xff]
        %v3100 = vld [vmem:[#allocation2 + $0x180] sm:$0xfc]
        %v3101 = vld [vmem:[#allocation2 + $0x188] sm:$0xfc]
        %v3102 = vld [vmem:[#allocation2 + $0x190] sm:$0xfc]
        %v3103 = vld [vmem:[#allocation2 + $0x198] sm:$0xff]
        %v3104 = vld [vmem:[#allocation2 + $0x1a0] sm:$0xff]
        %v3105 = vld [vmem:[#allocation2 + $0x1a8] sm:$0xff]
        %v3106 = vld [vmem:[#allocation2 + $0x1b0] sm:$0xfc]
        %v3107 = vld [vmem:[#allocation2 + $0x1b8] sm:$0xfc]
        %v3108 = vld [vmem:[#allocation2 + $0x1c0] sm:$0xfc]
        %v3109 = vld [vmem:[#allocation2 + $0x1c8] sm:$0xff]
        %v3110 = vld [vmem:[#allocation2 + $0x1d0] sm:$0xff]
        %v3111 = vld [vmem:[#allocation2 + $0x1d8] sm:$0xff]
        %v3112 = vld [vmem:[#allocation2 + $0x1e0] sm:$0xfc]
        %v3113 = vld [vmem:[#allocation2 + $0x1e8] sm:$0xfc]
        %v3114 = vld [vmem:[#allocation2 + $0x1f0] sm:$0xfc]
        %v3115 = vld [vmem:[#allocation2 + $0x1f8] sm:$0xff]
        %v3116 = vld [vmem:[#allocation2 + $0x200] sm:$0xff]
        %v3117 = vld [vmem:[#allocation2 + $0x208] sm:$0xff]
        %v3118 = vld [vmem:[#allocation2 + $0x210] sm:$0xfc]
        %v3119 = vld [vmem:[#allocation2 + $0x218] sm:$0xfc]
        %v3120 = vld [vmem:[#allocation2 + $0x220] sm:$0xfc]
        %v3121 = vld [vmem:[#allocation2 + $0x228] sm:$0xff]
        %v3122 = vld [vmem:[#allocation2 + $0x230] sm:$0xff]
        %v3123 = vld [vmem:[#allocation2 + $0x238] sm:$0xff]
        %v3124 = vld [vmem:[#allocation2 + $0x240] sm:$0xfc]
        %v3125 = vld [vmem:[#allocation2 + $0x248] sm:$0xfc]
        %v3126 = vld [vmem:[#allocation2 + $0x250] sm:$0xfc]
        %v3127 = vld [vmem:[#allocation2 + $0x258] sm:$0xff]
        %v3128 = vld [vmem:[#allocation2 + $0x260] sm:$0xff]
        %v3129 = vld [vmem:[#allocation2 + $0x268] sm:$0xff]
        %v3130 = vld [vmem:[#allocation2 + $0x270] sm:$0xfc]
        %v3131 = vld [vmem:[#allocation2 + $0x278] sm:$0xfc]
        %v3132 = vld [vmem:[#allocation2 + $0x280] sm:$0xfc]
        %v3133 = vld [vmem:[#allocation2 + $0x288] sm:$0xff]
        %v3134 = vld [vmem:[#allocation2 + $0x290] sm:$0xff]
        %v3135 = vld [vmem:[#allocation2 + $0x298] sm:$0xff]
        %v3136 = vld [vmem:[#allocation2 + $0x2a0] sm:$0xfc]
        %v3137 = vld [vmem:[#allocation2 + $0x2a8] sm:$0xfc]
        %v3138 = vld [vmem:[#allocation2 + $0x2b0] sm:$0xfc]
        %v3139 = vld [vmem:[#allocation2 + $0x2b8] sm:$0xff]
        %v3140 = vld [vmem:[#allocation2 + $0x2c0] sm:$0xff]
        %v3141 = vld [vmem:[#allocation2 + $0x2c8] sm:$0xff]
        %v3142 = vld [vmem:[#allocation2 + $0x2d0] sm:$0xfc]
        %v3143 = vld [vmem:[#allocation2 + $0x2d8] sm:$0xfc]
        %v3144 = vld [vmem:[#allocation2 + $0x2e0] sm:$0xfc]
        %v3145 = vld [vmem:[#allocation2 + $0x2e8] sm:$0xff]
        %v3146 = vld [vmem:[#allocation2 + $0x2f0] sm:$0xff]
        %v3147 = vld [vmem:[#allocation2 + $0x2f8] sm:$0xff]
        %v3148 = vperm.slane %v1029, 2
        %v3149 = vperm.slane %v1030, 2
        %v3150 = vperm.slane %v1031, 2
        %v3151 = vmul.f32 %v3052, %v3148
        %v3152 = vmul.f32 %v3053, %v3149
        %v3153 = vmul.f32 %v3054, %v3150
        %v3154 = vmul.f32 %v3055, %v3148
        %v3155 = vmul.f32 %v3056, %v3149
        %v3156 = vmul.f32 %v3057, %v3150
        %v3157 = vmul.f32 %v3058, %v3148
        %v3158 = vmul.f32 %v3059, %v3149
        %v3159 = vmul.f32 %v3060, %v3150
        %v3160 = vmul.f32 %v3061, %v3148
        %v3161 = vmul.f32 %v3062, %v3149
        %v3162 = vmul.f32 %v3063, %v3150
        %v3163 = vmul.f32 %v3064, %v3148
        %v3164 = vmul.f32 %v3065, %v3149
        %v3165 = vmul.f32 %v3066, %v3150
        %v3166 = vmul.f32 %v3067, %v3148
        %v3167 = vmul.f32 %v3068, %v3149
        %v3168 = vmul.f32 %v3069, %v3150
        %v3169 = vmul.f32 %v3070, %v3148
        %v3170 = vmul.f32 %v3071, %v3149
        %v3171 = vmul.f32 %v3072, %v3150
        %v3172 = vmul.f32 %v3073, %v3148
        %v3173 = vmul.f32 %v3074, %v3149
        %v3174 = vmul.f32 %v3075, %v3150
        %v3175 = vmul.f32 %v3076, %v3148
        %v3176 = vmul.f32 %v3077, %v3149
        %v3177 = vmul.f32 %v3078, %v3150
        %v3178 = vmul.f32 %v3079, %v3148
        %v3179 = vmul.f32 %v3080, %v3149
        %v3180 = vmul.f32 %v3081, %v3150
        %v3181 = vmul.f32 %v3082, %v3148
        %v3182 = vmul.f32 %v3083, %v3149
        %v3183 = vmul.f32 %v3084, %v3150
        %v3184 = vmul.f32 %v3085, %v3148
        %v3185 = vmul.f32 %v3086, %v3149
        %v3186 = vmul.f32 %v3087, %v3150
        %v3187 = vmul.f32 %v3088, %v3148
        %v3188 = vmul.f32 %v3089, %v3149
        %v3189 = vmul.f32 %v3090, %v3150
        %v3190 = vmul.f32 %v3091, %v3148
        %v3191 = vmul.f32 %v3092, %v3149
        %v3192 = vmul.f32 %v3093, %v3150
        %v3193 = vmul.f32 %v3094, %v3148
        %v3194 = vmul.f32 %v3095, %v3149
        %v3195 = vmul.f32 %v3096, %v3150
        %v3196 = vmul.f32 %v3097, %v3148
        %v3197 = vmul.f32 %v3098, %v3149
        %v3198 = vmul.f32 %v3099, %v3150
        %v3199 = vmul.f32 %v3100, %v3148
        %v3200 = vmul.f32 %v3101, %v3149
        %v3201 = vmul.f32 %v3102, %v3150
        %v3202 = vmul.f32 %v3103, %v3148
        %v3203 = vmul.f32 %v3104, %v3149
        %v3204 = vmul.f32 %v3105, %v3150
        %v3205 = vmul.f32 %v3106, %v3148
        %v3206 = vmul.f32 %v3107, %v3149
        %v3207 = vmul.f32 %v3108, %v3150
        %v3208 = vmul.f32 %v3109, %v3148
        %v3209 = vmul.f32 %v3110, %v3149
        %v3210 = vmul.f32 %v3111, %v3150
        %v3211 = vmul.f32 %v3112, %v3148
        %v3212 = vmul.f32 %v3113, %v3149
        %v3213 = vmul.f32 %v3114, %v3150
        %v3214 = vmul.f32 %v3115, %v3148
        %v3215 = vmul.f32 %v3116, %v3149
        %v3216 = vmul.f32 %v3117, %v3150
        %v3217 = vmul.f32 %v3118, %v3148
        %v3218 = vmul.f32 %v3119, %v3149
        %v3219 = vmul.f32 %v3120, %v3150
        %v3220 = vmul.f32 %v3121, %v3148
        %v3221 = vmul.f32 %v3122, %v3149
        %v3222 = vmul.f32 %v3123, %v3150
        %v3223 = vmul.f32 %v3124, %v3148
        %v3224 = vmul.f32 %v3125, %v3149
        %v3225 = vmul.f32 %v3126, %v3150
        %v3226 = vmul.f32 %v3127, %v3148
        %v3227 = vmul.f32 %v3128, %v3149
        %v3228 = vmul.f32 %v3129, %v3150
        %v3229 = vmul.f32 %v3130, %v3148
        %v3230 = vmul.f32 %v3131, %v3149
        %v3231 = vmul.f32 %v3132, %v3150
        %v3232 = vmul.f32 %v3133, %v3148
        %v3233 = vmul.f32 %v3134, %v3149
        %v3234 = vmul.f32 %v3135, %v3150
        %vm3319 = vcmask 1045504
        %v3320 = vrot.slane %v3151, 2
        %v3321 = vrot.slane %v3154, 2
        %v3322 = vsel %vm3319, %v3320, %v3321
        %v3323 = vrot.slane %v3152, 2
        %v3324 = vrot.slane %v3155, 2
        %v3325 = vsel %vm3319, %v3323, %v3324
        %v3326 = vrot.slane %v3153, 2
        %v3327 = vrot.slane %v3156, 2
        %v3328 = vsel %vm3319, %v3326, %v3327
        %v3329 = vrot.slane %v3157, 2
        %v3330 = vrot.slane %v3160, 2
        %v3331 = vsel %vm3319, %v3329, %v3330
        %v3332 = vrot.slane %v3158, 2
        %v3333 = vrot.slane %v3161, 2
        %v3334 = vsel %vm3319, %v3332, %v3333
        %v3335 = vrot.slane %v3159, 2
        %v3336 = vrot.slane %v3162, 2
        %v3337 = vsel %vm3319, %v3335, %v3336
        %v3338 = vrot.slane %v3163, 2
        %v3339 = vrot.slane %v3166, 2
        %v3340 = vsel %vm3319, %v3338, %v3339
        %v3341 = vrot.slane %v3164, 2
        %v3342 = vrot.slane %v3167, 2
        %v3343 = vsel %vm3319, %v3341, %v3342
        %v3344 = vrot.slane %v3165, 2
        %v3345 = vrot.slane %v3168, 2
        %v3346 = vsel %vm3319, %v3344, %v3345
        %v3347 = vrot.slane %v3169, 2
        %v3348 = vrot.slane %v3172, 2
        %v3349 = vsel %vm3319, %v3347, %v3348
        %v3350 = vrot.slane %v3170, 2
        %v3351 = vrot.slane %v3173, 2
        %v3352 = vsel %vm3319, %v3350, %v3351
        %v3353 = vrot.slane %v3171, 2
        %v3354 = vrot.slane %v3174, 2
        %v3355 = vsel %vm3319, %v3353, %v3354
        %v3356 = vrot.slane %v3175, 2
        %v3357 = vrot.slane %v3178, 2
        %v3358 = vsel %vm3319, %v3356, %v3357
        %v3359 = vrot.slane %v3176, 2
        %v3360 = vrot.slane %v3179, 2
        %v3361 = vsel %vm3319, %v3359, %v3360
        %v3362 = vrot.slane %v3177, 2
        %v3363 = vrot.slane %v3180, 2
        %v3364 = vsel %vm3319, %v3362, %v3363
        %v3365 = vrot.slane %v3181, 2
        %v3366 = vrot.slane %v3184, 2
        %v3367 = vsel %vm3319, %v3365, %v3366
        %v3368 = vrot.slane %v3182, 2
        %v3369 = vrot.slane %v3185, 2
        %v3370 = vsel %vm3319, %v3368, %v3369
        %v3371 = vrot.slane %v3183, 2
        %v3372 = vrot.slane %v3186, 2
        %v3373 = vsel %vm3319, %v3371, %v3372
        %v3374 = vrot.slane %v3187, 2
        %v3375 = vrot.slane %v3190, 2
        %v3376 = vsel %vm3319, %v3374, %v3375
        %v3377 = vrot.slane %v3188, 2
        %v3378 = vrot.slane %v3191, 2
        %v3379 = vsel %vm3319, %v3377, %v3378
        %v3380 = vrot.slane %v3189, 2
        %v3381 = vrot.slane %v3192, 2
        %v3382 = vsel %vm3319, %v3380, %v3381
        %v3383 = vrot.slane %v3193, 2
        %v3384 = vrot.slane %v3196, 2
        %v3385 = vsel %vm3319, %v3383, %v3384
        %v3386 = vrot.slane %v3194, 2
        %v3387 = vrot.slane %v3197, 2
        %v3388 = vsel %vm3319, %v3386, %v3387
        %v3389 = vrot.slane %v3195, 2
        %v3390 = vrot.slane %v3198, 2
        %v3391 = vsel %vm3319, %v3389, %v3390
        %v3392 = vrot.slane %v3199, 2
        %v3393 = vrot.slane %v3202, 2
        %v3394 = vsel %vm3319, %v3392, %v3393
        %v3395 = vrot.slane %v3200, 2
        %v3396 = vrot.slane %v3203, 2
        %v3397 = vsel %vm3319, %v3395, %v3396
        %v3398 = vrot.slane %v3201, 2
        %v3399 = vrot.slane %v3204, 2
        %v3400 = vsel %vm3319, %v3398, %v3399
        %v3401 = vrot.slane %v3205, 2
        %v3402 = vrot.slane %v3208, 2
        %v3403 = vsel %vm3319, %v3401, %v3402
        %v3404 = vrot.slane %v3206, 2
        %v3405 = vrot.slane %v3209, 2
        %v3406 = vsel %vm3319, %v3404, %v3405
        %v3407 = vrot.slane %v3207, 2
        %v3408 = vrot.slane %v3210, 2
        %v3409 = vsel %vm3319, %v3407, %v3408
        %v3410 = vrot.slane %v3211, 2
        %v3411 = vrot.slane %v3214, 2
        %v3412 = vsel %vm3319, %v3410, %v3411
        %v3413 = vrot.slane %v3212, 2
        %v3414 = vrot.slane %v3215, 2
        %v3415 = vsel %vm3319, %v3413, %v3414
        %v3416 = vrot.slane %v3213, 2
        %v3417 = vrot.slane %v3216, 2
        %v3418 = vsel %vm3319, %v3416, %v3417
        %v3419 = vrot.slane %v3217, 2
        %v3420 = vrot.slane %v3220, 2
        %v3421 = vsel %vm3319, %v3419, %v3420
        %v3422 = vrot.slane %v3218, 2
        %v3423 = vrot.slane %v3221, 2
        %v3424 = vsel %vm3319, %v3422, %v3423
        %v3425 = vrot.slane %v3219, 2
        %v3426 = vrot.slane %v3222, 2
        %v3427 = vsel %vm3319, %v3425, %v3426
        %v3428 = vrot.slane %v3223, 2
        %v3429 = vrot.slane %v3226, 2
        %v3430 = vsel %vm3319, %v3428, %v3429
        %v3431 = vrot.slane %v3224, 2
        %v3432 = vrot.slane %v3227, 2
        %v3433 = vsel %vm3319, %v3431, %v3432
        %v3434 = vrot.slane %v3225, 2
        %v3435 = vrot.slane %v3228, 2
        %v3436 = vsel %vm3319, %v3434, %v3435
        %v3437 = vrot.slane %v3229, 2
        %v3438 = vrot.slane %v3232, 2
        %v3439 = vsel %vm3319, %v3437, %v3438
        %v3440 = vrot.slane %v3230, 2
        %v3441 = vrot.slane %v3233, 2
        %v3442 = vsel %vm3319, %v3440, %v3441
        %v3443 = vrot.slane %v3231, 2
        %v3444 = vrot.slane %v3234, 2
        %v3445 = vsel %vm3319, %v3443, %v3444
        %v3530 = vadd.f32 %v2968, %v3322
        %v3531 = vadd.f32 %v2969, %v3325
        %v3532 = vadd.f32 %v2970, %v3328
        %v3533 = vadd.f32 %v2971, %v3321
        %v3534 = vadd.f32 %v2972, %v3324
        %v3535 = vadd.f32 %v2973, %v3327
        %v3536 = vadd.f32 %v2974, %v3331
        %v3537 = vadd.f32 %v2975, %v3334
        %v3538 = vadd.f32 %v2976, %v3337
        %v3539 = vadd.f32 %v2977, %v3330
        %v3540 = vadd.f32 %v2978, %v3333
        %v3541 = vadd.f32 %v2979, %v3336
        %v3542 = vadd.f32 %v2980, %v3340
        %v3543 = vadd.f32 %v2981, %v3343
        %v3544 = vadd.f32 %v2982, %v3346
        %v3545 = vadd.f32 %v2983, %v3339
        %v3546 = vadd.f32 %v2984, %v3342
        %v3547 = vadd.f32 %v2985, %v3345
        %v3548 = vadd.f32 %v2986, %v3349
        %v3549 = vadd.f32 %v2987, %v3352
        %v3550 = vadd.f32 %v2988, %v3355
        %v3551 = vadd.f32 %v2989, %v3348
        %v3552 = vadd.f32 %v2990, %v3351
        %v3553 = vadd.f32 %v2991, %v3354
        %v3554 = vadd.f32 %v2992, %v3358
        %v3555 = vadd.f32 %v2993, %v3361
        %v3556 = vadd.f32 %v2994, %v3364
        %v3557 = vadd.f32 %v2995, %v3357
        %v3558 = vadd.f32 %v2996, %v3360
        %v3559 = vadd.f32 %v2997, %v3363
        %v3560 = vadd.f32 %v2998, %v3367
        %v3561 = vadd.f32 %v2999, %v3370
        %v3562 = vadd.f32 %v3000, %v3373
        %v3563 = vadd.f32 %v3001, %v3366
        %v3564 = vadd.f32 %v3002, %v3369
        %v3565 = vadd.f32 %v3003, %v3372
        %v3566 = vadd.f32 %v3004, %v3376
        %v3567 = vadd.f32 %v3005, %v3379
        %v3568 = vadd.f32 %v3006, %v3382
        %v3569 = vadd.f32 %v3007, %v3375
        %v3570 = vadd.f32 %v3008, %v3378
        %v3571 = vadd.f32 %v3009, %v3381
        %v3572 = vadd.f32 %v3010, %v3385
        %v3573 = vadd.f32 %v3011, %v3388
        %v3574 = vadd.f32 %v3012, %v3391
        %v3575 = vadd.f32 %v3013, %v3384
        %v3576 = vadd.f32 %v3014, %v3387
        %v3577 = vadd.f32 %v3015, %v3390
        %v3578 = vadd.f32 %v3016, %v3394
        %v3579 = vadd.f32 %v3017, %v3397
        %v3580 = vadd.f32 %v3018, %v3400
        %v3581 = vadd.f32 %v3019, %v3393
        %v3582 = vadd.f32 %v3020, %v3396
        %v3583 = vadd.f32 %v3021, %v3399
        %v3584 = vadd.f32 %v3022, %v3403
        %v3585 = vadd.f32 %v3023, %v3406
        %v3586 = vadd.f32 %v3024, %v3409
        %v3587 = vadd.f32 %v3025, %v3402
        %v3588 = vadd.f32 %v3026, %v3405
        %v3589 = vadd.f32 %v3027, %v3408
        %v3590 = vadd.f32 %v3028, %v3412
        %v3591 = vadd.f32 %v3029, %v3415
        %v3592 = vadd.f32 %v3030, %v3418
        %v3593 = vadd.f32 %v3031, %v3411
        %v3594 = vadd.f32 %v3032, %v3414
        %v3595 = vadd.f32 %v3033, %v3417
        %v3596 = vadd.f32 %v3034, %v3421
        %v3597 = vadd.f32 %v3035, %v3424
        %v3598 = vadd.f32 %v3036, %v3427
        %v3599 = vadd.f32 %v3037, %v3420
        %v3600 = vadd.f32 %v3038, %v3423
        %v3601 = vadd.f32 %v3039, %v3426
        %v3602 = vadd.f32 %v3040, %v3430
        %v3603 = vadd.f32 %v3041, %v3433
        %v3604 = vadd.f32 %v3042, %v3436
        %v3605 = vadd.f32 %v3043, %v3429
        %v3606 = vadd.f32 %v3044, %v3432
        %v3607 = vadd.f32 %v3045, %v3435
        %v3608 = vadd.f32 %v3046, %v3439
        %v3609 = vadd.f32 %v3047, %v3442
        %v3610 = vadd.f32 %v3048, %v3445
        %v3611 = vadd.f32 %v3049, %v3438
        %v3612 = vadd.f32 %v3050, %v3441
        %v3613 = vadd.f32 %v3051, %v3444
        %v3614 = vperm.slane %v1029, 5
        %v3615 = vperm.slane %v1030, 5
        %v3616 = vperm.slane %v1031, 5
        %v3617 = vmul.f32 %v3058, %v3614
        %v3618 = vmul.f32 %v3059, %v3615
        %v3619 = vmul.f32 %v3060, %v3616
        %v3620 = vmul.f32 %v3061, %v3614
        %v3621 = vmul.f32 %v3062, %v3615
        %v3622 = vmul.f32 %v3063, %v3616
        %v3623 = vmul.f32 %v3064, %v3614
        %v3624 = vmul.f32 %v3065, %v3615
        %v3625 = vmul.f32 %v3066, %v3616
        %v3626 = vmul.f32 %v3067, %v3614
        %v3627 = vmul.f32 %v3068, %v3615
        %v3628 = vmul.f32 %v3069, %v3616
        %v3629 = vmul.f32 %v3070, %v3614
        %v3630 = vmul.f32 %v3071, %v3615
        %v3631 = vmul.f32 %v3072, %v3616
        %v3632 = vmul.f32 %v3073, %v3614
        %v3633 = vmul.f32 %v3074, %v3615
        %v3634 = vmul.f32 %v3075, %v3616
        %v3635 = vmul.f32 %v3076, %v3614
        %v3636 = vmul.f32 %v3077, %v3615
        %v3637 = vmul.f32 %v3078, %v3616
        %v3638 = vmul.f32 %v3079, %v3614
        %v3639 = vmul.f32 %v3080, %v3615
        %v3640 = vmul.f32 %v3081, %v3616
        %v3641 = vmul.f32 %v3082, %v3614
        %v3642 = vmul.f32 %v3083, %v3615
        %v3643 = vmul.f32 %v3084, %v3616
        %v3644 = vmul.f32 %v3085, %v3614
        %v3645 = vmul.f32 %v3086, %v3615
        %v3646 = vmul.f32 %v3087, %v3616
        %v3647 = vmul.f32 %v3088, %v3614
        %v3648 = vmul.f32 %v3089, %v3615
        %v3649 = vmul.f32 %v3090, %v3616
        %v3650 = vmul.f32 %v3091, %v3614
        %v3651 = vmul.f32 %v3092, %v3615
        %v3652 = vmul.f32 %v3093, %v3616
        %v3653 = vmul.f32 %v3094, %v3614
        %v3654 = vmul.f32 %v3095, %v3615
        %v3655 = vmul.f32 %v3096, %v3616
        %v3656 = vmul.f32 %v3097, %v3614
        %v3657 = vmul.f32 %v3098, %v3615
        %v3658 = vmul.f32 %v3099, %v3616
        %v3659 = vmul.f32 %v3100, %v3614
        %v3660 = vmul.f32 %v3101, %v3615
        %v3661 = vmul.f32 %v3102, %v3616
        %v3662 = vmul.f32 %v3103, %v3614
        %v3663 = vmul.f32 %v3104, %v3615
        %v3664 = vmul.f32 %v3105, %v3616
        %v3665 = vmul.f32 %v3106, %v3614
        %v3666 = vmul.f32 %v3107, %v3615
        %v3667 = vmul.f32 %v3108, %v3616
        %v3668 = vmul.f32 %v3109, %v3614
        %v3669 = vmul.f32 %v3110, %v3615
        %v3670 = vmul.f32 %v3111, %v3616
        %v3671 = vmul.f32 %v3112, %v3614
        %v3672 = vmul.f32 %v3113, %v3615
        %v3673 = vmul.f32 %v3114, %v3616
        %v3674 = vmul.f32 %v3115, %v3614
        %v3675 = vmul.f32 %v3116, %v3615
        %v3676 = vmul.f32 %v3117, %v3616
        %v3677 = vmul.f32 %v3118, %v3614
        %v3678 = vmul.f32 %v3119, %v3615
        %v3679 = vmul.f32 %v3120, %v3616
        %v3680 = vmul.f32 %v3121, %v3614
        %v3681 = vmul.f32 %v3122, %v3615
        %v3682 = vmul.f32 %v3123, %v3616
        %v3683 = vmul.f32 %v3124, %v3614
        %v3684 = vmul.f32 %v3125, %v3615
        %v3685 = vmul.f32 %v3126, %v3616
        %v3686 = vmul.f32 %v3127, %v3614
        %v3687 = vmul.f32 %v3128, %v3615
        %v3688 = vmul.f32 %v3129, %v3616
        %v3689 = vmul.f32 %v3130, %v3614
        %v3690 = vmul.f32 %v3131, %v3615
        %v3691 = vmul.f32 %v3132, %v3616
        %v3692 = vmul.f32 %v3133, %v3614
        %v3693 = vmul.f32 %v3134, %v3615
        %v3694 = vmul.f32 %v3135, %v3616
        %v3695 = vmul.f32 %v3136, %v3614
        %v3696 = vmul.f32 %v3137, %v3615
        %v3697 = vmul.f32 %v3138, %v3616
        %v3698 = vmul.f32 %v3139, %v3614
        %v3699 = vmul.f32 %v3140, %v3615
        %v3700 = vmul.f32 %v3141, %v3616
        %v3785 = vrot.slane %v3617, 2
        %v3786 = vrot.slane %v3620, 2
        %v3787 = vsel %vm3319, %v3785, %v3786
        %v3788 = vrot.slane %v3618, 2
        %v3789 = vrot.slane %v3621, 2
        %v3790 = vsel %vm3319, %v3788, %v3789
        %v3791 = vrot.slane %v3619, 2
        %v3792 = vrot.slane %v3622, 2
        %v3793 = vsel %vm3319, %v3791, %v3792
        %v3794 = vrot.slane %v3623, 2
        %v3795 = vrot.slane %v3626, 2
        %v3796 = vsel %vm3319, %v3794, %v3795
        %v3797 = vrot.slane %v3624, 2
        %v3798 = vrot.slane %v3627, 2
        %v3799 = vsel %vm3319, %v3797, %v3798
        %v3800 = vrot.slane %v3625, 2
        %v3801 = vrot.slane %v3628, 2
        %v3802 = vsel %vm3319, %v3800, %v3801
        %v3803 = vrot.slane %v3629, 2
        %v3804 = vrot.slane %v3632, 2
        %v3805 = vsel %vm3319, %v3803, %v3804
        %v3806 = vrot.slane %v3630, 2
        %v3807 = vrot.slane %v3633, 2
        %v3808 = vsel %vm3319, %v3806, %v3807
        %v3809 = vrot.slane %v3631, 2
        %v3810 = vrot.slane %v3634, 2
        %v3811 = vsel %vm3319, %v3809, %v3810
        %v3812 = vrot.slane %v3635, 2
        %v3813 = vrot.slane %v3638, 2
        %v3814 = vsel %vm3319, %v3812, %v3813
        %v3815 = vrot.slane %v3636, 2
        %v3816 = vrot.slane %v3639, 2
        %v3817 = vsel %vm3319, %v3815, %v3816
        %v3818 = vrot.slane %v3637, 2
        %v3819 = vrot.slane %v3640, 2
        %v3820 = vsel %vm3319, %v3818, %v3819
        %v3821 = vrot.slane %v3641, 2
        %v3822 = vrot.slane %v3644, 2
        %v3823 = vsel %vm3319, %v3821, %v3822
        %v3824 = vrot.slane %v3642, 2
        %v3825 = vrot.slane %v3645, 2
        %v3826 = vsel %vm3319, %v3824, %v3825
        %v3827 = vrot.slane %v3643, 2
        %v3828 = vrot.slane %v3646, 2
        %v3829 = vsel %vm3319, %v3827, %v3828
        %v3830 = vrot.slane %v3647, 2
        %v3831 = vrot.slane %v3650, 2
        %v3832 = vsel %vm3319, %v3830, %v3831
        %v3833 = vrot.slane %v3648, 2
        %v3834 = vrot.slane %v3651, 2
        %v3835 = vsel %vm3319, %v3833, %v3834
        %v3836 = vrot.slane %v3649, 2
        %v3837 = vrot.slane %v3652, 2
        %v3838 = vsel %vm3319, %v3836, %v3837
        %v3839 = vrot.slane %v3653, 2
        %v3840 = vrot.slane %v3656, 2
        %v3841 = vsel %vm3319, %v3839, %v3840
        %v3842 = vrot.slane %v3654, 2
        %v3843 = vrot.slane %v3657, 2
        %v3844 = vsel %vm3319, %v3842, %v3843
        %v3845 = vrot.slane %v3655, 2
        %v3846 = vrot.slane %v3658, 2
        %v3847 = vsel %vm3319, %v3845, %v3846
        %v3848 = vrot.slane %v3659, 2
        %v3849 = vrot.slane %v3662, 2
        %v3850 = vsel %vm3319, %v3848, %v3849
        %v3851 = vrot.slane %v3660, 2
        %v3852 = vrot.slane %v3663, 2
        %v3853 = vsel %vm3319, %v3851, %v3852
        %v3854 = vrot.slane %v3661, 2
        %v3855 = vrot.slane %v3664, 2
        %v3856 = vsel %vm3319, %v3854, %v3855
        %v3857 = vrot.slane %v3665, 2
        %v3858 = vrot.slane %v3668, 2
        %v3859 = vsel %vm3319, %v3857, %v3858
        %v3860 = vrot.slane %v3666, 2
        %v3861 = vrot.slane %v3669, 2
        %v3862 = vsel %vm3319, %v3860, %v3861
        %v3863 = vrot.slane %v3667, 2
        %v3864 = vrot.slane %v3670, 2
        %v3865 = vsel %vm3319, %v3863, %v3864
        %v3866 = vrot.slane %v3671, 2
        %v3867 = vrot.slane %v3674, 2
        %v3868 = vsel %vm3319, %v3866, %v3867
        %v3869 = vrot.slane %v3672, 2
        %v3870 = vrot.slane %v3675, 2
        %v3871 = vsel %vm3319, %v3869, %v3870
        %v3872 = vrot.slane %v3673, 2
        %v3873 = vrot.slane %v3676, 2
        %v3874 = vsel %vm3319, %v3872, %v3873
        %v3875 = vrot.slane %v3677, 2
        %v3876 = vrot.slane %v3680, 2
        %v3877 = vsel %vm3319, %v3875, %v3876
        %v3878 = vrot.slane %v3678, 2
        %v3879 = vrot.slane %v3681, 2
        %v3880 = vsel %vm3319, %v3878, %v3879
        %v3881 = vrot.slane %v3679, 2
        %v3882 = vrot.slane %v3682, 2
        %v3883 = vsel %vm3319, %v3881, %v3882
        %v3884 = vrot.slane %v3683, 2
        %v3885 = vrot.slane %v3686, 2
        %v3886 = vsel %vm3319, %v3884, %v3885
        %v3887 = vrot.slane %v3684, 2
        %v3888 = vrot.slane %v3687, 2
        %v3889 = vsel %vm3319, %v3887, %v3888
        %v3890 = vrot.slane %v3685, 2
        %v3891 = vrot.slane %v3688, 2
        %v3892 = vsel %vm3319, %v3890, %v3891
        %v3893 = vrot.slane %v3689, 2
        %v3894 = vrot.slane %v3692, 2
        %v3895 = vsel %vm3319, %v3893, %v3894
        %v3896 = vrot.slane %v3690, 2
        %v3897 = vrot.slane %v3693, 2
        %v3898 = vsel %vm3319, %v3896, %v3897
        %v3899 = vrot.slane %v3691, 2
        %v3900 = vrot.slane %v3694, 2
        %v3901 = vsel %vm3319, %v3899, %v3900
        %v3902 = vrot.slane %v3695, 2
        %v3903 = vrot.slane %v3698, 2
        %v3904 = vsel %vm3319, %v3902, %v3903
        %v3905 = vrot.slane %v3696, 2
        %v3906 = vrot.slane %v3699, 2
        %v3907 = vsel %vm3319, %v3905, %v3906
        %v3908 = vrot.slane %v3697, 2
        %v3909 = vrot.slane %v3700, 2
        %v3910 = vsel %vm3319, %v3908, %v3909
        %v3995 = vadd.f32 %v3530, %v3787
        %v3996 = vadd.f32 %v3531, %v3790
        %v3997 = vadd.f32 %v3532, %v3793
        %v3998 = vadd.f32 %v3533, %v3786
        %v3999 = vadd.f32 %v3534, %v3789
        %v4000 = vadd.f32 %v3535, %v3792
        %v4001 = vadd.f32 %v3536, %v3796
        %v4002 = vadd.f32 %v3537, %v3799
        %v4003 = vadd.f32 %v3538, %v3802
        %v4004 = vadd.f32 %v3539, %v3795
        %v4005 = vadd.f32 %v3540, %v3798
        %v4006 = vadd.f32 %v3541, %v3801
        %v4007 = vadd.f32 %v3542, %v3805
        %v4008 = vadd.f32 %v3543, %v3808
        %v4009 = vadd.f32 %v3544, %v3811
        %v4010 = vadd.f32 %v3545, %v3804
        %v4011 = vadd.f32 %v3546, %v3807
        %v4012 = vadd.f32 %v3547, %v3810
        %v4013 = vadd.f32 %v3548, %v3814
        %v4014 = vadd.f32 %v3549, %v3817
        %v4015 = vadd.f32 %v3550, %v3820
        %v4016 = vadd.f32 %v3551, %v3813
        %v4017 = vadd.f32 %v3552, %v3816
        %v4018 = vadd.f32 %v3553, %v3819
        %v4019 = vadd.f32 %v3554, %v3823
        %v4020 = vadd.f32 %v3555, %v3826
        %v4021 = vadd.f32 %v3556, %v3829
        %v4022 = vadd.f32 %v3557, %v3822
        %v4023 = vadd.f32 %v3558, %v3825
        %v4024 = vadd.f32 %v3559, %v3828
        %v4025 = vadd.f32 %v3560, %v3832
        %v4026 = vadd.f32 %v3561, %v3835
        %v4027 = vadd.f32 %v3562, %v3838
        %v4028 = vadd.f32 %v3563, %v3831
        %v4029 = vadd.f32 %v3564, %v3834
        %v4030 = vadd.f32 %v3565, %v3837
        %v4031 = vadd.f32 %v3566, %v3841
        %v4032 = vadd.f32 %v3567, %v3844
        %v4033 = vadd.f32 %v3568, %v3847
        %v4034 = vadd.f32 %v3569, %v3840
        %v4035 = vadd.f32 %v3570, %v3843
        %v4036 = vadd.f32 %v3571, %v3846
        %v4037 = vadd.f32 %v3572, %v3850
        %v4038 = vadd.f32 %v3573, %v3853
        %v4039 = vadd.f32 %v3574, %v3856
        %v4040 = vadd.f32 %v3575, %v3849
        %v4041 = vadd.f32 %v3576, %v3852
        %v4042 = vadd.f32 %v3577, %v3855
        %v4043 = vadd.f32 %v3578, %v3859
        %v4044 = vadd.f32 %v3579, %v3862
        %v4045 = vadd.f32 %v3580, %v3865
        %v4046 = vadd.f32 %v3581, %v3858
        %v4047 = vadd.f32 %v3582, %v3861
        %v4048 = vadd.f32 %v3583, %v3864
        %v4049 = vadd.f32 %v3584, %v3868
        %v4050 = vadd.f32 %v3585, %v3871
        %v4051 = vadd.f32 %v3586, %v3874
        %v4052 = vadd.f32 %v3587, %v3867
        %v4053 = vadd.f32 %v3588, %v3870
        %v4054 = vadd.f32 %v3589, %v3873
        %v4055 = vadd.f32 %v3590, %v3877
        %v4056 = vadd.f32 %v3591, %v3880
        %v4057 = vadd.f32 %v3592, %v3883
        %v4058 = vadd.f32 %v3593, %v3876
        %v4059 = vadd.f32 %v3594, %v3879
        %v4060 = vadd.f32 %v3595, %v3882
        %v4061 = vadd.f32 %v3596, %v3886
        %v4062 = vadd.f32 %v3597, %v3889
        %v4063 = vadd.f32 %v3598, %v3892
        %v4064 = vadd.f32 %v3599, %v3885
        %v4065 = vadd.f32 %v3600, %v3888
        %v4066 = vadd.f32 %v3601, %v3891
        %v4067 = vadd.f32 %v3602, %v3895
        %v4068 = vadd.f32 %v3603, %v3898
        %v4069 = vadd.f32 %v3604, %v3901
        %v4070 = vadd.f32 %v3605, %v3894
        %v4071 = vadd.f32 %v3606, %v3897
        %v4072 = vadd.f32 %v3607, %v3900
        %v4073 = vadd.f32 %v3608, %v3904
        %v4074 = vadd.f32 %v3609, %v3907
        %v4075 = vadd.f32 %v3610, %v3910
        %v4076 = vadd.f32 %v3611, %v3903
        %v4077 = vadd.f32 %v3612, %v3906
        %v4078 = vadd.f32 %v3613, %v3909
        %v4079 = vperm.slane %v1032, 0
        %v4080 = vperm.slane %v1033, 0
        %v4081 = vperm.slane %v1034, 0
        %v4082 = vmul.f32 %v3064, %v4079
        %v4083 = vmul.f32 %v3065, %v4080
        %v4084 = vmul.f32 %v3066, %v4081
        %v4085 = vmul.f32 %v3067, %v4079
        %v4086 = vmul.f32 %v3068, %v4080
        %v4087 = vmul.f32 %v3069, %v4081
        %v4088 = vmul.f32 %v3070, %v4079
        %v4089 = vmul.f32 %v3071, %v4080
        %v4090 = vmul.f32 %v3072, %v4081
        %v4091 = vmul.f32 %v3073, %v4079
        %v4092 = vmul.f32 %v3074, %v4080
        %v4093 = vmul.f32 %v3075, %v4081
        %v4094 = vmul.f32 %v3076, %v4079
        %v4095 = vmul.f32 %v3077, %v4080
        %v4096 = vmul.f32 %v3078, %v4081
        %v4097 = vmul.f32 %v3079, %v4079
        %v4098 = vmul.f32 %v3080, %v4080
        %v4099 = vmul.f32 %v3081, %v4081
        %v4100 = vmul.f32 %v3082, %v4079
        %v4101 = vmul.f32 %v3083, %v4080
        %v4102 = vmul.f32 %v3084, %v4081
        %v4103 = vmul.f32 %v3085, %v4079
        %v4104 = vmul.f32 %v3086, %v4080
        %v4105 = vmul.f32 %v3087, %v4081
        %v4106 = vmul.f32 %v3088, %v4079
        %v4107 = vmul.f32 %v3089, %v4080
        %v4108 = vmul.f32 %v3090, %v4081
        %v4109 = vmul.f32 %v3091, %v4079
        %v4110 = vmul.f32 %v3092, %v4080
        %v4111 = vmul.f32 %v3093, %v4081
        %v4112 = vmul.f32 %v3094, %v4079
        %v4113 = vmul.f32 %v3095, %v4080
        %v4114 = vmul.f32 %v3096, %v4081
        %v4115 = vmul.f32 %v3097, %v4079
        %v4116 = vmul.f32 %v3098, %v4080
        %v4117 = vmul.f32 %v3099, %v4081
        %v4118 = vmul.f32 %v3100, %v4079
        %v4119 = vmul.f32 %v3101, %v4080
        %v4120 = vmul.f32 %v3102, %v4081
        %v4121 = vmul.f32 %v3103, %v4079
        %v4122 = vmul.f32 %v3104, %v4080
        %v4123 = vmul.f32 %v3105, %v4081
        %v4124 = vmul.f32 %v3106, %v4079
        %v4125 = vmul.f32 %v3107, %v4080
        %v4126 = vmul.f32 %v3108, %v4081
        %v4127 = vmul.f32 %v3109, %v4079
        %v4128 = vmul.f32 %v3110, %v4080
        %v4129 = vmul.f32 %v3111, %v4081
        %v4130 = vmul.f32 %v3112, %v4079
        %v4131 = vmul.f32 %v3113, %v4080
        %v4132 = vmul.f32 %v3114, %v4081
        %v4133 = vmul.f32 %v3115, %v4079
        %v4134 = vmul.f32 %v3116, %v4080
        %v4135 = vmul.f32 %v3117, %v4081
        %v4136 = vmul.f32 %v3118, %v4079
        %v4137 = vmul.f32 %v3119, %v4080
        %v4138 = vmul.f32 %v3120, %v4081
        %v4139 = vmul.f32 %v3121, %v4079
        %v4140 = vmul.f32 %v3122, %v4080
        %v4141 = vmul.f32 %v3123, %v4081
        %v4142 = vmul.f32 %v3124, %v4079
        %v4143 = vmul.f32 %v3125, %v4080
        %v4144 = vmul.f32 %v3126, %v4081
        %v4145 = vmul.f32 %v3127, %v4079
        %v4146 = vmul.f32 %v3128, %v4080
        %v4147 = vmul.f32 %v3129, %v4081
        %v4148 = vmul.f32 %v3130, %v4079
        %v4149 = vmul.f32 %v3131, %v4080
        %v4150 = vmul.f32 %v3132, %v4081
        %v4151 = vmul.f32 %v3133, %v4079
        %v4152 = vmul.f32 %v3134, %v4080
        %v4153 = vmul.f32 %v3135, %v4081
        %v4154 = vmul.f32 %v3136, %v4079
        %v4155 = vmul.f32 %v3137, %v4080
        %v4156 = vmul.f32 %v3138, %v4081
        %v4157 = vmul.f32 %v3139, %v4079
        %v4158 = vmul.f32 %v3140, %v4080
        %v4159 = vmul.f32 %v3141, %v4081
        %v4160 = vmul.f32 %v3142, %v4079
        %v4161 = vmul.f32 %v3143, %v4080
        %v4162 = vmul.f32 %v3144, %v4081
        %v4163 = vmul.f32 %v3145, %v4079
        %v4164 = vmul.f32 %v3146, %v4080
        %v4165 = vmul.f32 %v3147, %v4081
        %v4250 = vrot.slane %v4082, 2
        %v4251 = vrot.slane %v4085, 2
        %v4252 = vsel %vm3319, %v4250, %v4251
        %v4253 = vrot.slane %v4083, 2
        %v4254 = vrot.slane %v4086, 2
        %v4255 = vsel %vm3319, %v4253, %v4254
        %v4256 = vrot.slane %v4084, 2
        %v4257 = vrot.slane %v4087, 2
        %v4258 = vsel %vm3319, %v4256, %v4257
        %v4259 = vrot.slane %v4088, 2
        %v4260 = vrot.slane %v4091, 2
        %v4261 = vsel %vm3319, %v4259, %v4260
        %v4262 = vrot.slane %v4089, 2
        %v4263 = vrot.slane %v4092, 2
        %v4264 = vsel %vm3319, %v4262, %v4263
        %v4265 = vrot.slane %v4090, 2
        %v4266 = vrot.slane %v4093, 2
        %v4267 = vsel %vm3319, %v4265, %v4266
        %v4268 = vrot.slane %v4094, 2
        %v4269 = vrot.slane %v4097, 2
        %v4270 = vsel %vm3319, %v4268, %v4269
        %v4271 = vrot.slane %v4095, 2
        %v4272 = vrot.slane %v4098, 2
        %v4273 = vsel %vm3319, %v4271, %v4272
        %v4274 = vrot.slane %v4096, 2
        %v4275 = vrot.slane %v4099, 2
        %v4276 = vsel %vm3319, %v4274, %v4275
        %v4277 = vrot.slane %v4100, 2
        %v4278 = vrot.slane %v4103, 2
        %v4279 = vsel %vm3319, %v4277, %v4278
        %v4280 = vrot.slane %v4101, 2
        %v4281 = vrot.slane %v4104, 2
        %v4282 = vsel %vm3319, %v4280, %v4281
        %v4283 = vrot.slane %v4102, 2
        %v4284 = vrot.slane %v4105, 2
        %v4285 = vsel %vm3319, %v4283, %v4284
        %v4286 = vrot.slane %v4106, 2
        %v4287 = vrot.slane %v4109, 2
        %v4288 = vsel %vm3319, %v4286, %v4287
        %v4289 = vrot.slane %v4107, 2
        %v4290 = vrot.slane %v4110, 2
        %v4291 = vsel %vm3319, %v4289, %v4290
        %v4292 = vrot.slane %v4108, 2
        %v4293 = vrot.slane %v4111, 2
        %v4294 = vsel %vm3319, %v4292, %v4293
        %v4295 = vrot.slane %v4112, 2
        %v4296 = vrot.slane %v4115, 2
        %v4297 = vsel %vm3319, %v4295, %v4296
        %v4298 = vrot.slane %v4113, 2
        %v4299 = vrot.slane %v4116, 2
        %v4300 = vsel %vm3319, %v4298, %v4299
        %v4301 = vrot.slane %v4114, 2
        %v4302 = vrot.slane %v4117, 2
        %v4303 = vsel %vm3319, %v4301, %v4302
        %v4304 = vrot.slane %v4118, 2
        %v4305 = vrot.slane %v4121, 2
        %v4306 = vsel %vm3319, %v4304, %v4305
        %v4307 = vrot.slane %v4119, 2
        %v4308 = vrot.slane %v4122, 2
        %v4309 = vsel %vm3319, %v4307, %v4308
        %v4310 = vrot.slane %v4120, 2
        %v4311 = vrot.slane %v4123, 2
        %v4312 = vsel %vm3319, %v4310, %v4311
        %v4313 = vrot.slane %v4124, 2
        %v4314 = vrot.slane %v4127, 2
        %v4315 = vsel %vm3319, %v4313, %v4314
        %v4316 = vrot.slane %v4125, 2
        %v4317 = vrot.slane %v4128, 2
        %v4318 = vsel %vm3319, %v4316, %v4317
        %v4319 = vrot.slane %v4126, 2
        %v4320 = vrot.slane %v4129, 2
        %v4321 = vsel %vm3319, %v4319, %v4320
        %v4322 = vrot.slane %v4130, 2
        %v4323 = vrot.slane %v4133, 2
        %v4324 = vsel %vm3319, %v4322, %v4323
        %v4325 = vrot.slane %v4131, 2
        %v4326 = vrot.slane %v4134, 2
        %v4327 = vsel %vm3319, %v4325, %v4326
        %v4328 = vrot.slane %v4132, 2
        %v4329 = vrot.slane %v4135, 2
        %v4330 = vsel %vm3319, %v4328, %v4329
        %v4331 = vrot.slane %v4136, 2
        %v4332 = vrot.slane %v4139, 2
        %v4333 = vsel %vm3319, %v4331, %v4332
        %v4334 = vrot.slane %v4137, 2
        %v4335 = vrot.slane %v4140, 2
        %v4336 = vsel %vm3319, %v4334, %v4335
        %v4337 = vrot.slane %v4138, 2
        %v4338 = vrot.slane %v4141, 2
        %v4339 = vsel %vm3319, %v4337, %v4338
        %v4340 = vrot.slane %v4142, 2
        %v4341 = vrot.slane %v4145, 2
        %v4342 = vsel %vm3319, %v4340, %v4341
        %v4343 = vrot.slane %v4143, 2
        %v4344 = vrot.slane %v4146, 2
        %v4345 = vsel %vm3319, %v4343, %v4344
        %v4346 = vrot.slane %v4144, 2
        %v4347 = vrot.slane %v4147, 2
        %v4348 = vsel %vm3319, %v4346, %v4347
        %v4349 = vrot.slane %v4148, 2
        %v4350 = vrot.slane %v4151, 2
        %v4351 = vsel %vm3319, %v4349, %v4350
        %v4352 = vrot.slane %v4149, 2
        %v4353 = vrot.slane %v4152, 2
        %v4354 = vsel %vm3319, %v4352, %v4353
        %v4355 = vrot.slane %v4150, 2
        %v4356 = vrot.slane %v4153, 2
        %v4357 = vsel %vm3319, %v4355, %v4356
        %v4358 = vrot.slane %v4154, 2
        %v4359 = vrot.slane %v4157, 2
        %v4360 = vsel %vm3319, %v4358, %v4359
        %v4361 = vrot.slane %v4155, 2
        %v4362 = vrot.slane %v4158, 2
        %v4363 = vsel %vm3319, %v4361, %v4362
        %v4364 = vrot.slane %v4156, 2
        %v4365 = vrot.slane %v4159, 2
        %v4366 = vsel %vm3319, %v4364, %v4365
        %v4367 = vrot.slane %v4160, 2
        %v4368 = vrot.slane %v4163, 2
        %v4369 = vsel %vm3319, %v4367, %v4368
        %v4370 = vrot.slane %v4161, 2
        %v4371 = vrot.slane %v4164, 2
        %v4372 = vsel %vm3319, %v4370, %v4371
        %v4373 = vrot.slane %v4162, 2
        %v4374 = vrot.slane %v4165, 2
        %v4375 = vsel %vm3319, %v4373, %v4374
        %v4460 = vadd.f32 %v3995, %v4252
        %v4461 = vadd.f32 %v3996, %v4255
        %v4462 = vadd.f32 %v3997, %v4258
        %v4463 = vadd.f32 %v3998, %v4251
        %v4464 = vadd.f32 %v3999, %v4254
        %v4465 = vadd.f32 %v4000, %v4257
        %v4466 = vadd.f32 %v4001, %v4261
        %v4467 = vadd.f32 %v4002, %v4264
        %v4468 = vadd.f32 %v4003, %v4267
        %v4469 = vadd.f32 %v4004, %v4260
        %v4470 = vadd.f32 %v4005, %v4263
        %v4471 = vadd.f32 %v4006, %v4266
        %v4472 = vadd.f32 %v4007, %v4270
        %v4473 = vadd.f32 %v4008, %v4273
        %v4474 = vadd.f32 %v4009, %v4276
        %v4475 = vadd.f32 %v4010, %v4269
        %v4476 = vadd.f32 %v4011, %v4272
        %v4477 = vadd.f32 %v4012, %v4275
        %v4478 = vadd.f32 %v4013, %v4279
        %v4479 = vadd.f32 %v4014, %v4282
        %v4480 = vadd.f32 %v4015, %v4285
        %v4481 = vadd.f32 %v4016, %v4278
        %v4482 = vadd.f32 %v4017, %v4281
        %v4483 = vadd.f32 %v4018, %v4284
        %v4484 = vadd.f32 %v4019, %v4288
        %v4485 = vadd.f32 %v4020, %v4291
        %v4486 = vadd.f32 %v4021, %v4294
        %v4487 = vadd.f32 %v4022, %v4287
        %v4488 = vadd.f32 %v4023, %v4290
        %v4489 = vadd.f32 %v4024, %v4293
        %v4490 = vadd.f32 %v4025, %v4297
        %v4491 = vadd.f32 %v4026, %v4300
        %v4492 = vadd.f32 %v4027, %v4303
        %v4493 = vadd.f32 %v4028, %v4296
        %v4494 = vadd.f32 %v4029, %v4299
        %v4495 = vadd.f32 %v4030, %v4302
        %v4496 = vadd.f32 %v4031, %v4306
        %v4497 = vadd.f32 %v4032, %v4309
        %v4498 = vadd.f32 %v4033, %v4312
        %v4499 = vadd.f32 %v4034, %v4305
        %v4500 = vadd.f32 %v4035, %v4308
        %v4501 = vadd.f32 %v4036, %v4311
        %v4502 = vadd.f32 %v4037, %v4315
        %v4503 = vadd.f32 %v4038, %v4318
        %v4504 = vadd.f32 %v4039, %v4321
        %v4505 = vadd.f32 %v4040, %v4314
        %v4506 = vadd.f32 %v4041, %v4317
        %v4507 = vadd.f32 %v4042, %v4320
        %v4508 = vadd.f32 %v4043, %v4324
        %v4509 = vadd.f32 %v4044, %v4327
        %v4510 = vadd.f32 %v4045, %v4330
        %v4511 = vadd.f32 %v4046, %v4323
        %v4512 = vadd.f32 %v4047, %v4326
        %v4513 = vadd.f32 %v4048, %v4329
        %v4514 = vadd.f32 %v4049, %v4333
        %v4515 = vadd.f32 %v4050, %v4336
        %v4516 = vadd.f32 %v4051, %v4339
        %v4517 = vadd.f32 %v4052, %v4332
        %v4518 = vadd.f32 %v4053, %v4335
        %v4519 = vadd.f32 %v4054, %v4338
        %v4520 = vadd.f32 %v4055, %v4342
        %v4521 = vadd.f32 %v4056, %v4345
        %v4522 = vadd.f32 %v4057, %v4348
        %v4523 = vadd.f32 %v4058, %v4341
        %v4524 = vadd.f32 %v4059, %v4344
        %v4525 = vadd.f32 %v4060, %v4347
        %v4526 = vadd.f32 %v4061, %v4351
        %v4527 = vadd.f32 %v4062, %v4354
        %v4528 = vadd.f32 %v4063, %v4357
        %v4529 = vadd.f32 %v4064, %v4350
        %v4530 = vadd.f32 %v4065, %v4353
        %v4531 = vadd.f32 %v4066, %v4356
        %v4532 = vadd.f32 %v4067, %v4360
        %v4533 = vadd.f32 %v4068, %v4363
        %v4534 = vadd.f32 %v4069, %v4366
        %v4535 = vadd.f32 %v4070, %v4359
        %v4536 = vadd.f32 %v4071, %v4362
        %v4537 = vadd.f32 %v4072, %v4365
        %v4538 = vadd.f32 %v4073, %v4369
        %v4539 = vadd.f32 %v4074, %v4372
        %v4540 = vadd.f32 %v4075, %v4375
        %v4541 = vadd.f32 %v4076, %v4368
        %v4542 = vadd.f32 %v4077, %v4371
        %v4543 = vadd.f32 %v4078, %v4374
        %v4544 = vsel %vm3319, %v4463, 0.0
        %v4545 = vadd.f32 %v4460, %v4544
        %v4546 = vadd.f32 %v4545, %v4466
        %v4547 = vsel %vm3319, %v4469, 0.0
        %v4548 = vadd.f32 %v4546, %v4547
        %v4549 = vadd.f32 %v4548, %v4472
        %v4550 = vsel %vm3319, %v4475, 0.0
        %v4551 = vadd.f32 %v4549, %v4550
        %v4552 = vadd.f32 %v4551, %v4478
        %v4553 = vsel %vm3319, %v4481, 0.0
        %v4554 = vadd.f32 %v4552, %v4553
        %v4555 = vadd.f32 %v4554, %v4484
        %v4556 = vsel %vm3319, %v4487, 0.0
        %v4557 = vadd.f32 %v4555, %v4556
        %v4558 = vadd.f32 %v4557, %v4490
        %v4559 = vsel %vm3319, %v4493, 0.0
        %v4560 = vadd.f32 %v4558, %v4559
        %v4561 = vadd.f32 %v4560, %v4496
        %v4562 = vsel %vm3319, %v4499, 0.0
        %v4563 = vadd.f32 %v4561, %v4562
        %v4564 = vadd.f32 %v4563, %v4502
        %v4565 = vsel %vm3319, %v4505, 0.0
        %v4566 = vadd.f32 %v4564, %v4565
        %v4567 = vadd.f32 %v4566, %v4508
        %v4568 = vsel %vm3319, %v4511, 0.0
        %v4569 = vadd.f32 %v4567, %v4568
        %v4570 = vadd.f32 %v4569, %v4514
        %v4571 = vsel %vm3319, %v4517, 0.0
        %v4572 = vadd.f32 %v4570, %v4571
        %v4573 = vadd.f32 %v4572, %v4520
        %v4574 = vsel %vm3319, %v4523, 0.0
        %v4575 = vadd.f32 %v4573, %v4574
        %v4576 = vadd.f32 %v4575, %v4526
        %v4577 = vsel %vm3319, %v4529, 0.0
        %v4578 = vadd.f32 %v4576, %v4577
        %v4579 = vadd.f32 %v4578, %v4532
        %v4580 = vsel %vm3319, %v4535, 0.0
        %v4581 = vadd.f32 %v4579, %v4580
        %v4582 = vadd.f32 %v4581, %v4538
        %v4583 = vsel %vm3319, %v4541, 0.0
        %v4584 = vadd.f32 %v4582, %v4583
        %v4585 = vrot.slane %v4584, 4
        %v4586 = vadd.f32 %v4584, %v4585
        %v4587 = vrot.slane %v4586, 2
        %v4588 = vadd.f32 %v4586, %v4587
        %v4589 = vrot.slane %v4588, 1
        %v4590 = vadd.f32 %v4588, %v4589
        %v4591 = vsel %vm3319, %v4464, 0.0
        %v4592 = vadd.f32 %v4461, %v4591
        %v4593 = vadd.f32 %v4592, %v4467
        %v4594 = vsel %vm3319, %v4470, 0.0
        %v4595 = vadd.f32 %v4593, %v4594
        %v4596 = vadd.f32 %v4595, %v4473
        %v4597 = vsel %vm3319, %v4476, 0.0
        %v4598 = vadd.f32 %v4596, %v4597
        %v4599 = vadd.f32 %v4598, %v4479
        %v4600 = vsel %vm3319, %v4482, 0.0
        %v4601 = vadd.f32 %v4599, %v4600
        %v4602 = vadd.f32 %v4601, %v4485
        %v4603 = vsel %vm3319, %v4488, 0.0
        %v4604 = vadd.f32 %v4602, %v4603
        %v4605 = vadd.f32 %v4604, %v4491
        %v4606 = vsel %vm3319, %v4494, 0.0
        %v4607 = vadd.f32 %v4605, %v4606
        %v4608 = vadd.f32 %v4607, %v4497
        %v4609 = vsel %vm3319, %v4500, 0.0
        %v4610 = vadd.f32 %v4608, %v4609
        %v4611 = vadd.f32 %v4610, %v4503
        %v4612 = vsel %vm3319, %v4506, 0.0
        %v4613 = vadd.f32 %v4611, %v4612
        %v4614 = vadd.f32 %v4613, %v4509
        %v4615 = vsel %vm3319, %v4512, 0.0
        %v4616 = vadd.f32 %v4614, %v4615
        %v4617 = vadd.f32 %v4616, %v4515
        %v4618 = vsel %vm3319, %v4518, 0.0
        %v4619 = vadd.f32 %v4617, %v4618
        %v4620 = vadd.f32 %v4619, %v4521
        %v4621 = vsel %vm3319, %v4524, 0.0
        %v4622 = vadd.f32 %v4620, %v4621
        %v4623 = vadd.f32 %v4622, %v4527
        %v4624 = vsel %vm3319, %v4530, 0.0
        %v4625 = vadd.f32 %v4623, %v4624
        %v4626 = vadd.f32 %v4625, %v4533
        %v4627 = vsel %vm3319, %v4536, 0.0
        %v4628 = vadd.f32 %v4626, %v4627
        %v4629 = vadd.f32 %v4628, %v4539
        %v4630 = vsel %vm3319, %v4542, 0.0
        %v4631 = vadd.f32 %v4629, %v4630
        %v4632 = vrot.slane %v4631, 4
        %v4633 = vadd.f32 %v4631, %v4632
        %v4634 = vrot.slane %v4633, 2
        %v4635 = vadd.f32 %v4633, %v4634
        %v4636 = vrot.slane %v4635, 1
        %v4637 = vadd.f32 %v4635, %v4636
        %v4638 = vsel %vm3319, %v4465, 0.0
        %v4639 = vadd.f32 %v4462, %v4638
        %v4640 = vadd.f32 %v4639, %v4468
        %v4641 = vsel %vm3319, %v4471, 0.0
        %v4642 = vadd.f32 %v4640, %v4641
        %v4643 = vadd.f32 %v4642, %v4474
        %v4644 = vsel %vm3319, %v4477, 0.0
        %v4645 = vadd.f32 %v4643, %v4644
        %v4646 = vadd.f32 %v4645, %v4480
        %v4647 = vsel %vm3319, %v4483, 0.0
        %v4648 = vadd.f32 %v4646, %v4647
        %v4649 = vadd.f32 %v4648, %v4486
        %v4650 = vsel %vm3319, %v4489, 0.0
        %v4651 = vadd.f32 %v4649, %v4650
        %v4652 = vadd.f32 %v4651, %v4492
        %v4653 = vsel %vm3319, %v4495, 0.0
        %v4654 = vadd.f32 %v4652, %v4653
        %v4655 = vadd.f32 %v4654, %v4498
        %v4656 = vsel %vm3319, %v4501, 0.0
        %v4657 = vadd.f32 %v4655, %v4656
        %v4658 = vadd.f32 %v4657, %v4504
        %v4659 = vsel %vm3319, %v4507, 0.0
        %v4660 = vadd.f32 %v4658, %v4659
        %v4661 = vadd.f32 %v4660, %v4510
        %v4662 = vsel %vm3319, %v4513, 0.0
        %v4663 = vadd.f32 %v4661, %v4662
        %v4664 = vadd.f32 %v4663, %v4516
        %v4665 = vsel %vm3319, %v4519, 0.0
        %v4666 = vadd.f32 %v4664, %v4665
        %v4667 = vadd.f32 %v4666, %v4522
        %v4668 = vsel %vm3319, %v4525, 0.0
        %v4669 = vadd.f32 %v4667, %v4668
        %v4670 = vadd.f32 %v4669, %v4528
        %v4671 = vsel %vm3319, %v4531, 0.0
        %v4672 = vadd.f32 %v4670, %v4671
        %v4673 = vadd.f32 %v4672, %v4534
        %v4674 = vsel %vm3319, %v4537, 0.0
        %v4675 = vadd.f32 %v4673, %v4674
        %v4676 = vadd.f32 %v4675, %v4540
        %v4677 = vsel %vm3319, %v4543, 0.0
        %v4678 = vadd.f32 %v4676, %v4677
        %v4679 = vrot.slane %v4678, 4
        %v4680 = vadd.f32 %v4678, %v4679
        %v4681 = vrot.slane %v4680, 2
        %v4682 = vadd.f32 %v4680, %v4681
        %v4683 = vrot.slane %v4682, 1
        %v4684 = vadd.f32 %v4682, %v4683
        %v4685 = vmul.f32 %v4590, 0.0051020407
        %v4686 = vmul.f32 %v4637, 0.0051020407
        %v4687 = vmul.f32 %v4684, 0.0051020407
        %v4688 = vmul.f32 %v4460, %v4460
        %v4689 = vmul.f32 %v4461, %v4461
        %v4690 = vmul.f32 %v4462, %v4462
        %v4691 = vmul.f32 %v4463, %v4463
        %v4692 = vmul.f32 %v4464, %v4464
        %v4693 = vmul.f32 %v4465, %v4465
        %v4694 = vmul.f32 %v4466, %v4466
        %v4695 = vmul.f32 %v4467, %v4467
        %v4696 = vmul.f32 %v4468, %v4468
        %v4697 = vmul.f32 %v4469, %v4469
        %v4698 = vmul.f32 %v4470, %v4470
        %v4699 = vmul.f32 %v4471, %v4471
        %v4700 = vmul.f32 %v4472, %v4472
        %v4701 = vmul.f32 %v4473, %v4473
        %v4702 = vmul.f32 %v4474, %v4474
        %v4703 = vmul.f32 %v4475, %v4475
        %v4704 = vmul.f32 %v4476, %v4476
        %v4705 = vmul.f32 %v4477, %v4477
        %v4706 = vmul.f32 %v4478, %v4478
        %v4707 = vmul.f32 %v4479, %v4479
        %v4708 = vmul.f32 %v4480, %v4480
        %v4709 = vmul.f32 %v4481, %v4481
        %v4710 = vmul.f32 %v4482, %v4482
        %v4711 = vmul.f32 %v4483, %v4483
        %v4712 = vmul.f32 %v4484, %v4484
        %v4713 = vmul.f32 %v4485, %v4485
        %v4714 = vmul.f32 %v4486, %v4486
        %v4715 = vmul.f32 %v4487, %v4487
        %v4716 = vmul.f32 %v4488, %v4488
        %v4717 = vmul.f32 %v4489, %v4489
        %v4718 = vmul.f32 %v4490, %v4490
        %v4719 = vmul.f32 %v4491, %v4491
        %v4720 = vmul.f32 %v4492, %v4492
        %v4721 = vmul.f32 %v4493, %v4493
        %v4722 = vmul.f32 %v4494, %v4494
        %v4723 = vmul.f32 %v4495, %v4495
        %v4724 = vmul.f32 %v4496, %v4496
        %v4725 = vmul.f32 %v4497, %v4497
        %v4726 = vmul.f32 %v4498, %v4498
        %v4727 = vmul.f32 %v4499, %v4499
        %v4728 = vmul.f32 %v4500, %v4500
        %v4729 = vmul.f32 %v4501, %v4501
        %v4730 = vmul.f32 %v4502, %v4502
        %v4731 = vmul.f32 %v4503, %v4503
        %v4732 = vmul.f32 %v4504, %v4504
        %v4733 = vmul.f32 %v4505, %v4505
        %v4734 = vmul.f32 %v4506, %v4506
        %v4735 = vmul.f32 %v4507, %v4507
        %v4736 = vmul.f32 %v4508, %v4508
        %v4737 = vmul.f32 %v4509, %v4509
        %v4738 = vmul.f32 %v4510, %v4510
        %v4739 = vmul.f32 %v4511, %v4511
        %v4740 = vmul.f32 %v4512, %v4512
        %v4741 = vmul.f32 %v4513, %v4513
        %v4742 = vmul.f32 %v4514, %v4514
        %v4743 = vmul.f32 %v4515, %v4515
        %v4744 = vmul.f32 %v4516, %v4516
        %v4745 = vmul.f32 %v4517, %v4517
        %v4746 = vmul.f32 %v4518, %v4518
        %v4747 = vmul.f32 %v4519, %v4519
        %v4748 = vmul.f32 %v4520, %v4520
        %v4749 = vmul.f32 %v4521, %v4521
        %v4750 = vmul.f32 %v4522, %v4522
        %v4751 = vmul.f32 %v4523, %v4523
        %v4752 = vmul.f32 %v4524, %v4524
        %v4753 = vmul.f32 %v4525, %v4525
        %v4754 = vmul.f32 %v4526, %v4526
        %v4755 = vmul.f32 %v4527, %v4527
        %v4756 = vmul.f32 %v4528, %v4528
        %v4757 = vmul.f32 %v4529, %v4529
        %v4758 = vmul.f32 %v4530, %v4530
        %v4759 = vmul.f32 %v4531, %v4531
        %v4760 = vmul.f32 %v4532, %v4532
        %v4761 = vmul.f32 %v4533, %v4533
        %v4762 = vmul.f32 %v4534, %v4534
        %v4763 = vmul.f32 %v4535, %v4535
        %v4764 = vmul.f32 %v4536, %v4536
        %v4765 = vmul.f32 %v4537, %v4537
        %v4766 = vmul.f32 %v4538, %v4538
        %v4767 = vmul.f32 %v4539, %v4539
        %v4768 = vmul.f32 %v4540, %v4540
        %v4769 = vmul.f32 %v4541, %v4541
        %v4770 = vmul.f32 %v4542, %v4542
        %v4771 = vmul.f32 %v4543, %v4543
        %v4772 = vsel %vm3319, %v4691, 0.0
        %v4773 = vadd.f32 %v4688, %v4772
        %v4774 = vadd.f32 %v4773, %v4694
        %v4775 = vsel %vm3319, %v4697, 0.0
        %v4776 = vadd.f32 %v4774, %v4775
        %v4777 = vadd.f32 %v4776, %v4700
        %v4778 = vsel %vm3319, %v4703, 0.0
        %v4779 = vadd.f32 %v4777, %v4778
        %v4780 = vadd.f32 %v4779, %v4706
        %v4781 = vsel %vm3319, %v4709, 0.0
        %v4782 = vadd.f32 %v4780, %v4781
        %v4783 = vadd.f32 %v4782, %v4712
        %v4784 = vsel %vm3319, %v4715, 0.0
        %v4785 = vadd.f32 %v4783, %v4784
        %v4786 = vadd.f32 %v4785, %v4718
        %v4787 = vsel %vm3319, %v4721, 0.0
        %v4788 = vadd.f32 %v4786, %v4787
        %v4789 = vadd.f32 %v4788, %v4724
        %v4790 = vsel %vm3319, %v4727, 0.0
        %v4791 = vadd.f32 %v4789, %v4790
        %v4792 = vadd.f32 %v4791, %v4730
        %v4793 = vsel %vm3319, %v4733, 0.0
        %v4794 = vadd.f32 %v4792, %v4793
        %v4795 = vadd.f32 %v4794, %v4736
        %v4796 = vsel %vm3319, %v4739, 0.0
        %v4797 = vadd.f32 %v4795, %v4796
        %v4798 = vadd.f32 %v4797, %v4742
        %v4799 = vsel %vm3319, %v4745, 0.0
        %v4800 = vadd.f32 %v4798, %v4799
        %v4801 = vadd.f32 %v4800, %v4748
        %v4802 = vsel %vm3319, %v4751, 0.0
        %v4803 = vadd.f32 %v4801, %v4802
        %v4804 = vadd.f32 %v4803, %v4754
        %v4805 = vsel %vm3319, %v4757, 0.0
        %v4806 = vadd.f32 %v4804, %v4805
        %v4807 = vadd.f32 %v4806, %v4760
        %v4808 = vsel %vm3319, %v4763, 0.0
        %v4809 = vadd.f32 %v4807, %v4808
        %v4810 = vadd.f32 %v4809, %v4766
        %v4811 = vsel %vm3319, %v4769, 0.0
        %v4812 = vadd.f32 %v4810, %v4811
        %v4813 = vrot.slane %v4812, 4
        %v4814 = vadd.f32 %v4812, %v4813
        %v4815 = vrot.slane %v4814, 2
        %v4816 = vadd.f32 %v4814, %v4815
        %v4817 = vrot.slane %v4816, 1
        %v4818 = vadd.f32 %v4816, %v4817
        %v4819 = vsel %vm3319, %v4692, 0.0
        %v4820 = vadd.f32 %v4689, %v4819
        %v4821 = vadd.f32 %v4820, %v4695
        %v4822 = vsel %vm3319, %v4698, 0.0
        %v4823 = vadd.f32 %v4821, %v4822
        %v4824 = vadd.f32 %v4823, %v4701
        %v4825 = vsel %vm3319, %v4704, 0.0
        %v4826 = vadd.f32 %v4824, %v4825
        %v4827 = vadd.f32 %v4826, %v4707
        %v4828 = vsel %vm3319, %v4710, 0.0
        %v4829 = vadd.f32 %v4827, %v4828
        %v4830 = vadd.f32 %v4829, %v4713
        %v4831 = vsel %vm3319, %v4716, 0.0
        %v4832 = vadd.f32 %v4830, %v4831
        %v4833 = vadd.f32 %v4832, %v4719
        %v4834 = vsel %vm3319, %v4722, 0.0
        %v4835 = vadd.f32 %v4833, %v4834
        %v4836 = vadd.f32 %v4835, %v4725
        %v4837 = vsel %vm3319, %v4728, 0.0
        %v4838 = vadd.f32 %v4836, %v4837
        %v4839 = vadd.f32 %v4838, %v4731
        %v4840 = vsel %vm3319, %v4734, 0.0
        %v4841 = vadd.f32 %v4839, %v4840
        %v4842 = vadd.f32 %v4841, %v4737
        %v4843 = vsel %vm3319, %v4740, 0.0
        %v4844 = vadd.f32 %v4842, %v4843
        %v4845 = vadd.f32 %v4844, %v4743
        %v4846 = vsel %vm3319, %v4746, 0.0
        %v4847 = vadd.f32 %v4845, %v4846
        %v4848 = vadd.f32 %v4847, %v4749
        %v4849 = vsel %vm3319, %v4752, 0.0
        %v4850 = vadd.f32 %v4848, %v4849
        %v4851 = vadd.f32 %v4850, %v4755
        %v4852 = vsel %vm3319, %v4758, 0.0
        %v4853 = vadd.f32 %v4851, %v4852
        %v4854 = vadd.f32 %v4853, %v4761
        %v4855 = vsel %vm3319, %v4764, 0.0
        %v4856 = vadd.f32 %v4854, %v4855
        %v4857 = vadd.f32 %v4856, %v4767
        %v4858 = vsel %vm3319, %v4770, 0.0
        %v4859 = vadd.f32 %v4857, %v4858
        %v4860 = vrot.slane %v4859, 4
        %v4861 = vadd.f32 %v4859, %v4860
        %v4862 = vrot.slane %v4861, 2
        %v4863 = vadd.f32 %v4861, %v4862
        %v4864 = vrot.slane %v4863, 1
        %v4865 = vadd.f32 %v4863, %v4864
        %v4866 = vsel %vm3319, %v4693, 0.0
        %v4867 = vadd.f32 %v4690, %v4866
        %v4868 = vadd.f32 %v4867, %v4696
        %v4869 = vsel %vm3319, %v4699, 0.0
        %v4870 = vadd.f32 %v4868, %v4869
        %v4871 = vadd.f32 %v4870, %v4702
        %v4872 = vsel %vm3319, %v4705, 0.0
        %v4873 = vadd.f32 %v4871, %v4872
        %v4874 = vadd.f32 %v4873, %v4708
        %v4875 = vsel %vm3319, %v4711, 0.0
        %v4876 = vadd.f32 %v4874, %v4875
        %v4877 = vadd.f32 %v4876, %v4714
        %v4878 = vsel %vm3319, %v4717, 0.0
        %v4879 = vadd.f32 %v4877, %v4878
        %v4880 = vadd.f32 %v4879, %v4720
        %v4881 = vsel %vm3319, %v4723, 0.0
        %v4882 = vadd.f32 %v4880, %v4881
        %v4883 = vadd.f32 %v4882, %v4726
        %v4884 = vsel %vm3319, %v4729, 0.0
        %v4885 = vadd.f32 %v4883, %v4884
        %v4886 = vadd.f32 %v4885, %v4732
        %v4887 = vsel %vm3319, %v4735, 0.0
        %v4888 = vadd.f32 %v4886, %v4887
        %v4889 = vadd.f32 %v4888, %v4738
        %v4890 = vsel %vm3319, %v4741, 0.0
        %v4891 = vadd.f32 %v4889, %v4890
        %v4892 = vadd.f32 %v4891, %v4744
        %v4893 = vsel %vm3319, %v4747, 0.0
        %v4894 = vadd.f32 %v4892, %v4893
        %v4895 = vadd.f32 %v4894, %v4750
        %v4896 = vsel %vm3319, %v4753, 0.0
        %v4897 = vadd.f32 %v4895, %v4896
        %v4898 = vadd.f32 %v4897, %v4756
        %v4899 = vsel %vm3319, %v4759, 0.0
        %v4900 = vadd.f32 %v4898, %v4899
        %v4901 = vadd.f32 %v4900, %v4762
        %v4902 = vsel %vm3319, %v4765, 0.0
        %v4903 = vadd.f32 %v4901, %v4902
        %v4904 = vadd.f32 %v4903, %v4768
        %v4905 = vsel %vm3319, %v4771, 0.0
        %v4906 = vadd.f32 %v4904, %v4905
        %v4907 = vrot.slane %v4906, 4
        %v4908 = vadd.f32 %v4906, %v4907
        %v4909 = vrot.slane %v4908, 2
        %v4910 = vadd.f32 %v4908, %v4909
        %v4911 = vrot.slane %v4910, 1
        %v4912 = vadd.f32 %v4910, %v4911
        %v4913 = vmul.f32 %v4818, 0.0051020407
        %v4914 = vmul.f32 %v4865, 0.0051020407
        %v4915 = vmul.f32 %v4912, 0.0051020407
        %v4916 = vmul.f32 %v4685, %v4685
        %v4917 = vmul.f32 %v4686, %v4686
        %v4918 = vmul.f32 %v4687, %v4687
        %v4919 = vsub.f32 %v4913, %v4916
        %v4920 = vsub.f32 %v4914, %v4917
        %v4921 = vsub.f32 %v4915, %v4918
        %v4922 = vadd.f32 %v4919, 0.001
        %v4923 = vadd.f32 %v4920, 0.001
        %v4924 = vadd.f32 %v4921, 0.001
        %v4925 = vrsqrt.pop %v4922
        %v4926 = vmul.f32 %v4925, %v4922
        %v4927 = vmul.f32 %v4926, %v4925
        %v4928 = vmul.f32 0.5, %v4927
        %v4929 = vsub.f32 1.5, %v4928
        %v4930 = vmul.f32 %v4925, %v4929
        %vm4931 = vweird.f32 %v4922
        %vm4932 = vweird.f32 %v4925
        %vm4933 = vmor %vm4931, %vm4932
        %v4934 = vsel %vm4933, %v4925, %v4930
        %v4935 = vrsqrt.pop %v4923
        %v4936 = vmul.f32 %v4935, %v4923
        %v4937 = vmul.f32 %v4936, %v4935
        %v4938 = vmul.f32 0.5, %v4937
        %v4939 = vsub.f32 1.5, %v4938
        %v4940 = vmul.f32 %v4935, %v4939
        %vm4941 = vweird.f32 %v4923
        %vm4942 = vweird.f32 %v4935
        %vm4943 = vmor %vm4941, %vm4942
        %v4944 = vsel %vm4943, %v4935, %v4940
        %v4945 = vrsqrt.pop %v4924
        %v4946 = vmul.f32 %v4945, %v4924
        %v4947 = vmul.f32 %v4946, %v4945
        %v4948 = vmul.f32 0.5, %v4947
        %v4949 = vsub.f32 1.5, %v4948
        %v4950 = vmul.f32 %v4945, %v4949
        %vm4951 = vweird.f32 %v4924
        %vm4952 = vweird.f32 %v4945
        %vm4953 = vmor %vm4951, %vm4952
        %v4954 = vsel %vm4953, %v4945, %v4950
        %v4955 = vld [vmem:[%s461] sm:$0x7]
        %v4959 = vrot.slane %v4944, 7
        %v4960 = vrot.slane %v4954, 6
        %v4961 = vsel %vm733, %v4934, %v4959
        %vm4962 = vcmask 1041408
        %v4963 = vsel %vm4962, %v4961, %v4960
        %v4965 = vmul.f32 %v4955, %v4963
        %v4966 = vld [vmem:[%s466] sm:$0x7]
        %v4968 = vperm.slane %v4965, 0
        %v4969 = vperm.slane %v4965, 1
        %v4970 = vperm.slane %v4965, 2
        %v4974 = vmul.f32 %v4685, %v4968
        %v4975 = vmul.f32 %v4686, %v4969
        %v4976 = vmul.f32 %v4687, %v4970
        %v4980 = vrot.slane %v4975, 7
        %v4981 = vrot.slane %v4976, 6
        %v4982 = vsel %vm733, %v4974, %v4980
        %v4983 = vsel %vm4962, %v4982, %v4981
        %v4985 = vsub.f32 %v4966, %v4983
        %v4986 = vmul.f32 %v4460, %v4968
        %v4987 = vmul.f32 %v4461, %v4969
        %v4988 = vmul.f32 %v4462, %v4970
        %v4989 = vmul.f32 %v4463, %v4968
        %v4990 = vmul.f32 %v4464, %v4969
        %v4991 = vmul.f32 %v4465, %v4970
        %v4992 = vmul.f32 %v4466, %v4968
        %v4993 = vmul.f32 %v4467, %v4969
        %v4994 = vmul.f32 %v4468, %v4970
        %v4995 = vmul.f32 %v4469, %v4968
        %v4996 = vmul.f32 %v4470, %v4969
        %v4997 = vmul.f32 %v4471, %v4970
        %v4998 = vmul.f32 %v4472, %v4968
        %v4999 = vmul.f32 %v4473, %v4969
        %v5000 = vmul.f32 %v4474, %v4970
        %v5001 = vmul.f32 %v4475, %v4968
        %v5002 = vmul.f32 %v4476, %v4969
        %v5003 = vmul.f32 %v4477, %v4970
        %v5004 = vmul.f32 %v4478, %v4968
        %v5005 = vmul.f32 %v4479, %v4969
        %v5006 = vmul.f32 %v4480, %v4970
        %v5007 = vmul.f32 %v4481, %v4968
        %v5008 = vmul.f32 %v4482, %v4969
        %v5009 = vmul.f32 %v4483, %v4970
        %v5010 = vmul.f32 %v4484, %v4968
        %v5011 = vmul.f32 %v4485, %v4969
        %v5012 = vmul.f32 %v4486, %v4970
        %v5013 = vmul.f32 %v4487, %v4968
        %v5014 = vmul.f32 %v4488, %v4969
        %v5015 = vmul.f32 %v4489, %v4970
        %v5016 = vmul.f32 %v4490, %v4968
        %v5017 = vmul.f32 %v4491, %v4969
        %v5018 = vmul.f32 %v4492, %v4970
        %v5019 = vmul.f32 %v4493, %v4968
        %v5020 = vmul.f32 %v4494, %v4969
        %v5021 = vmul.f32 %v4495, %v4970
        %v5022 = vmul.f32 %v4496, %v4968
        %v5023 = vmul.f32 %v4497, %v4969
        %v5024 = vmul.f32 %v4498, %v4970
        %v5025 = vmul.f32 %v4499, %v4968
        %v5026 = vmul.f32 %v4500, %v4969
        %v5027 = vmul.f32 %v4501, %v4970
        %v5028 = vmul.f32 %v4502, %v4968
        %v5029 = vmul.f32 %v4503, %v4969
        %v5030 = vmul.f32 %v4504, %v4970
        %v5031 = vmul.f32 %v4505, %v4968
        %v5032 = vmul.f32 %v4506, %v4969
        %v5033 = vmul.f32 %v4507, %v4970
        %v5034 = vmul.f32 %v4508, %v4968
        %v5035 = vmul.f32 %v4509, %v4969
        %v5036 = vmul.f32 %v4510, %v4970
        %v5037 = vmul.f32 %v4511, %v4968
        %v5038 = vmul.f32 %v4512, %v4969
        %v5039 = vmul.f32 %v4513, %v4970
        %v5040 = vmul.f32 %v4514, %v4968
        %v5041 = vmul.f32 %v4515, %v4969
        %v5042 = vmul.f32 %v4516, %v4970
        %v5043 = vmul.f32 %v4517, %v4968
        %v5044 = vmul.f32 %v4518, %v4969
        %v5045 = vmul.f32 %v4519, %v4970
        %v5046 = vmul.f32 %v4520, %v4968
        %v5047 = vmul.f32 %v4521, %v4969
        %v5048 = vmul.f32 %v4522, %v4970
        %v5049 = vmul.f32 %v4523, %v4968
        %v5050 = vmul.f32 %v4524, %v4969
        %v5051 = vmul.f32 %v4525, %v4970
        %v5052 = vmul.f32 %v4526, %v4968
        %v5053 = vmul.f32 %v4527, %v4969
        %v5054 = vmul.f32 %v4528, %v4970
        %v5055 = vmul.f32 %v4529, %v4968
        %v5056 = vmul.f32 %v4530, %v4969
        %v5057 = vmul.f32 %v4531, %v4970
        %v5058 = vmul.f32 %v4532, %v4968
        %v5059 = vmul.f32 %v4533, %v4969
        %v5060 = vmul.f32 %v4534, %v4970
        %v5061 = vmul.f32 %v4535, %v4968
        %v5062 = vmul.f32 %v4536, %v4969
        %v5063 = vmul.f32 %v4537, %v4970
        %v5064 = vmul.f32 %v4538, %v4968
        %v5065 = vmul.f32 %v4539, %v4969
        %v5066 = vmul.f32 %v4540, %v4970
        %v5067 = vmul.f32 %v4541, %v4968
        %v5068 = vmul.f32 %v4542, %v4969
        %v5069 = vmul.f32 %v4543, %v4970
        %v5071 = vperm.slane %v4985, 0
        %v5072 = vperm.slane %v4985, 1
        %v5073 = vperm.slane %v4985, 2
        %v5077 = vadd.f32 %v4986, %v5071
        %v5078 = vadd.f32 %v4987, %v5072
        %v5079 = vadd.f32 %v4988, %v5073
        %v5080 = vadd.f32 %v4989, %v5071
        %v5081 = vadd.f32 %v4990, %v5072
        %v5082 = vadd.f32 %v4991, %v5073
        %v5083 = vadd.f32 %v4992, %v5071
        %v5084 = vadd.f32 %v4993, %v5072
        %v5085 = vadd.f32 %v4994, %v5073
        %v5086 = vadd.f32 %v4995, %v5071
        %v5087 = vadd.f32 %v4996, %v5072
        %v5088 = vadd.f32 %v4997, %v5073
        %v5089 = vadd.f32 %v4998, %v5071
        %v5090 = vadd.f32 %v4999, %v5072
        %v5091 = vadd.f32 %v5000, %v5073
        %v5092 = vadd.f32 %v5001, %v5071
        %v5093 = vadd.f32 %v5002, %v5072
        %v5094 = vadd.f32 %v5003, %v5073
        %v5095 = vadd.f32 %v5004, %v5071
        %v5096 = vadd.f32 %v5005, %v5072
        %v5097 = vadd.f32 %v5006, %v5073
        %v5098 = vadd.f32 %v5007, %v5071
        %v5099 = vadd.f32 %v5008, %v5072
        %v5100 = vadd.f32 %v5009, %v5073
        %v5101 = vadd.f32 %v5010, %v5071
        %v5102 = vadd.f32 %v5011, %v5072
        %v5103 = vadd.f32 %v5012, %v5073
        %v5104 = vadd.f32 %v5013, %v5071
        %v5105 = vadd.f32 %v5014, %v5072
        %v5106 = vadd.f32 %v5015, %v5073
        %v5107 = vadd.f32 %v5016, %v5071
        %v5108 = vadd.f32 %v5017, %v5072
        %v5109 = vadd.f32 %v5018, %v5073
        %v5110 = vadd.f32 %v5019, %v5071
        %v5111 = vadd.f32 %v5020, %v5072
        %v5112 = vadd.f32 %v5021, %v5073
        %v5113 = vadd.f32 %v5022, %v5071
        %v5114 = vadd.f32 %v5023, %v5072
        %v5115 = vadd.f32 %v5024, %v5073
        %v5116 = vadd.f32 %v5025, %v5071
        %v5117 = vadd.f32 %v5026, %v5072
        %v5118 = vadd.f32 %v5027, %v5073
        %v5119 = vadd.f32 %v5028, %v5071
        %v5120 = vadd.f32 %v5029, %v5072
        %v5121 = vadd.f32 %v5030, %v5073
        %v5122 = vadd.f32 %v5031, %v5071
        %v5123 = vadd.f32 %v5032, %v5072
        %v5124 = vadd.f32 %v5033, %v5073
        %v5125 = vadd.f32 %v5034, %v5071
        %v5126 = vadd.f32 %v5035, %v5072
        %v5127 = vadd.f32 %v5036, %v5073
        %v5128 = vadd.f32 %v5037, %v5071
        %v5129 = vadd.f32 %v5038, %v5072
        %v5130 = vadd.f32 %v5039, %v5073
        %v5131 = vadd.f32 %v5040, %v5071
        %v5132 = vadd.f32 %v5041, %v5072
        %v5133 = vadd.f32 %v5042, %v5073
        %v5134 = vadd.f32 %v5043, %v5071
        %v5135 = vadd.f32 %v5044, %v5072
        %v5136 = vadd.f32 %v5045, %v5073
        %v5137 = vadd.f32 %v5046, %v5071
        %v5138 = vadd.f32 %v5047, %v5072
        %v5139 = vadd.f32 %v5048, %v5073
        %v5140 = vadd.f32 %v5049, %v5071
        %v5141 = vadd.f32 %v5050, %v5072
        %v5142 = vadd.f32 %v5051, %v5073
        %v5143 = vadd.f32 %v5052, %v5071
        %v5144 = vadd.f32 %v5053, %v5072
        %v5145 = vadd.f32 %v5054, %v5073
        %v5146 = vadd.f32 %v5055, %v5071
        %v5147 = vadd.f32 %v5056, %v5072
        %v5148 = vadd.f32 %v5057, %v5073
        %v5149 = vadd.f32 %v5058, %v5071
        %v5150 = vadd.f32 %v5059, %v5072
        %v5151 = vadd.f32 %v5060, %v5073
        %v5152 = vadd.f32 %v5061, %v5071
        %v5153 = vadd.f32 %v5062, %v5072
        %v5154 = vadd.f32 %v5063, %v5073
        %v5155 = vadd.f32 %v5064, %v5071
        %v5156 = vadd.f32 %v5065, %v5072
        %v5157 = vadd.f32 %v5066, %v5073
        %v5158 = vadd.f32 %v5067, %v5071
        %v5159 = vadd.f32 %v5068, %v5072
        %v5160 = vadd.f32 %v5069, %v5073
        %5161 = vst [vmem:[%s455] sm:$0xff] %v5077
        %5162 = vst [vmem:[%s455 + $0x8] sm:$0xff] %v5078
        %5163 = vst [vmem:[%s455 + $0x10] sm:$0xff] %v5079
        %5164 = vst [vmem:[%s455 + $0x18] sm:$0x3f] %v5080
        %5165 = vst [vmem:[%s455 + $0x20] sm:$0x3f] %v5081
        %5166 = vst [vmem:[%s455 + $0x28] sm:$0x3f] %v5082
        %5167 = vst [vmem:[%s455 + $0x30] sm:$0xff] %v5083
        %5168 = vst [vmem:[%s455 + $0x38] sm:$0xff] %v5084
        %5169 = vst [vmem:[%s455 + $0x40] sm:$0xff] %v5085
        %5170 = vst [vmem:[%s455 + $0x48] sm:$0x3f] %v5086
        %5171 = vst [vmem:[%s455 + $0x50] sm:$0x3f] %v5087
        %5172 = vst [vmem:[%s455 + $0x58] sm:$0x3f] %v5088
        %5173 = vst [vmem:[%s455 + $0x60] sm:$0xff] %v5089
        %5174 = vst [vmem:[%s455 + $0x68] sm:$0xff] %v5090
        %5175 = vst [vmem:[%s455 + $0x70] sm:$0xff] %v5091
        %5176 = vst [vmem:[%s455 + $0x78] sm:$0x3f] %v5092
        %5177 = vst [vmem:[%s455 + $0x80] sm:$0x3f] %v5093
        %5178 = vst [vmem:[%s455 + $0x88] sm:$0x3f] %v5094
        %5179 = vst [vmem:[%s455 + $0x90] sm:$0xff] %v5095
        %5180 = vst [vmem:[%s455 + $0x98] sm:$0xff] %v5096
        %5181 = vst [vmem:[%s455 + $0xa0] sm:$0xff] %v5097
        %5182 = vst [vmem:[%s455 + $0xa8] sm:$0x3f] %v5098
        %5183 = vst [vmem:[%s455 + $0xb0] sm:$0x3f] %v5099
        %5184 = vst [vmem:[%s455 + $0xb8] sm:$0x3f] %v5100
        %5185 = vst [vmem:[%s455 + $0xc0] sm:$0xff] %v5101
        %5186 = vst [vmem:[%s455 + $0xc8] sm:$0xff] %v5102
        %5187 = vst [vmem:[%s455 + $0xd0] sm:$0xff] %v5103
        %5188 = vst [vmem:[%s455 + $0xd8] sm:$0x3f] %v5104
        %5189 = vst [vmem:[%s455 + $0xe0] sm:$0x3f] %v5105
        %5190 = vst [vmem:[%s455 + $0xe8] sm:$0x3f] %v5106
        %5191 = vst [vmem:[%s455 + $0xf0] sm:$0xff] %v5107
        %5192 = vst [vmem:[%s455 + $0xf8] sm:$0xff] %v5108
        %5193 = vst [vmem:[%s455 + $0x100] sm:$0xff] %v5109
        %5194 = vst [vmem:[%s455 + $0x108] sm:$0x3f] %v5110
        %5195 = vst [vmem:[%s455 + $0x110] sm:$0x3f] %v5111
        %5196 = vst [vmem:[%s455 + $0x118] sm:$0x3f] %v5112
        %5197 = vst [vmem:[%s455 + $0x120] sm:$0xff] %v5113
        %5198 = vst [vmem:[%s455 + $0x128] sm:$0xff] %v5114
        %5199 = vst [vmem:[%s455 + $0x130] sm:$0xff] %v5115
        %5200 = vst [vmem:[%s455 + $0x138] sm:$0x3f] %v5116
        %5201 = vst [vmem:[%s455 + $0x140] sm:$0x3f] %v5117
        %5202 = vst [vmem:[%s455 + $0x148] sm:$0x3f] %v5118
        %5203 = vst [vmem:[%s455 + $0x150] sm:$0xff] %v5119
        %5204 = vst [vmem:[%s455 + $0x158] sm:$0xff] %v5120
        %5205 = vst [vmem:[%s455 + $0x160] sm:$0xff] %v5121
        %5206 = vst [vmem:[%s455 + $0x168] sm:$0x3f] %v5122
        %5207 = vst [vmem:[%s455 + $0x170] sm:$0x3f] %v5123
        %5208 = vst [vmem:[%s455 + $0x178] sm:$0x3f] %v5124
        %5209 = vst [vmem:[%s455 + $0x180] sm:$0xff] %v5125
        %5210 = vst [vmem:[%s455 + $0x188] sm:$0xff] %v5126
        %5211 = vst [vmem:[%s455 + $0x190] sm:$0xff] %v5127
        %5212 = vst [vmem:[%s455 + $0x198] sm:$0x3f] %v5128
        %5213 = vst [vmem:[%s455 + $0x1a0] sm:$0x3f] %v5129
        %5214 = vst [vmem:[%s455 + $0x1a8] sm:$0x3f] %v5130
        %5215 = vst [vmem:[%s455 + $0x1b0] sm:$0xff] %v5131
        %5216 = vst [vmem:[%s455 + $0x1b8] sm:$0xff] %v5132
        %5217 = vst [vmem:[%s455 + $0x1c0] sm:$0xff] %v5133
        %5218 = vst [vmem:[%s455 + $0x1c8] sm:$0x3f] %v5134
        %5219 = vst [vmem:[%s455 + $0x1d0] sm:$0x3f] %v5135
        %5220 = vst [vmem:[%s455 + $0x1d8] sm:$0x3f] %v5136
        %5221 = vst [vmem:[%s455 + $0x1e0] sm:$0xff] %v5137
        %5222 = vst [vmem:[%s455 + $0x1e8] sm:$0xff] %v5138
        %5223 = vst [vmem:[%s455 + $0x1f0] sm:$0xff] %v5139
        %5224 = vst [vmem:[%s455 + $0x1f8] sm:$0x3f] %v5140
        %5225 = vst [vmem:[%s455 + $0x200] sm:$0x3f] %v5141
        %5226 = vst [vmem:[%s455 + $0x208] sm:$0x3f] %v5142
        %5227 = vst [vmem:[%s455 + $0x210] sm:$0xff] %v5143
        %5228 = vst [vmem:[%s455 + $0x218] sm:$0xff] %v5144
        %5229 = vst [vmem:[%s455 + $0x220] sm:$0xff] %v5145
        %5230 = vst [vmem:[%s455 + $0x228] sm:$0x3f] %v5146
        %5231 = vst [vmem:[%s455 + $0x230] sm:$0x3f] %v5147
        %5232 = vst [vmem:[%s455 + $0x238] sm:$0x3f] %v5148
        %5233 = vst [vmem:[%s455 + $0x240] sm:$0xff] %v5149
        %5234 = vst [vmem:[%s455 + $0x248] sm:$0xff] %v5150
        %5235 = vst [vmem:[%s455 + $0x250] sm:$0xff] %v5151
        %5236 = vst [vmem:[%s455 + $0x258] sm:$0x3f] %v5152
        %5237 = vst [vmem:[%s455 + $0x260] sm:$0x3f] %v5153
        %5238 = vst [vmem:[%s455 + $0x268] sm:$0x3f] %v5154
        %5239 = vst [vmem:[%s455 + $0x270] sm:$0xff] %v5155
        %5240 = vst [vmem:[%s455 + $0x278] sm:$0xff] %v5156
        %5241 = vst [vmem:[%s455 + $0x280] sm:$0xff] %v5157
        %5242 = vst [vmem:[%s455 + $0x288] sm:$0x3f] %v5158
        %5243 = vst [vmem:[%s455 + $0x290] sm:$0x3f] %v5159
        %5244 = vst [vmem:[%s455 + $0x298] sm:$0x3f] %v5160
        %s5245 = sand.u32 %s127, 1
        %s5246 = sand.u32 %s127, 1
        %s5247 = smul.addr %s5246, 672
        %s5248 = scalar_lea.vmem [#allocation5], %s5247
        // Predicated region
        $region83: #{tpu_custom_call.1} parent=73 // pred_check
          %p5249 = pneg %p137
        $region84: #{tpu_custom_call.1} parent=73 // pred_check_branch
          %5251 = sbr.rel (%p5249) target = $region86
        $region85: #{tpu_custom_call.1} parent=73 // pred_region
          %s5252 = smul.u32 3, %s15
          %s5253 = smul.addr %s5252, 8
          %s5254 = scalar_lea.vmem %s4, %s5253
          // Predicated region
          $region87: #{tpu_custom_call.1} parent=85 // pred_check
            _
          $region88: #{tpu_custom_call.1} parent=85 // pred_check_branch
            %5256 = sbr.rel (0) target = $region90
          $region89: #{tpu_custom_call.1} parent=85 // pred_region
            // Predicated region
            $region91: #{tpu_custom_call.1} parent=89 // pred_check
              _
            $region92: #{tpu_custom_call.1} parent=89 // pred_check_branch
              %5258 = sbr.rel (0) target = $region94
            $region93: #{tpu_custom_call.1} parent=89 // pred_region
              loop: start=0, step=1, limit=1
              $region95: #{tpu_custom_call.1} parent=93 // loop_pre_header
                _
              $region96: #{tpu_custom_call.1} parent=93 // loop_header
                %s5260 = sphi 0, %s5264
                %p5261 = scmp.ge.s32.totalorder %s5260, 1
                %s5265 = sphi %s5248, %s5248
                %s5266 = sphi %s5254, %s5254
              $region97: #{tpu_custom_call.1} parent=93 // loop_header_branch
                %5263 = sbr.rel (%p5261) target = $region101
              $region98: #{tpu_custom_call.1} parent=93 // loop_body
                %v5267 = vld [vmem:[%s5265] sm:$0xff]
                %5268 = vst [vmem:[%s5266] sm:$0xff] %v5267
                %v5269 = vld [vmem:[%s5265 + $0x8] sm:$0xff]
                %5270 = vst [vmem:[%s5266 + $0x8] sm:$0xff] %v5269
                %v5271 = vld [vmem:[%s5265 + $0x10] sm:$0xff]
                %5272 = vst [vmem:[%s5266 + $0x10] sm:$0xff] %v5271
                %v5273 = vld [vmem:[%s5265 + $0x18] sm:$0xff]
                %5274 = vst [vmem:[%s5266 + $0x30] sm:$0xff] %v5273
                %v5275 = vld [vmem:[%s5265 + $0x20] sm:$0xff]
                %5276 = vst [vmem:[%s5266 + $0x38] sm:$0xff] %v5275
                %v5277 = vld [vmem:[%s5265 + $0x28] sm:$0xff]
                %5278 = vst [vmem:[%s5266 + $0x40] sm:$0xff] %v5277
                %v5279 = vld [vmem:[%s5265 + $0x30] sm:$0xff]
                %5280 = vst [vmem:[%s5266 + $0x60] sm:$0xff] %v5279
                %v5281 = vld [vmem:[%s5265 + $0x38] sm:$0xff]
                %5282 = vst [vmem:[%s5266 + $0x68] sm:$0xff] %v5281
                %v5283 = vld [vmem:[%s5265 + $0x40] sm:$0xff]
                %5284 = vst [vmem:[%s5266 + $0x70] sm:$0xff] %v5283
                %v5285 = vld [vmem:[%s5265 + $0x48] sm:$0xff]
                %5286 = vst [vmem:[%s5266 + $0x90] sm:$0xff] %v5285
                %v5287 = vld [vmem:[%s5265 + $0x50] sm:$0xff]
                %5288 = vst [vmem:[%s5266 + $0x98] sm:$0xff] %v5287
                %v5289 = vld [vmem:[%s5265 + $0x58] sm:$0xff]
                %5290 = vst [vmem:[%s5266 + $0xa0] sm:$0xff] %v5289
                %v5291 = vld [vmem:[%s5265 + $0x60] sm:$0xff]
                %5292 = vst [vmem:[%s5266 + $0xc0] sm:$0xff] %v5291
                %v5293 = vld [vmem:[%s5265 + $0x68] sm:$0xff]
                %5294 = vst [vmem:[%s5266 + $0xc8] sm:$0xff] %v5293
                %v5295 = vld [vmem:[%s5265 + $0x70] sm:$0xff]
                %5296 = vst [vmem:[%s5266 + $0xd0] sm:$0xff] %v5295
                %v5297 = vld [vmem:[%s5265 + $0x78] sm:$0xff]
                %5298 = vst [vmem:[%s5266 + $0xf0] sm:$0xff] %v5297
                %v5299 = vld [vmem:[%s5265 + $0x80] sm:$0xff]
                %5300 = vst [vmem:[%s5266 + $0xf8] sm:$0xff] %v5299
                %v5301 = vld [vmem:[%s5265 + $0x88] sm:$0xff]
                %5302 = vst [vmem:[%s5266 + $0x100] sm:$0xff] %v5301
                %v5303 = vld [vmem:[%s5265 + $0x90] sm:$0xff]
                %5304 = vst [vmem:[%s5266 + $0x120] sm:$0xff] %v5303
                %v5305 = vld [vmem:[%s5265 + $0x98] sm:$0xff]
                %5306 = vst [vmem:[%s5266 + $0x128] sm:$0xff] %v5305
                %v5307 = vld [vmem:[%s5265 + $0xa0] sm:$0xff]
                %5308 = vst [vmem:[%s5266 + $0x130] sm:$0xff] %v5307
                %v5309 = vld [vmem:[%s5265 + $0xa8] sm:$0xff]
                %5310 = vst [vmem:[%s5266 + $0x150] sm:$0xff] %v5309
                %v5311 = vld [vmem:[%s5265 + $0xb0] sm:$0xff]
                %5312 = vst [vmem:[%s5266 + $0x158] sm:$0xff] %v5311
                %v5313 = vld [vmem:[%s5265 + $0xb8] sm:$0xff]
                %5314 = vst [vmem:[%s5266 + $0x160] sm:$0xff] %v5313
                %v5315 = vld [vmem:[%s5265 + $0xc0] sm:$0xff]
                %5316 = vst [vmem:[%s5266 + $0x180] sm:$0xff] %v5315
                %v5317 = vld [vmem:[%s5265 + $0xc8] sm:$0xff]
                %5318 = vst [vmem:[%s5266 + $0x188] sm:$0xff] %v5317
                %v5319 = vld [vmem:[%s5265 + $0xd0] sm:$0xff]
                %5320 = vst [vmem:[%s5266 + $0x190] sm:$0xff] %v5319
                %v5321 = vld [vmem:[%s5265 + $0xd8] sm:$0xff]
                %5322 = vst [vmem:[%s5266 + $0x1b0] sm:$0xff] %v5321
                %v5323 = vld [vmem:[%s5265 + $0xe0] sm:$0xff]
                %5324 = vst [vmem:[%s5266 + $0x1b8] sm:$0xff] %v5323
                %v5325 = vld [vmem:[%s5265 + $0xe8] sm:$0xff]
                %5326 = vst [vmem:[%s5266 + $0x1c0] sm:$0xff] %v5325
                %v5327 = vld [vmem:[%s5265 + $0xf0] sm:$0xff]
                %5328 = vst [vmem:[%s5266 + $0x1e0] sm:$0xff] %v5327
                %v5329 = vld [vmem:[%s5265 + $0xf8] sm:$0xff]
                %5330 = vst [vmem:[%s5266 + $0x1e8] sm:$0xff] %v5329
                %v5331 = vld [vmem:[%s5265 + $0x100] sm:$0xff]
                %5332 = vst [vmem:[%s5266 + $0x1f0] sm:$0xff] %v5331
                %v5333 = vld [vmem:[%s5265 + $0x108] sm:$0xff]
                %5334 = vst [vmem:[%s5266 + $0x210] sm:$0xff] %v5333
                %v5335 = vld [vmem:[%s5265 + $0x110] sm:$0xff]
                %5336 = vst [vmem:[%s5266 + $0x218] sm:$0xff] %v5335
                %v5337 = vld [vmem:[%s5265 + $0x118] sm:$0xff]
                %5338 = vst [vmem:[%s5266 + $0x220] sm:$0xff] %v5337
                %v5339 = vld [vmem:[%s5265 + $0x120] sm:$0xff]
                %5340 = vst [vmem:[%s5266 + $0x240] sm:$0xff] %v5339
                %v5341 = vld [vmem:[%s5265 + $0x128] sm:$0xff]
                %5342 = vst [vmem:[%s5266 + $0x248] sm:$0xff] %v5341
                %v5343 = vld [vmem:[%s5265 + $0x130] sm:$0xff]
                %5344 = vst [vmem:[%s5266 + $0x250] sm:$0xff] %v5343
                %v5345 = vld [vmem:[%s5265 + $0x138] sm:$0xff]
                %5346 = vst [vmem:[%s5266 + $0x270] sm:$0xff] %v5345
                %v5347 = vld [vmem:[%s5265 + $0x140] sm:$0xff]
                %5348 = vst [vmem:[%s5266 + $0x278] sm:$0xff] %v5347
                %v5349 = vld [vmem:[%s5265 + $0x148] sm:$0xff]
                %5350 = vst [vmem:[%s5266 + $0x280] sm:$0xff] %v5349
                %v5351 = vld [vmem:[%s5265 + $0x150] sm:$0xff]
                %5352 = vst [vmem:[%s5266 + $0x2a0] sm:$0xff] %v5351
                %v5353 = vld [vmem:[%s5265 + $0x158] sm:$0xff]
                %5354 = vst [vmem:[%s5266 + $0x2a8] sm:$0xff] %v5353
                %v5355 = vld [vmem:[%s5265 + $0x160] sm:$0xff]
                %5356 = vst [vmem:[%s5266 + $0x2b0] sm:$0xff] %v5355
                %v5357 = vld [vmem:[%s5265 + $0x168] sm:$0xff]
                %5358 = vst [vmem:[%s5266 + $0x2d0] sm:$0xff] %v5357
                %v5359 = vld [vmem:[%s5265 + $0x170] sm:$0xff]
                %5360 = vst [vmem:[%s5266 + $0x2d8] sm:$0xff] %v5359
                %v5361 = vld [vmem:[%s5265 + $0x178] sm:$0xff]
                %5362 = vst [vmem:[%s5266 + $0x2e0] sm:$0xff] %v5361
                %v5363 = vld [vmem:[%s5265 + $0x180] sm:$0xff]
                %5364 = vst [vmem:[%s5266 + $0x300] sm:$0xff] %v5363
                %v5365 = vld [vmem:[%s5265 + $0x188] sm:$0xff]
                %5366 = vst [vmem:[%s5266 + $0x308] sm:$0xff] %v5365
                %v5367 = vld [vmem:[%s5265 + $0x190] sm:$0xff]
                %5368 = vst [vmem:[%s5266 + $0x310] sm:$0xff] %v5367
                %v5369 = vld [vmem:[%s5265 + $0x198] sm:$0xff]
                %5370 = vst [vmem:[%s5266 + $0x330] sm:$0xff] %v5369
                %v5371 = vld [vmem:[%s5265 + $0x1a0] sm:$0xff]
                %5372 = vst [vmem:[%s5266 + $0x338] sm:$0xff] %v5371
                %v5373 = vld [vmem:[%s5265 + $0x1a8] sm:$0xff]
                %5374 = vst [vmem:[%s5266 + $0x340] sm:$0xff] %v5373
                %v5375 = vld [vmem:[%s5265 + $0x1b0] sm:$0xff]
                %5376 = vst [vmem:[%s5266 + $0x360] sm:$0xff] %v5375
                %v5377 = vld [vmem:[%s5265 + $0x1b8] sm:$0xff]
                %5378 = vst [vmem:[%s5266 + $0x368] sm:$0xff] %v5377
                %v5379 = vld [vmem:[%s5265 + $0x1c0] sm:$0xff]
                %5380 = vst [vmem:[%s5266 + $0x370] sm:$0xff] %v5379
                %v5381 = vld [vmem:[%s5265 + $0x1c8] sm:$0xff]
                %5382 = vst [vmem:[%s5266 + $0x390] sm:$0xff] %v5381
                %v5383 = vld [vmem:[%s5265 + $0x1d0] sm:$0xff]
                %5384 = vst [vmem:[%s5266 + $0x398] sm:$0xff] %v5383
                %v5385 = vld [vmem:[%s5265 + $0x1d8] sm:$0xff]
                %5386 = vst [vmem:[%s5266 + $0x3a0] sm:$0xff] %v5385
                %v5387 = vld [vmem:[%s5265 + $0x1e0] sm:$0xff]
                %5388 = vst [vmem:[%s5266 + $0x3c0] sm:$0xff] %v5387
                %v5389 = vld [vmem:[%s5265 + $0x1e8] sm:$0xff]
                %5390 = vst [vmem:[%s5266 + $0x3c8] sm:$0xff] %v5389
                %v5391 = vld [vmem:[%s5265 + $0x1f0] sm:$0xff]
                %5392 = vst [vmem:[%s5266 + $0x3d0] sm:$0xff] %v5391
                %v5393 = vld [vmem:[%s5265 + $0x1f8] sm:$0xff]
                %5394 = vst [vmem:[%s5266 + $0x3f0] sm:$0xff] %v5393
                %v5395 = vld [vmem:[%s5265 + $0x200] sm:$0xff]
                %5396 = vst [vmem:[%s5266 + $0x3f8] sm:$0xff] %v5395
                %v5397 = vld [vmem:[%s5265 + $0x208] sm:$0xff]
                %5398 = vst [vmem:[%s5266 + $0x400] sm:$0xff] %v5397
                %v5399 = vld [vmem:[%s5265 + $0x210] sm:$0xff]
                %5400 = vst [vmem:[%s5266 + $0x420] sm:$0xff] %v5399
                %v5401 = vld [vmem:[%s5265 + $0x218] sm:$0xff]
                %5402 = vst [vmem:[%s5266 + $0x428] sm:$0xff] %v5401
                %v5403 = vld [vmem:[%s5265 + $0x220] sm:$0xff]
                %5404 = vst [vmem:[%s5266 + $0x430] sm:$0xff] %v5403
                %v5405 = vld [vmem:[%s5265 + $0x228] sm:$0xff]
                %5406 = vst [vmem:[%s5266 + $0x450] sm:$0xff] %v5405
                %v5407 = vld [vmem:[%s5265 + $0x230] sm:$0xff]
                %5408 = vst [vmem:[%s5266 + $0x458] sm:$0xff] %v5407
                %v5409 = vld [vmem:[%s5265 + $0x238] sm:$0xff]
                %5410 = vst [vmem:[%s5266 + $0x460] sm:$0xff] %v5409
                %v5411 = vld [vmem:[%s5265 + $0x240] sm:$0xff]
                %5412 = vst [vmem:[%s5266 + $0x480] sm:$0xff] %v5411
                %v5413 = vld [vmem:[%s5265 + $0x248] sm:$0xff]
                %5414 = vst [vmem:[%s5266 + $0x488] sm:$0xff] %v5413
                %v5415 = vld [vmem:[%s5265 + $0x250] sm:$0xff]
                %5416 = vst [vmem:[%s5266 + $0x490] sm:$0xff] %v5415
                %v5417 = vld [vmem:[%s5265 + $0x258] sm:$0xff]
                %5418 = vst [vmem:[%s5266 + $0x4b0] sm:$0xff] %v5417
                %v5419 = vld [vmem:[%s5265 + $0x260] sm:$0xff]
                %5420 = vst [vmem:[%s5266 + $0x4b8] sm:$0xff] %v5419
                %v5421 = vld [vmem:[%s5265 + $0x268] sm:$0xff]
                %5422 = vst [vmem:[%s5266 + $0x4c0] sm:$0xff] %v5421
                %v5423 = vld [vmem:[%s5265 + $0x270] sm:$0xff]
                %5424 = vst [vmem:[%s5266 + $0x4e0] sm:$0xff] %v5423
                %v5425 = vld [vmem:[%s5265 + $0x278] sm:$0xff]
                %5426 = vst [vmem:[%s5266 + $0x4e8] sm:$0xff] %v5425
                %v5427 = vld [vmem:[%s5265 + $0x280] sm:$0xff]
                %5428 = vst [vmem:[%s5266 + $0x4f0] sm:$0xff] %v5427
                %v5429 = vld [vmem:[%s5265 + $0x288] sm:$0xff]
                %5430 = vst [vmem:[%s5266 + $0x510] sm:$0xff] %v5429
                %v5431 = vld [vmem:[%s5265 + $0x290] sm:$0xff]
                %5432 = vst [vmem:[%s5266 + $0x518] sm:$0xff] %v5431
                %v5433 = vld [vmem:[%s5265 + $0x298] sm:$0xff]
                %5434 = vst [vmem:[%s5266 + $0x520] sm:$0xff] %v5433
              $region99: #{tpu_custom_call.1} parent=93 // loop_footer
                %s5264 = sadd.s32 1, %s5260
              $region100: #{tpu_custom_call.1} parent=93 // loop_footer_branch
                %5259 = sbr.rel target = $region96
              $region101: #{tpu_custom_call.1} parent=93 // loop_exit
                _
            $region94: #{tpu_custom_call.1} parent=89 // pred_fallthru
              _
            // Predicated region
            $region102: #{tpu_custom_call.1} parent=89 // pred_check
              _
            $region103: #{tpu_custom_call.1} parent=89 // pred_check_branch
              %5436 = sbr.rel target = $region105
            $region104: #{tpu_custom_call.1} parent=89 // pred_region
              _
            $region105: #{tpu_custom_call.1} parent=89 // pred_fallthru
              _
          $region90: #{tpu_custom_call.1} parent=85 // pred_fallthru
            _
          %5437 = vnop
        $region86: #{tpu_custom_call.1} parent=73 // pred_fallthru
          _
      $region74: #{tpu_custom_call.1} parent=5 // pred_fallthru
        _
      %p5438 = scmp.le.s32.totalorder 2, %s10
      // Predicated region
      $region106: #{tpu_custom_call.1} parent=5 // pred_check
        %p5439 = pneg %p5438
      $region107: #{tpu_custom_call.1} parent=5 // pred_check_branch
        %5441 = sbr.rel (%p5439) target = $region109
      $region108: #{tpu_custom_call.1} parent=5 // pred_region
        %s5442 = ssub.s32 %s10, 2
        // Predicated region
        $region110: #{tpu_custom_call.1} parent=108 // pred_check
          %p5443 = pneg %p143
        $region111: #{tpu_custom_call.1} parent=108 // pred_check_branch
          %5445 = sbr.rel (%p5443) target = $region113
        $region112: #{tpu_custom_call.1} parent=108 // pred_region
          %s5446 = sand.u32 %s128, 1
          %s5447 = sand.u32 %s128, 1
          %s5448 = smul.addr %s5447, 672
          %s5449 = scalar_lea.vmem [#allocation5], %s5448
        $region113: #{tpu_custom_call.1} parent=108 // pred_fallthru
          _
      $region109: #{tpu_custom_call.1} parent=5 // pred_fallthru
        _
    $region6: #{tpu_custom_call.1} parent=1 // loop_footer
      %s14 = sadd.s32 1, %s10
    $region7: #{tpu_custom_call.1} parent=1 // loop_footer_branch
      %9 = sbr.rel target = $region3
    $region8: #{tpu_custom_call.1} parent=1 // loop_exit
      _

</llo_original>
